<compile_context>
chip_gen: v7x
topology: tpu7x:2x2x1
jax: 0.10.0
libtpu: 0.0.40
codegen_flags: <defaults>
</compile_context>

<pallas_src>
import functools

import jax
import jax.numpy as jnp
from jax.experimental import pallas as pl
from jax.experimental.pallas import tpu as pltpu

EPS = 1e-5
LANE = 128
SUB = 8


def _round_up(n, m):
    return (n + m - 1) // m * m


def _row_tile(n, target=128):
    """Pick a sublane-aligned row tile and the padded row count it divides."""
    t = min(target, _round_up(n, SUB))
    return t, _round_up(n, t)


# ---------------------------------------------------------------------------
# Stage 1: conv_reduce (1x1) + BN1 partial stats (sum, sum of squares)
# ---------------------------------------------------------------------------
def _stage1_kernel(x_ref, w_ref, y_ref, s_ref):
    # x: (1, TL, Cin_p)  w: (Cin_p, D_p)  y: (1, TL, D_p)  s: (1, 1, 2, D_p)
    y = jnp.dot(x_ref[0], w_ref[...], preferred_element_type=jnp.float32)
    y_ref[0] = y
    ssum = jnp.sum(y, axis=0, keepdims=True)
    ssq = jnp.sum(y * y, axis=0, keepdims=True)
    s_ref[0, 0] = jnp.concatenate([ssum, ssq], axis=0)


# ---------------------------------------------------------------------------
# Stage 2: BN1(scale/shift)+relu, grouped k=3 strided conv (in-kernel window
#          gather from a VMEM halo scratch), BN2 partial stats
# ---------------------------------------------------------------------------
def _stage2_kernel(y1_ref, sc_ref, sh_ref, wt_ref, y2_ref, s_ref, hbuf_ref, *,
                   L, Lout, stride):
    # y1: (1, L_p, D_p)  sc/sh: (1, D_p)  wt: (3, D_p, D_p)
    # y2: (1, Lout_p, D_p)  s: (1, 2, D_p)  hbuf: (Lh_p, D_p) VMEM scratch
    d_p = y1_ref.shape[-1]

    y1 = y1_ref[0]
    if y1.shape[0] != L:
        y1 = y1[:L]
    h = jnp.maximum(y1 * sc_ref[...] + sh_ref[...], 0.0)          # (L, D_p)

    # zero-padded halo buffer: row 0 and rows >= L+1 stay zero (conv padding=1)
    hbuf_ref[...] = jnp.zeros(hbuf_ref.shape, hbuf_ref.dtype)
    hbuf_ref[pl.ds(1, L), :] = h

    # k=3 grouped conv as three strided matmuls against block-diagonal tap weights
    acc = jnp.zeros((Lout, d_p), jnp.float32)
    for k in range(3):
        if stride == 1:
            idx = pl.ds(k, Lout)
        else:
            idx = pl.ds(k, Lout, stride=stride)
        win = hbuf_ref[idx, :]                                     # rows k, k+s, ...
        acc = acc + jnp.dot(win, wt_ref[k], preferred_element_type=jnp.float32)

    ssum = jnp.sum(acc, axis=0, keepdims=True)
    ssq = jnp.sum(acc * acc, axis=0, keepdims=True)
    s_ref[0] = jnp.concatenate([ssum, ssq], axis=0)

    lout_p = y2_ref.shape[1]
    if lout_p == Lout:
        y2_ref[0] = acc
    else:
        y2_ref[0, :Lout, :] = acc
        y2_ref[0, Lout:, :] = jnp.zeros((lout_p - Lout, d_p), jnp.float32)


# ---------------------------------------------------------------------------
# Stage 3: BN2(scale/shift)+relu, conv_expand (1x1), shortcut conv (1x1 strided
#          handled in glue), BN3/BN4 partial stats
# ---------------------------------------------------------------------------
def _stage3_kernel(y2_ref, xs_ref, sc_ref, sh_ref, we_ref, ws_ref,
                   e_ref, r_ref, s3_ref, s4_ref, *, Lout, tile, masked):
    h = jnp.maximum(y2_ref[0] * sc_ref[...] + sh_ref[...], 0.0)       # (TL, D_p)
    e = jnp.dot(h, we_ref[...], preferred_element_type=jnp.float32)   # (TL, Cout_p)
    r = jnp.dot(xs_ref[0], ws_ref[...], preferred_element_type=jnp.float32)
    e_ref[0] = e
    r_ref[0] = r
    if masked:  # exclude padded rows from the stats (trace-time branch)
        row = jax.lax.broadcasted_iota(jnp.int32, (tile, 1), 0) + pl.program_id(1) * tile
        m = (row < Lout).astype(jnp.float32)
        e = e * m
        r = r * m
    s3_ref[0, 0] = jnp.concatenate(
        [jnp.sum(e, axis=0, keepdims=True), jnp.sum(e * e, axis=0, keepdims=True)], axis=0)
    s4_ref[0, 0] = jnp.concatenate(
        [jnp.sum(r, axis=0, keepdims=True), jnp.sum(r * r, axis=0, keepdims=True)], axis=0)


# ---------------------------------------------------------------------------
# Stage 4: BN3 + BN4 (scale/shift) + residual add + relu
# ---------------------------------------------------------------------------
def _stage4_kernel(e_ref, r_ref, sc3_ref, sh3_ref, sc4_ref, sh4_ref, o_ref):
    v = (e_ref[0] * sc3_ref[...] + sh3_ref[...]) + (r_ref[0] * sc4_ref[...] + sh4_ref[...])
    o_ref[0] = jnp.maximum(v, 0.0)


# ---------------------------------------------------------------------------
# JAX glue: fold global (sum, sumsq) partials into per-channel scale/shift
# ---------------------------------------------------------------------------
def _finalize_bn(partial_stats, count, gamma, beta, c_pad):
    c = partial_stats.shape[-1]
    s = partial_stats.reshape(-1, 2, c).sum(axis=0)
    mean = s[0] / count
    var = jnp.maximum(s[1] / count - mean * mean, 0.0)   # biased var, one-pass
    g = jnp.pad(gamma, (0, c_pad - gamma.shape[0]))
    b = jnp.pad(beta, (0, c_pad - beta.shape[0]))
    scale = g * jax.lax.rsqrt(var + EPS)
    shift = b - mean * scale
    return scale.reshape(1, c_pad), shift.reshape(1, c_pad)


# ---------------------------------------------------------------------------
# Full block forward
# ---------------------------------------------------------------------------
def resnext_bottleneck_forward(x_ncl, params, *, stride, cardinality):
    (w_reduce_t, g1, b1, w_group_t, g2, b2,
     w_expand_t, g3, b3, w_short_t, g4, b4) = params

    f32 = jnp.float32
    N, Cin, L = x_ncl.shape
    D = w_reduce_t.shape[0]
    Cout = w_expand_t.shape[0]
    Lout = (L - 1) // stride + 1

    Cin_p = _round_up(Cin, LANE)
    D_p = _round_up(D, LANE)
    Cout_p = _round_up(Cout, LANE)

    TL1, L_p = _row_tile(L)
    TL2, Lout_p = _row_tile(Lout)
    Lh_p = _round_up(L + 2, SUB)

    # ---- weights: kernel layout (in_ch, out_ch), zero-padded to lane width ----
    w_r = jnp.pad(jnp.transpose(w_reduce_t[:, :, 0]), ((0, Cin_p - Cin), (0, D_p - D)))
    w_e = jnp.pad(jnp.transpose(w_expand_t[:, :, 0]), ((0, D_p - D), (0, Cout_p - Cout)))
    w_s = jnp.pad(jnp.transpose(w_short_t[:, :, 0]), ((0, Cin_p - Cin), (0, Cout_p - Cout)))

    # grouped conv weight (D, D//card, 3) -> 3 dense block-diagonal tap matrices
    gs = D // cardinality
    w_blk = w_group_t.reshape(cardinality, gs, gs, 3)      # (grp, out_in_grp, in_in_grp, k)
    eye = jnp.eye(cardinality, dtype=f32)
    dense = (eye[:, None, :, None, None] * w_blk[:, :, None, :, :]).reshape(D, D, 3)
    w_taps = jnp.transpose(dense, (2, 1, 0))               # (3, c_in, c_out)
    w_taps = jnp.pad(w_taps, ((0, 0), (0, D_p - D), (0, D_p - D)))

    # ---- activations: channels-last, zero-padded rows & lanes ----
    x_nlc = jnp.transpose(x_ncl, (0, 2, 1))                                # (N, L, Cin)
    x_p = jnp.pad(x_nlc, ((0, 0), (0, L_p - L), (0, Cin_p - Cin)))
    x_sh = jnp.pad(x_nlc[:, ::stride, :],
                   ((0, 0), (0, Lout_p - Lout), (0, Cin_p - Cin)))         # (N, Lout_p, Cin_p)

    # ---- stage 1: conv_reduce + BN1 partial stats ------------------------------
    n1 = L_p // TL1
    y1, s1 = pl.pallas_call(
        _stage1_kernel,
        grid=(N, n1),
        in_specs=[
            pl.BlockSpec((1, TL1, Cin_p), lambda n, j: (n, j, 0)),
            pl.BlockSpec((Cin_p, D_p), lambda n, j: (0, 0)),
        ],
        out_specs=[
            pl.BlockSpec((1, TL1, D_p), lambda n, j: (n, j, 0)),
            pl.BlockSpec((1, 1, 2, D_p), lambda n, j: (n, j, 0, 0)),
        ],
        out_shape=(
            jax.ShapeDtypeStruct((N, L_p, D_p), f32),
            jax.ShapeDtypeStruct((N, n1, 2, D_p), f32),
        ),
        compiler_params=pltpu.CompilerParams(
            dimension_semantics=("parallel", "parallel")),
    )(x_p, w_r)
    scale1, shift1 = _finalize_bn(s1, N * L, g1, b1, D_p)

    # ---- stage 2: BN1+relu, grouped k=3 strided conv, BN2 partial stats --------
    # TODO(synk): for very long sequences, tile Lout here too and fetch the halo
    # with a manual pltpu.make_async_copy instead of one full-L block per batch.
    k2 = functools.partial(_stage2_kernel, L=L, Lout=Lout, stride=stride)
    y2, s2 = pl.pallas_call(
        k2,
        grid=(N,),
        in_specs=[
            pl.BlockSpec((1, L_p, D_p), lambda n: (n, 0, 0)),
            pl.BlockSpec((1, D_p), lambda n: (0, 0)),
            pl.BlockSpec((1, D_p), lambda n: (0, 0)),
            pl.BlockSpec((3, D_p, D_p), lambda n: (0, 0, 0)),
        ],
        out_specs=[
            pl.BlockSpec((1, Lout_p, D_p), lambda n: (n, 0, 0)),
            pl.BlockSpec((1, 2, D_p), lambda n: (n, 0, 0)),
        ],
        out_shape=(
            jax.ShapeDtypeStruct((N, Lout_p, D_p), f32),
            jax.ShapeDtypeStruct((N, 2, D_p), f32),
        ),
        scratch_shapes=[pltpu.VMEM((Lh_p, D_p), f32)],
        compiler_params=pltpu.CompilerParams(dimension_semantics=("parallel",)),
    )(y1, scale1, shift1, w_taps)
    scale2, shift2 = _finalize_bn(s2, N * Lout, g2, b2, D_p)

    # ---- stage 3: BN2+relu, conv_expand, shortcut conv, BN3/BN4 partial stats --
    n3 = Lout_p // TL2
    k3 = functools.partial(_stage3_kernel, Lout=Lout, tile=TL2,
                           masked=(Lout_p != Lout))
    e, sc, s3, s4 = pl.pallas_call(
        k3,
        grid=(N, n3),
        in_specs=[
            pl.BlockSpec((1, TL2, D_p), lambda n, j: (n, j, 0)),
            pl.BlockSpec((1, TL2, Cin_p), lambda n, j: (n, j, 0)),
            pl.BlockSpec((1, D_p), lambda n, j: (0, 0)),
            pl.BlockSpec((1, D_p), lambda n, j: (0, 0)),
            pl.BlockSpec((D_p, Cout_p), lambda n, j: (0, 0)),
            pl.BlockSpec((Cin_p, Cout_p), lambda n, j: (0, 0)),
        ],
        out_specs=[
            pl.BlockSpec((1, TL2, Cout_p), lambda n, j: (n, j, 0)),
            pl.BlockSpec((1, TL2, Cout_p), lambda n, j: (n, j, 0)),
            pl.BlockSpec((1, 1, 2, Cout_p), lambda n, j: (n, j, 0, 0)),
            pl.BlockSpec((1, 1, 2, Cout_p), lambda n, j: (n, j, 0, 0)),
        ],
        out_shape=(
            jax.ShapeDtypeStruct((N, Lout_p, Cout_p), f32),
            jax.ShapeDtypeStruct((N, Lout_p, Cout_p), f32),
            jax.ShapeDtypeStruct((N, n3, 2, Cout_p), f32),
            jax.ShapeDtypeStruct((N, n3, 2, Cout_p), f32),
        ),
        compiler_params=pltpu.CompilerParams(
            dimension_semantics=("parallel", "parallel")),
    )(y2, x_sh, scale2, shift2, w_e, w_s)
    scale3, shift3 = _finalize_bn(s3, N * Lout, g3, b3, Cout_p)
    scale4, shift4 = _finalize_bn(s4, N * Lout, g4, b4, Cout_p)

    # ---- stage 4: BN3 + BN4 + residual add + relu ------------------------------
    out_p = pl.pallas_call(
        _stage4_kernel,
        grid=(N, n3),
        in_specs=[
            pl.BlockSpec((1, TL2, Cout_p), lambda n, j: (n, j, 0)),
            pl.BlockSpec((1, TL2, Cout_p), lambda n, j: (n, j, 0)),
            pl.BlockSpec((1, Cout_p), lambda n, j: (0, 0)),
            pl.BlockSpec((1, Cout_p), lambda n, j: (0, 0)),
            pl.BlockSpec((1, Cout_p), lambda n, j: (0, 0)),
            pl.BlockSpec((1, Cout_p), lambda n, j: (0, 0)),
        ],
        out_specs=pl.BlockSpec((1, TL2, Cout_p), lambda n, j: (n, j, 0)),
        out_shape=jax.ShapeDtypeStruct((N, Lout_p, Cout_p), f32),
        compiler_params=pltpu.CompilerParams(
            dimension_semantics=("parallel", "parallel")),
    )(e, sc, scale3, shift3, scale4, shift4)

    out = out_p[:, :Lout, :Cout]
    return jnp.transpose(out, (0, 2, 1))                                   # (N, Cout, Lout)


# ---------------------------------------------------------------------------
# Pure-JAX reference (torch semantics, NCL layout) for verification
# ---------------------------------------------------------------------------
def reference_forward(x_ncl, params, *, stride, cardinality):
    (w_reduce_t, g1, b1, w_group_t, g2, b2,
     w_expand_t, g3, b3, w_short_t, g4, b4) = params

    def bn(y, g, b, relu):
        mean = y.mean(axis=(0, 2), keepdims=True)
        var = ((y - mean) ** 2).mean(axis=(0, 2), keepdims=True)
        out = g[None, :, None] * (y - mean) / jnp.sqrt(var + EPS) + b[None, :, None]
        return jnp.maximum(out, 0.0) if relu else out

    y = jnp.einsum('ncl,dc->ndl', x_ncl, w_reduce_t[:, :, 0])
    y = bn(y, g1, b1, relu=True)
    y = jax.lax.conv_general_dilated(
        y, w_group_t, window_strides=(stride,), padding=((1, 1),),
        dimension_numbers=('NCH', 'OIH', 'NCH'),
        feature_group_count=cardinality)
    y = bn(y, g2, b2, relu=True)
    y = jnp.einsum('ndl,od->nol', y, w_expand_t[:, :, 0])
    y = bn(y, g3, b3, relu=False)
    sc = jnp.einsum('ncl,oc->nol', x_ncl[:, :, ::stride], w_short_t[:, :, 0])
    sc = bn(sc, g4, b4, relu=False)
    return jnp.maximum(sc + y, 0.0)


# ---------------------------------------------------------------------------
if __name__ == "__main__":
    # Module config: D = cardinality * int(base_width * out_channels / (widen_factor*64))
    in_channels, out_channels = 32, 64
    stride, cardinality, base_width, widen_factor = 2, 4, 8, 1
    D = cardinality * int(base_width * (out_channels / (widen_factor * 64.0)))  # 32

    N, L = 2, 16
    key = jax.random.PRNGKey(0)
    ks = jax.random.split(key, 8)

    x = jax.random.normal(ks[0], (N, in_channels, L), jnp.float32)

    # Deterministic synthetic parameters (torch layouts for conv weights).
    w_reduce_t = 0.1 * jax.random.normal(ks[1], (D, in_channels, 1), jnp.float32)
    w_group_t = 0.1 * jax.random.normal(ks[2], (D, D // cardinality, 3), jnp.float32)
    w_expand_t = 0.1 * jax.random.normal(ks[3], (out_channels, D, 1), jnp.float32)
    w_short_t = 0.1 * jax.random.normal(ks[4], (out_channels, in_channels, 1), jnp.float32)

    def bn_params(k, c):
        kg, kb = jax.random.split(k)
        return (1.0 + 0.1 * jax.random.normal(kg, (c,), jnp.float32),
                0.1 * jax.random.normal(kb, (c,), jnp.float32))

    g1, b1 = bn_params(ks[5], D)
    g2, b2 = bn_params(ks[6], D)
    g3, b3 = bn_params(ks[7], out_channels)
    g4, b4 = bn_params(jax.random.fold_in(key, 99), out_channels)

    params = (w_reduce_t, g1, b1, w_group_t, g2, b2,
              w_expand_t, g3, b3, w_short_t, g4, b4)

    fwd = functools.partial(resnext_bottleneck_forward,
                            stride=stride, cardinality=cardinality)
    out = jax.jit(fwd)(x, params)
    out = jax.block_until_ready(out)

    ref = reference_forward(x, params, stride=stride, cardinality=cardinality)
    ref = jax.block_until_ready(ref)

    assert out.shape == (N, out_channels, (L - 1) // stride + 1), out.shape
    assert jnp.allclose(out, ref, rtol=1e-4, atol=1e-4), \
        float(jnp.max(jnp.abs(out - ref)))

    print("KERNEL_OK")
</pallas_src>

<mosaic_0001>
module attributes {stable_mosaic.version = 11 : i64} {
  func.func @_stage1_kernel(%arg0: i32, %arg1: i32, %arg2: memref<1x16x128xf32, #tpu.memory_space<vmem>>, %arg3: memref<128x128xf32, #tpu.memory_space<vmem>>, %arg4: memref<1x16x128xf32, #tpu.memory_space<vmem>>, %arg5: memref<1x1x2x128xf32, #tpu.memory_space<vmem>>) attributes {dimension_semantics = [#tpu.dimension_semantics<parallel>, #tpu.dimension_semantics<parallel>], iteration_bounds = array<i64: 2, 1>, scalar_prefetch = 0 : i64, scratch_operands = 0 : i64, tpu.core_type = #tpu.core_type<tc>, window_params = [{transform_indices = @transform_0, window_bounds = array<i64: 1, 16, 128>}, {pipeline_mode = #tpu.pipeline_mode<synchronous>, transform_indices = @transform_1, window_bounds = array<i64: 128, 128>}, {transform_indices = @transform_2, window_bounds = array<i64: 1, 16, 128>}, {transform_indices = @transform_3, window_bounds = array<i64: 1, 1, 2, 128>}]} {
    %c0 = arith.constant 0 : index
    %c0_0 = arith.constant 0 : index
    %c0_1 = arith.constant 0 : index
    %0 = vector.load %arg2[%c0, %c0_0, %c0_1] : memref<1x16x128xf32, #tpu.memory_space<vmem>>, vector<1x16x128xf32>
    %1 = vector.shape_cast %0 : vector<1x16x128xf32> to vector<16x128xf32>
    %c0_2 = arith.constant 0 : index
    %c0_3 = arith.constant 0 : index
    %2 = vector.load %arg3[%c0_2, %c0_3] : memref<128x128xf32, #tpu.memory_space<vmem>>, vector<128x128xf32>
    %cst = arith.constant dense<0.000000e+00> : vector<16x128xf32>
    %3 = tpu.matmul %1, %2, %cst {dimension_numbers = #tpu.dot_dimension_numbers<[1], [0], [0], [1], [0, 0, 1, 1], [], []>} : vector<16x128xf32>, vector<128x128xf32>, vector<16x128xf32> -> vector<16x128xf32>
    %c0_4 = arith.constant 0 : index
    %c0_5 = arith.constant 0 : index
    %c0_6 = arith.constant 0 : index
    %4 = vector.load %arg4[%c0_4, %c0_5, %c0_6] : memref<1x16x128xf32, #tpu.memory_space<vmem>>, vector<1x16x128xf32>
    %5 = vector.shape_cast %4 : vector<1x16x128xf32> to vector<16x128xf32>
    %6 = vector.shape_cast %3 : vector<16x128xf32> to vector<1x16x128xf32>
    tpu.vector_store %arg4[%c0_4, %c0_5, %c0_6], %6 {strides = array<i32>} : memref<1x16x128xf32, #tpu.memory_space<vmem>>, vector<1x16x128xf32>,
    %cst_7 = arith.constant dense<0.000000e+00> : vector<128xf32>
    %7 = vector.multi_reduction <add>, %3, %cst_7 [0] : vector<16x128xf32> to vector<128xf32>
    %8 = vector.shape_cast %7 : vector<128xf32> to vector<1x128xf32>
    %9 = arith.mulf %3, %3 : vector<16x128xf32>
    %cst_8 = arith.constant dense<0.000000e+00> : vector<128xf32>
    %10 = vector.multi_reduction <add>, %9, %cst_8 [0] : vector<16x128xf32> to vector<128xf32>
    %11 = vector.shape_cast %10 : vector<128xf32> to vector<1x128xf32>
    %12 = tpu.concatenate %8, %11 in 0 : vector<1x128xf32>, vector<1x128xf32> -> vector<2x128xf32>
    %c0_9 = arith.constant 0 : index
    %c0_10 = arith.constant 0 : index
    %c0_11 = arith.constant 0 : index
    %c0_12 = arith.constant 0 : index
    %13 = vector.load %arg5[%c0_9, %c0_10, %c0_11, %c0_12] : memref<1x1x2x128xf32, #tpu.memory_space<vmem>>, vector<1x1x2x128xf32>
    %14 = vector.shape_cast %13 : vector<1x1x2x128xf32> to vector<2x128xf32>
    %15 = vector.shape_cast %12 : vector<2x128xf32> to vector<1x1x2x128xf32>
    tpu.vector_store %arg5[%c0_9, %c0_10, %c0_11, %c0_12], %15 {strides = array<i32>} : memref<1x1x2x128xf32, #tpu.memory_space<vmem>>, vector<1x1x2x128xf32>,
    return
  }
  func.func @transform_0(%arg0: i32, %arg1: i32) -> (i32, i32, i32) {
    %c0_i32 = arith.constant 0 : i32
    %c0_i32_0 = arith.constant 0 : i32
    return %arg0, %arg1, %c0_i32 : i32, i32, i32
  }
  func.func @transform_1(%arg0: i32, %arg1: i32) -> (i32, i32) {
    %c0_i32 = arith.constant 0 : i32
    %c0_i32_0 = arith.constant 0 : i32
    %c0_i32_1 = arith.constant 0 : i32
    return %c0_i32, %c0_i32_0 : i32, i32
  }
  func.func @transform_2(%arg0: i32, %arg1: i32) -> (i32, i32, i32) {
    %c0_i32 = arith.constant 0 : i32
    %c0_i32_0 = arith.constant 0 : i32
    return %arg0, %arg1, %c0_i32 : i32, i32, i32
  }
  func.func @transform_3(%arg0: i32, %arg1: i32) -> (i32, i32, i32, i32) {
    %c0_i32 = arith.constant 0 : i32
    %c0_i32_0 = arith.constant 0 : i32
    %c0_i32_1 = arith.constant 0 : i32
    return %arg0, %arg1, %c0_i32, %c0_i32_0 : i32, i32, i32, i32
  }
}

module attributes {stable_mosaic.version = 11 : i64} {
  func.func @_stage2_kernel(%arg0: i32, %arg1: memref<1x16x128xf32, #tpu.memory_space<vmem>>, %arg2: memref<1x128xf32, #tpu.memory_space<vmem>>, %arg3: memref<1x128xf32, #tpu.memory_space<vmem>>, %arg4: memref<3x128x128xf32, #tpu.memory_space<vmem>>, %arg5: memref<1x8x128xf32, #tpu.memory_space<vmem>>, %arg6: memref<1x2x128xf32, #tpu.memory_space<vmem>>, %arg7: memref<24x128xf32, #tpu.memory_space<vmem>>) attributes {dimension_semantics = [#tpu.dimension_semantics<parallel>], iteration_bounds = array<i64: 2>, scalar_prefetch = 0 : i64, scratch_operands = 1 : i64, tpu.core_type = #tpu.core_type<tc>, window_params = [{transform_indices = @transform_0, window_bounds = array<i64: 1, 16, 128>}, {pipeline_mode = #tpu.pipeline_mode<synchronous>, transform_indices = @transform_1, window_bounds = array<i64: 1, 128>}, {pipeline_mode = #tpu.pipeline_mode<synchronous>, transform_indices = @transform_2, window_bounds = array<i64: 1, 128>}, {pipeline_mode = #tpu.pipeline_mode<synchronous>, transform_indices = @transform_3, window_bounds = array<i64: 3, 128, 128>}, {transform_indices = @transform_4, window_bounds = array<i64: 1, 8, 128>}, {transform_indices = @transform_5, window_bounds = array<i64: 1, 2, 128>}]} {
    %c0 = arith.constant 0 : index
    %c0_0 = arith.constant 0 : index
    %c0_1 = arith.constant 0 : index
    %0 = vector.load %arg1[%c0, %c0_0, %c0_1] : memref<1x16x128xf32, #tpu.memory_space<vmem>>, vector<1x16x128xf32>
    %1 = vector.shape_cast %0 : vector<1x16x128xf32> to vector<16x128xf32>
    %c0_2 = arith.constant 0 : index
    %c0_3 = arith.constant 0 : index
    %2 = vector.load %arg2[%c0_2, %c0_3] : memref<1x128xf32, #tpu.memory_space<vmem>>, vector<1x128xf32>
    %3 = vector.broadcast %2 : vector<1x128xf32> to vector<16x128xf32>
    %4 = arith.mulf %1, %3 : vector<16x128xf32>
    %c0_4 = arith.constant 0 : index
    %c0_5 = arith.constant 0 : index
    %5 = vector.load %arg3[%c0_4, %c0_5] : memref<1x128xf32, #tpu.memory_space<vmem>>, vector<1x128xf32>
    %6 = vector.broadcast %5 : vector<1x128xf32> to vector<16x128xf32>
    %7 = arith.addf %4, %6 : vector<16x128xf32>
    %cst = arith.constant 0.000000e+00 : f32
    %8 = vector.broadcast %cst : f32 to vector<16x128xf32>
    %9 = arith.maximumf %7, %8 : vector<16x128xf32>
    %cst_6 = arith.constant 0.000000e+00 : f32
    %10 = vector.broadcast %cst_6 : f32 to vector<24x128xf32>
    %c0_7 = arith.constant 0 : index
    %c0_8 = arith.constant 0 : index
    %11 = vector.load %arg7[%c0_7, %c0_8] : memref<24x128xf32, #tpu.memory_space<vmem>>, vector<24x128xf32>
    tpu.vector_store %arg7[%c0_7, %c0_8], %10 {strides = array<i32>} : memref<24x128xf32, #tpu.memory_space<vmem>>, vector<24x128xf32>,
    %c1 = arith.constant 1 : index
    %c0_9 = arith.constant 0 : index
    %12 = vector.load %arg7[%c1, %c0_9] : memref<24x128xf32, #tpu.memory_space<vmem>>, vector<16x128xf32>
    tpu.vector_store %arg7[%c1, %c0_9], %9 {strides = array<i32>} : memref<24x128xf32, #tpu.memory_space<vmem>>, vector<16x128xf32>,
    %cst_10 = arith.constant 0.000000e+00 : f32
    %13 = vector.broadcast %cst_10 : f32 to vector<8x128xf32>
    %c0_11 = arith.constant 0 : index
    %c0_12 = arith.constant 0 : index
    %14 = tpu.strided_load %arg7[%c0_11, %c0_12] {strides = array<i32: 2, 1>} : memref<24x128xf32, #tpu.memory_space<vmem>>, vector<8x128xf32>
    %c0_13 = arith.constant 0 : index
    %c0_14 = arith.constant 0 : index
    %c0_15 = arith.constant 0 : index
    %15 = vector.load %arg4[%c0_13, %c0_14, %c0_15] : memref<3x128x128xf32, #tpu.memory_space<vmem>>, vector<1x128x128xf32>
    %16 = vector.shape_cast %15 : vector<1x128x128xf32> to vector<128x128xf32>
    %cst_16 = arith.constant dense<0.000000e+00> : vector<8x128xf32>
    %17 = tpu.matmul %14, %16, %cst_16 {dimension_numbers = #tpu.dot_dimension_numbers<[1], [0], [0], [1], [0, 0, 1, 1], [], []>} : vector<8x128xf32>, vector<128x128xf32>, vector<8x128xf32> -> vector<8x128xf32>
    %18 = arith.addf %13, %17 : vector<8x128xf32>
    %c1_17 = arith.constant 1 : index
    %c0_18 = arith.constant 0 : index
    %19 = tpu.strided_load %arg7[%c1_17, %c0_18] {strides = array<i32: 2, 1>} : memref<24x128xf32, #tpu.memory_space<vmem>>, vector<8x128xf32>
    %c1_19 = arith.constant 1 : index
    %c0_20 = arith.constant 0 : index
    %c0_21 = arith.constant 0 : index
    %20 = vector.load %arg4[%c1_19, %c0_20, %c0_21] : memref<3x128x128xf32, #tpu.memory_space<vmem>>, vector<1x128x128xf32>
    %21 = vector.shape_cast %20 : vector<1x128x128xf32> to vector<128x128xf32>
    %cst_22 = arith.constant dense<0.000000e+00> : vector<8x128xf32>
    %22 = tpu.matmul %19, %21, %cst_22 {dimension_numbers = #tpu.dot_dimension_numbers<[1], [0], [0], [1], [0, 0, 1, 1], [], []>} : vector<8x128xf32>, vector<128x128xf32>, vector<8x128xf32> -> vector<8x128xf32>
    %23 = arith.addf %18, %22 : vector<8x128xf32>
    %c2 = arith.constant 2 : index
    %c0_23 = arith.constant 0 : index
    %24 = tpu.strided_load %arg7[%c2, %c0_23] {strides = array<i32: 2, 1>} : memref<24x128xf32, #tpu.memory_space<vmem>>, vector<8x128xf32>
    %c2_24 = arith.constant 2 : index
    %c0_25 = arith.constant 0 : index
    %c0_26 = arith.constant 0 : index
    %25 = vector.load %arg4[%c2_24, %c0_25, %c0_26] : memref<3x128x128xf32, #tpu.memory_space<vmem>>, vector<1x128x128xf32>
    %26 = vector.shape_cast %25 : vector<1x128x128xf32> to vector<128x128xf32>
    %cst_27 = arith.constant dense<0.000000e+00> : vector<8x128xf32>
    %27 = tpu.matmul %24, %26, %cst_27 {dimension_numbers = #tpu.dot_dimension_numbers<[1], [0], [0], [1], [0, 0, 1, 1], [], []>} : vector<8x128xf32>, vector<128x128xf32>, vector<8x128xf32> -> vector<8x128xf32>
    %28 = arith.addf %23, %27 : vector<8x128xf32>
    %cst_28 = arith.constant dense<0.000000e+00> : vector<128xf32>
    %29 = vector.multi_reduction <add>, %28, %cst_28 [0] : vector<8x128xf32> to vector<128xf32>
    %30 = vector.shape_cast %29 : vector<128xf32> to vector<1x128xf32>
    %31 = arith.mulf %28, %28 : vector<8x128xf32>
    %cst_29 = arith.constant dense<0.000000e+00> : vector<128xf32>
    %32 = vector.multi_reduction <add>, %31, %cst_29 [0] : vector<8x128xf32> to vector<128xf32>
    %33 = vector.shape_cast %32 : vector<128xf32> to vector<1x128xf32>
    %34 = tpu.concatenate %30, %33 in 0 : vector<1x128xf32>, vector<1x128xf32> -> vector<2x128xf32>
    %c0_30 = arith.constant 0 : index
    %c0_31 = arith.constant 0 : index
    %c0_32 = arith.constant 0 : index
    %35 = vector.load %arg6[%c0_30, %c0_31, %c0_32] : memref<1x2x128xf32, #tpu.memory_space<vmem>>, vector<1x2x128xf32>
    %36 = vector.shape_cast %35 : vector<1x2x128xf32> to vector<2x128xf32>
    %37 = vector.shape_cast %34 : vector<2x128xf32> to vector<1x2x128xf32>
    tpu.vector_store %arg6[%c0_30, %c0_31, %c0_32], %37 {strides = array<i32>} : memref<1x2x128xf32, #tpu.memory_space<vmem>>, vector<1x2x128xf32>,
    %c0_33 = arith.constant 0 : index
    %c0_34 = arith.constant 0 : index
    %c0_35 = arith.constant 0 : index
    %38 = vector.load %arg5[%c0_33, %c0_34, %c0_35] : memref<1x8x128xf32, #tpu.memory_space<vmem>>, vector<1x8x128xf32>
    %39 = vector.shape_cast %38 : vector<1x8x128xf32> to vector<8x128xf32>
    %40 = vector.shape_cast %28 : vector<8x128xf32> to vector<1x8x128xf32>
    tpu.vector_store %arg5[%c0_33, %c0_34, %c0_35], %40 {strides = array<i32>} : memref<1x8x128xf32, #tpu.memory_space<vmem>>, vector<1x8x128xf32>,
    return
  }
  func.func @transform_0(%arg0: i32) -> (i32, i32, i32) {
    %c0_i32 = arith.constant 0 : i32
    %c0_i32_0 = arith.constant 0 : i32
    %c0_i32_1 = arith.constant 0 : i32
    return %arg0, %c0_i32, %c0_i32_0 : i32, i32, i32
  }
  func.func @transform_1(%arg0: i32) -> (i32, i32) {
    %c0_i32 = arith.constant 0 : i32
    %c0_i32_0 = arith.constant 0 : i32
    %c0_i32_1 = arith.constant 0 : i32
    return %c0_i32, %c0_i32_0 : i32, i32
  }
  func.func @transform_2(%arg0: i32) -> (i32, i32) {
    %c0_i32 = arith.constant 0 : i32
    %c0_i32_0 = arith.constant 0 : i32
    %c0_i32_1 = arith.constant 0 : i32
    return %c0_i32, %c0_i32_0 : i32, i32
  }
  func.func @transform_3(%arg0: i32) -> (i32, i32, i32) {
    %c0_i32 = arith.constant 0 : i32
    %c0_i32_0 = arith.constant 0 : i32
    %c0_i32_1 = arith.constant 0 : i32
    %c0_i32_2 = arith.constant 0 : i32
    return %c0_i32, %c0_i32_0, %c0_i32_1 : i32, i32, i32
  }
  func.func @transform_4(%arg0: i32) -> (i32, i32, i32) {
    %c0_i32 = arith.constant 0 : i32
    %c0_i32_0 = arith.constant 0 : i32
    %c0_i32_1 = arith.constant 0 : i32
    return %arg0, %c0_i32, %c0_i32_0 : i32, i32, i32
  }
  func.func @transform_5(%arg0: i32) -> (i32, i32, i32) {
    %c0_i32 = arith.constant 0 : i32
    %c0_i32_0 = arith.constant 0 : i32
    %c0_i32_1 = arith.constant 0 : i32
    return %arg0, %c0_i32, %c0_i32_0 : i32, i32, i32
  }
}

module attributes {stable_mosaic.version = 11 : i64} {
  func.func @_stage3_kernel(%arg0: i32, %arg1: i32, %arg2: memref<1x8x128xf32, #tpu.memory_space<vmem>>, %arg3: memref<1x8x128xf32, #tpu.memory_space<vmem>>, %arg4: memref<1x128xf32, #tpu.memory_space<vmem>>, %arg5: memref<1x128xf32, #tpu.memory_space<vmem>>, %arg6: memref<128x128xf32, #tpu.memory_space<vmem>>, %arg7: memref<128x128xf32, #tpu.memory_space<vmem>>, %arg8: memref<1x8x128xf32, #tpu.memory_space<vmem>>, %arg9: memref<1x8x128xf32, #tpu.memory_space<vmem>>, %arg10: memref<1x1x2x128xf32, #tpu.memory_space<vmem>>, %arg11: memref<1x1x2x128xf32, #tpu.memory_space<vmem>>) attributes {dimension_semantics = [#tpu.dimension_semantics<parallel>, #tpu.dimension_semantics<parallel>], iteration_bounds = array<i64: 2, 1>, scalar_prefetch = 0 : i64, scratch_operands = 0 : i64, tpu.core_type = #tpu.core_type<tc>, window_params = [{transform_indices = @transform_0, window_bounds = array<i64: 1, 8, 128>}, {transform_indices = @transform_1, window_bounds = array<i64: 1, 8, 128>}, {pipeline_mode = #tpu.pipeline_mode<synchronous>, transform_indices = @transform_2, window_bounds = array<i64: 1, 128>}, {pipeline_mode = #tpu.pipeline_mode<synchronous>, transform_indices = @transform_3, window_bounds = array<i64: 1, 128>}, {pipeline_mode = #tpu.pipeline_mode<synchronous>, transform_indices = @transform_4, window_bounds = array<i64: 128, 128>}, {pipeline_mode = #tpu.pipeline_mode<synchronous>, transform_indices = @transform_5, window_bounds = array<i64: 128, 128>}, {transform_indices = @transform_6, window_bounds = array<i64: 1, 8, 128>}, {transform_indices = @transform_7, window_bounds = array<i64: 1, 8, 128>}, {transform_indices = @transform_8, window_bounds = array<i64: 1, 1, 2, 128>}, {transform_indices = @transform_9, window_bounds = array<i64: 1, 1, 2, 128>}]} {
    %c0 = arith.constant 0 : index
    %c0_0 = arith.constant 0 : index
    %c0_1 = arith.constant 0 : index
    %0 = vector.load %arg2[%c0, %c0_0, %c0_1] : memref<1x8x128xf32, #tpu.memory_space<vmem>>, vector<1x8x128xf32>
    %1 = vector.shape_cast %0 : vector<1x8x128xf32> to vector<8x128xf32>
    %c0_2 = arith.constant 0 : index
    %c0_3 = arith.constant 0 : index
    %2 = vector.load %arg4[%c0_2, %c0_3] : memref<1x128xf32, #tpu.memory_space<vmem>>, vector<1x128xf32>
    %3 = vector.broadcast %2 : vector<1x128xf32> to vector<8x128xf32>
    %4 = arith.mulf %1, %3 : vector<8x128xf32>
    %c0_4 = arith.constant 0 : index
    %c0_5 = arith.constant 0 : index
    %5 = vector.load %arg5[%c0_4, %c0_5] : memref<1x128xf32, #tpu.memory_space<vmem>>, vector<1x128xf32>
    %6 = vector.broadcast %5 : vector<1x128xf32> to vector<8x128xf32>
    %7 = arith.addf %4, %6 : vector<8x128xf32>
    %cst = arith.constant 0.000000e+00 : f32
    %8 = vector.broadcast %cst : f32 to vector<8x128xf32>
    %9 = arith.maximumf %7, %8 : vector<8x128xf32>
    %c0_6 = arith.constant 0 : index
    %c0_7 = arith.constant 0 : index
    %10 = vector.load %arg6[%c0_6, %c0_7] : memref<128x128xf32, #tpu.memory_space<vmem>>, vector<128x128xf32>
    %cst_8 = arith.constant dense<0.000000e+00> : vector<8x128xf32>
    %11 = tpu.matmul %9, %10, %cst_8 {dimension_numbers = #tpu.dot_dimension_numbers<[1], [0], [0], [1], [0, 0, 1, 1], [], []>} : vector<8x128xf32>, vector<128x128xf32>, vector<8x128xf32> -> vector<8x128xf32>
    %c0_9 = arith.constant 0 : index
    %c0_10 = arith.constant 0 : index
    %c0_11 = arith.constant 0 : index
    %12 = vector.load %arg3[%c0_9, %c0_10, %c0_11] : memref<1x8x128xf32, #tpu.memory_space<vmem>>, vector<1x8x128xf32>
    %13 = vector.shape_cast %12 : vector<1x8x128xf32> to vector<8x128xf32>
    %c0_12 = arith.constant 0 : index
    %c0_13 = arith.constant 0 : index
    %14 = vector.load %arg7[%c0_12, %c0_13] : memref<128x128xf32, #tpu.memory_space<vmem>>, vector<128x128xf32>
    %cst_14 = arith.constant dense<0.000000e+00> : vector<8x128xf32>
    %15 = tpu.matmul %13, %14, %cst_14 {dimension_numbers = #tpu.dot_dimension_numbers<[1], [0], [0], [1], [0, 0, 1, 1], [], []>} : vector<8x128xf32>, vector<128x128xf32>, vector<8x128xf32> -> vector<8x128xf32>
    %c0_15 = arith.constant 0 : index
    %c0_16 = arith.constant 0 : index
    %c0_17 = arith.constant 0 : index
    %16 = vector.load %arg8[%c0_15, %c0_16, %c0_17] : memref<1x8x128xf32, #tpu.memory_space<vmem>>, vector<1x8x128xf32>
    %17 = vector.shape_cast %16 : vector<1x8x128xf32> to vector<8x128xf32>
    %18 = vector.shape_cast %11 : vector<8x128xf32> to vector<1x8x128xf32>
    tpu.vector_store %arg8[%c0_15, %c0_16, %c0_17], %18 {strides = array<i32>} : memref<1x8x128xf32, #tpu.memory_space<vmem>>, vector<1x8x128xf32>,
    %c0_18 = arith.constant 0 : index
    %c0_19 = arith.constant 0 : index
    %c0_20 = arith.constant 0 : index
    %19 = vector.load %arg9[%c0_18, %c0_19, %c0_20] : memref<1x8x128xf32, #tpu.memory_space<vmem>>, vector<1x8x128xf32>
    %20 = vector.shape_cast %19 : vector<1x8x128xf32> to vector<8x128xf32>
    %21 = vector.shape_cast %15 : vector<8x128xf32> to vector<1x8x128xf32>
    tpu.vector_store %arg9[%c0_18, %c0_19, %c0_20], %21 {strides = array<i32>} : memref<1x8x128xf32, #tpu.memory_space<vmem>>, vector<1x8x128xf32>,
    %cst_21 = arith.constant dense<0.000000e+00> : vector<128xf32>
    %22 = vector.multi_reduction <add>, %11, %cst_21 [0] : vector<8x128xf32> to vector<128xf32>
    %23 = vector.shape_cast %22 : vector<128xf32> to vector<1x128xf32>
    %24 = arith.mulf %11, %11 : vector<8x128xf32>
    %cst_22 = arith.constant dense<0.000000e+00> : vector<128xf32>
    %25 = vector.multi_reduction <add>, %24, %cst_22 [0] : vector<8x128xf32> to vector<128xf32>
    %26 = vector.shape_cast %25 : vector<128xf32> to vector<1x128xf32>
    %27 = tpu.concatenate %23, %26 in 0 : vector<1x128xf32>, vector<1x128xf32> -> vector<2x128xf32>
    %c0_23 = arith.constant 0 : index
    %c0_24 = arith.constant 0 : index
    %c0_25 = arith.constant 0 : index
    %c0_26 = arith.constant 0 : index
    %28 = vector.load %arg10[%c0_23, %c0_24, %c0_25, %c0_26] : memref<1x1x2x128xf32, #tpu.memory_space<vmem>>, vector<1x1x2x128xf32>
    %29 = vector.shape_cast %28 : vector<1x1x2x128xf32> to vector<2x128xf32>
    %30 = vector.shape_cast %27 : vector<2x128xf32> to vector<1x1x2x128xf32>
    tpu.vector_store %arg10[%c0_23, %c0_24, %c0_25, %c0_26], %30 {strides = array<i32>} : memref<1x1x2x128xf32, #tpu.memory_space<vmem>>, vector<1x1x2x128xf32>,
    %cst_27 = arith.constant dense<0.000000e+00> : vector<128xf32>
    %31 = vector.multi_reduction <add>, %15, %cst_27 [0] : vector<8x128xf32> to vector<128xf32>
    %32 = vector.shape_cast %31 : vector<128xf32> to vector<1x128xf32>
    %33 = arith.mulf %15, %15 : vector<8x128xf32>
    %cst_28 = arith.constant dense<0.000000e+00> : vector<128xf32>
    %34 = vector.multi_reduction <add>, %33, %cst_28 [0] : vector<8x128xf32> to vector<128xf32>
    %35 = vector.shape_cast %34 : vector<128xf32> to vector<1x128xf32>
    %36 = tpu.concatenate %32, %35 in 0 : vector<1x128xf32>, vector<1x128xf32> -> vector<2x128xf32>
    %c0_29 = arith.constant 0 : index
    %c0_30 = arith.constant 0 : index
    %c0_31 = arith.constant 0 : index
    %c0_32 = arith.constant 0 : index
    %37 = vector.load %arg11[%c0_29, %c0_30, %c0_31, %c0_32] : memref<1x1x2x128xf32, #tpu.memory_space<vmem>>, vector<1x1x2x128xf32>
    %38 = vector.shape_cast %37 : vector<1x1x2x128xf32> to vector<2x128xf32>
    %39 = vector.shape_cast %36 : vector<2x128xf32> to vector<1x1x2x128xf32>
    tpu.vector_store %arg11[%c0_29, %c0_30, %c0_31, %c0_32], %39 {strides = array<i32>} : memref<1x1x2x128xf32, #tpu.memory_space<vmem>>, vector<1x1x2x128xf32>,
    return
  }
  func.func @transform_0(%arg0: i32, %arg1: i32) -> (i32, i32, i32) {
    %c0_i32 = arith.constant 0 : i32
    %c0_i32_0 = arith.constant 0 : i32
    return %arg0, %arg1, %c0_i32 : i32, i32, i32
  }
  func.func @transform_1(%arg0: i32, %arg1: i32) -> (i32, i32, i32) {
    %c0_i32 = arith.constant 0 : i32
    %c0_i32_0 = arith.constant 0 : i32
    return %arg0, %arg1, %c0_i32 : i32, i32, i32
  }
  func.func @transform_2(%arg0: i32, %arg1: i32) -> (i32, i32) {
    %c0_i32 = arith.constant 0 : i32
    %c0_i32_0 = arith.constant 0 : i32
    %c0_i32_1 = arith.constant 0 : i32
    return %c0_i32, %c0_i32_0 : i32, i32
  }
  func.func @transform_3(%arg0: i32, %arg1: i32) -> (i32, i32) {
    %c0_i32 = arith.constant 0 : i32
    %c0_i32_0 = arith.constant 0 : i32
    %c0_i32_1 = arith.constant 0 : i32
    return %c0_i32, %c0_i32_0 : i32, i32
  }
  func.func @transform_4(%arg0: i32, %arg1: i32) -> (i32, i32) {
    %c0_i32 = arith.constant 0 : i32
    %c0_i32_0 = arith.constant 0 : i32
    %c0_i32_1 = arith.constant 0 : i32
    return %c0_i32, %c0_i32_0 : i32, i32
  }
  func.func @transform_5(%arg0: i32, %arg1: i32) -> (i32, i32) {
    %c0_i32 = arith.constant 0 : i32
    %c0_i32_0 = arith.constant 0 : i32
    %c0_i32_1 = arith.constant 0 : i32
    return %c0_i32, %c0_i32_0 : i32, i32
  }
  func.func @transform_6(%arg0: i32, %arg1: i32) -> (i32, i32, i32) {
    %c0_i32 = arith.constant 0 : i32
    %c0_i32_0 = arith.constant 0 : i32
    return %arg0, %arg1, %c0_i32 : i32, i32, i32
  }
  func.func @transform_7(%arg0: i32, %arg1: i32) -> (i32, i32, i32) {
    %c0_i32 = arith.constant 0 : i32
    %c0_i32_0 = arith.constant 0 : i32
    return %arg0, %arg1, %c0_i32 : i32, i32, i32
  }
  func.func @transform_8(%arg0: i32, %arg1: i32) -> (i32, i32, i32, i32) {
    %c0_i32 = arith.constant 0 : i32
    %c0_i32_0 = arith.constant 0 : i32
    %c0_i32_1 = arith.constant 0 : i32
    return %arg0, %arg1, %c0_i32, %c0_i32_0 : i32, i32, i32, i32
  }
  func.func @transform_9(%arg0: i32, %arg1: i32) -> (i32, i32, i32, i32) {
    %c0_i32 = arith.constant 0 : i32
    %c0_i32_0 = arith.constant 0 : i32
    %c0_i32_1 = arith.constant 0 : i32
    return %arg0, %arg1, %c0_i32, %c0_i32_0 : i32, i32, i32, i32
  }
}

module attributes {stable_mosaic.version = 11 : i64} {
  func.func @_stage4_kernel(%arg0: i32, %arg1: i32, %arg2: memref<1x8x128xf32, #tpu.memory_space<vmem>>, %arg3: memref<1x8x128xf32, #tpu.memory_space<vmem>>, %arg4: memref<1x128xf32, #tpu.memory_space<vmem>>, %arg5: memref<1x128xf32, #tpu.memory_space<vmem>>, %arg6: memref<1x128xf32, #tpu.memory_space<vmem>>, %arg7: memref<1x128xf32, #tpu.memory_space<vmem>>, %arg8: memref<1x8x128xf32, #tpu.memory_space<vmem>>) attributes {dimension_semantics = [#tpu.dimension_semantics<parallel>, #tpu.dimension_semantics<parallel>], iteration_bounds = array<i64: 2, 1>, scalar_prefetch = 0 : i64, scratch_operands = 0 : i64, tpu.core_type = #tpu.core_type<tc>, window_params = [{transform_indices = @transform_0, window_bounds = array<i64: 1, 8, 128>}, {transform_indices = @transform_1, window_bounds = array<i64: 1, 8, 128>}, {pipeline_mode = #tpu.pipeline_mode<synchronous>, transform_indices = @transform_2, window_bounds = array<i64: 1, 128>}, {pipeline_mode = #tpu.pipeline_mode<synchronous>, transform_indices = @transform_3, window_bounds = array<i64: 1, 128>}, {pipeline_mode = #tpu.pipeline_mode<synchronous>, transform_indices = @transform_4, window_bounds = array<i64: 1, 128>}, {pipeline_mode = #tpu.pipeline_mode<synchronous>, transform_indices = @transform_5, window_bounds = array<i64: 1, 128>}, {transform_indices = @transform_6, window_bounds = array<i64: 1, 8, 128>}]} {
    %c0 = arith.constant 0 : index
    %c0_0 = arith.constant 0 : index
    %c0_1 = arith.constant 0 : index
    %0 = vector.load %arg2[%c0, %c0_0, %c0_1] : memref<1x8x128xf32, #tpu.memory_space<vmem>>, vector<1x8x128xf32>
    %1 = vector.shape_cast %0 : vector<1x8x128xf32> to vector<8x128xf32>
    %c0_2 = arith.constant 0 : index
    %c0_3 = arith.constant 0 : index
    %2 = vector.load %arg4[%c0_2, %c0_3] : memref<1x128xf32, #tpu.memory_space<vmem>>, vector<1x128xf32>
    %3 = vector.broadcast %2 : vector<1x128xf32> to vector<8x128xf32>
    %4 = arith.mulf %1, %3 : vector<8x128xf32>
    %c0_4 = arith.constant 0 : index
    %c0_5 = arith.constant 0 : index
    %5 = vector.load %arg5[%c0_4, %c0_5] : memref<1x128xf32, #tpu.memory_space<vmem>>, vector<1x128xf32>
    %6 = vector.broadcast %5 : vector<1x128xf32> to vector<8x128xf32>
    %7 = arith.addf %4, %6 : vector<8x128xf32>
    %c0_6 = arith.constant 0 : index
    %c0_7 = arith.constant 0 : index
    %c0_8 = arith.constant 0 : index
    %8 = vector.load %arg3[%c0_6, %c0_7, %c0_8] : memref<1x8x128xf32, #tpu.memory_space<vmem>>, vector<1x8x128xf32>
    %9 = vector.shape_cast %8 : vector<1x8x128xf32> to vector<8x128xf32>
    %c0_9 = arith.constant 0 : index
    %c0_10 = arith.constant 0 : index
    %10 = vector.load %arg6[%c0_9, %c0_10] : memref<1x128xf32, #tpu.memory_space<vmem>>, vector<1x128xf32>
    %11 = vector.broadcast %10 : vector<1x128xf32> to vector<8x128xf32>
    %12 = arith.mulf %9, %11 : vector<8x128xf32>
    %c0_11 = arith.constant 0 : index
    %c0_12 = arith.constant 0 : index
    %13 = vector.load %arg7[%c0_11, %c0_12] : memref<1x128xf32, #tpu.memory_space<vmem>>, vector<1x128xf32>
    %14 = vector.broadcast %13 : vector<1x128xf32> to vector<8x128xf32>
    %15 = arith.addf %12, %14 : vector<8x128xf32>
    %16 = arith.addf %7, %15 : vector<8x128xf32>
    %cst = arith.constant 0.000000e+00 : f32
    %17 = vector.broadcast %cst : f32 to vector<8x128xf32>
    %18 = arith.maximumf %16, %17 : vector<8x128xf32>
    %c0_13 = arith.constant 0 : index
    %c0_14 = arith.constant 0 : index
    %c0_15 = arith.constant 0 : index
    %19 = vector.load %arg8[%c0_13, %c0_14, %c0_15] : memref<1x8x128xf32, #tpu.memory_space<vmem>>, vector<1x8x128xf32>
    %20 = vector.shape_cast %19 : vector<1x8x128xf32> to vector<8x128xf32>
    %21 = vector.shape_cast %18 : vector<8x128xf32> to vector<1x8x128xf32>
    tpu.vector_store %arg8[%c0_13, %c0_14, %c0_15], %21 {strides = array<i32>} : memref<1x8x128xf32, #tpu.memory_space<vmem>>, vector<1x8x128xf32>,
    return
  }
  func.func @transform_0(%arg0: i32, %arg1: i32) -> (i32, i32, i32) {
    %c0_i32 = arith.constant 0 : i32
    %c0_i32_0 = arith.constant 0 : i32
    return %arg0, %arg1, %c0_i32 : i32, i32, i32
  }
  func.func @transform_1(%arg0: i32, %arg1: i32) -> (i32, i32, i32) {
    %c0_i32 = arith.constant 0 : i32
    %c0_i32_0 = arith.constant 0 : i32
    return %arg0, %arg1, %c0_i32 : i32, i32, i32
  }
  func.func @transform_2(%arg0: i32, %arg1: i32) -> (i32, i32) {
    %c0_i32 = arith.constant 0 : i32
    %c0_i32_0 = arith.constant 0 : i32
    %c0_i32_1 = arith.constant 0 : i32
    return %c0_i32, %c0_i32_0 : i32, i32
  }
  func.func @transform_3(%arg0: i32, %arg1: i32) -> (i32, i32) {
    %c0_i32 = arith.constant 0 : i32
    %c0_i32_0 = arith.constant 0 : i32
    %c0_i32_1 = arith.constant 0 : i32
    return %c0_i32, %c0_i32_0 : i32, i32
  }
  func.func @transform_4(%arg0: i32, %arg1: i32) -> (i32, i32) {
    %c0_i32 = arith.constant 0 : i32
    %c0_i32_0 = arith.constant 0 : i32
    %c0_i32_1 = arith.constant 0 : i32
    return %c0_i32, %c0_i32_0 : i32, i32
  }
  func.func @transform_5(%arg0: i32, %arg1: i32) -> (i32, i32) {
    %c0_i32 = arith.constant 0 : i32
    %c0_i32_0 = arith.constant 0 : i32
    %c0_i32_1 = arith.constant 0 : i32
    return %c0_i32, %c0_i32_0 : i32, i32
  }
  func.func @transform_6(%arg0: i32, %arg1: i32) -> (i32, i32, i32) {
    %c0_i32 = arith.constant 0 : i32
    %c0_i32_0 = arith.constant 0 : i32
    return %arg0, %arg1, %c0_i32 : i32, i32, i32
  }
}

</mosaic_0001>

<llo_original>
// kernel: mul.23
$region0: #{mul.23}
  %s0 = inlined_call_operand.vmem [shape: f32[32,8,3], index: 0, kind: input, shape index: {}]
  %s1 = inlined_call_operand.vmem [shape: f32[4,8,8,3], index: 1, kind: output, shape index: {}]
  $region1: #{mul.23} parent=0
    #allocation0 [shape = 'u8[98304]{0}', space=vmem, size = 0x18000, scoped, tag = 'scoped mem for output reshape']
    %v2 = vld [vmem:[%s0] sm:$0xff]
    %vm3 = vcmask 64512
    %4 = vst.msk [vmem:[#allocation0] ss:$8 sm:$0xf] %vm3, %v2
    %5 = vst.msk [vmem:[#allocation0] ss:$8 sm:$0xf0] %vm3, %v2
    %s6 = scalar_lea.vmem %s0, 8
    %v7 = vld [vmem:[%s6] sm:$0xff]
    %vm8 = vcmask 64512
    %s9 = scalar_lea.vmem [#allocation0], 64
    %10 = vst.msk [vmem:[%s9] ss:$8 sm:$0xf] %vm8, %v7
    %s11 = scalar_lea.vmem [#allocation0], 64
    %12 = vst.msk [vmem:[%s11] ss:$8 sm:$0xf0] %vm8, %v7
    %s13 = scalar_lea.vmem %s0, 16
    %v14 = vld [vmem:[%s13] sm:$0xff]
    %vm15 = vcmask 64512
    %s16 = scalar_lea.vmem [#allocation0], 128
    %17 = vst.msk [vmem:[%s16] ss:$8 sm:$0xf] %vm15, %v14
    %s18 = scalar_lea.vmem [#allocation0], 128
    %19 = vst.msk [vmem:[%s18] ss:$8 sm:$0xf0] %vm15, %v14
    %v20 = vld [vmem:[%s0] sm:$0xff]
    %21 = vrot.lane.b32.xlu0 %v20, 120
    %v22 = vpop.permute.xlu0 %21
    %vm23 = vcmask 64512
    %s24 = scalar_lea.vmem [#allocation0], 1
    %25 = vst.msk [vmem:[%s24] ss:$8 sm:$0xf] %vm23, %v22
    %s26 = scalar_lea.vmem [#allocation0], 1
    %27 = vst.msk [vmem:[%s26] ss:$8 sm:$0xf0] %vm23, %v22
    %s28 = scalar_lea.vmem %s0, 8
    %v29 = vld [vmem:[%s28] sm:$0xff]
    %30 = vrot.lane.b32.xlu0 %v29, 120
    %v31 = vpop.permute.xlu0 %30
    %vm32 = vcmask 64512
    %s33 = scalar_lea.vmem [#allocation0], 65
    %34 = vst.msk [vmem:[%s33] ss:$8 sm:$0xf] %vm32, %v31
    %s35 = scalar_lea.vmem [#allocation0], 65
    %36 = vst.msk [vmem:[%s35] ss:$8 sm:$0xf0] %vm32, %v31
    %s37 = scalar_lea.vmem %s0, 16
    %v38 = vld [vmem:[%s37] sm:$0xff]
    %39 = vrot.lane.b32.xlu0 %v38, 120
    %v40 = vpop.permute.xlu0 %39
    %vm41 = vcmask 64512
    %s42 = scalar_lea.vmem [#allocation0], 129
    %43 = vst.msk [vmem:[%s42] ss:$8 sm:$0xf] %vm41, %v40
    %s44 = scalar_lea.vmem [#allocation0], 129
    %45 = vst.msk [vmem:[%s44] ss:$8 sm:$0xf0] %vm41, %v40
    %v46 = vld [vmem:[%s0] sm:$0xff]
    %47 = vrot.lane.b32.xlu0 %v46, 112
    %v48 = vpop.permute.xlu0 %47
    %vm49 = vcmask 64512
    %s50 = scalar_lea.vmem [#allocation0], 2
    %51 = vst.msk [vmem:[%s50] ss:$8 sm:$0xf] %vm49, %v48
    %s52 = scalar_lea.vmem [#allocation0], 2
    %53 = vst.msk [vmem:[%s52] ss:$8 sm:$0xf0] %vm49, %v48
    %s54 = scalar_lea.vmem %s0, 8
    %v55 = vld [vmem:[%s54] sm:$0xff]
    %56 = vrot.lane.b32.xlu0 %v55, 112
    %v57 = vpop.permute.xlu0 %56
    %vm58 = vcmask 64512
    %s59 = scalar_lea.vmem [#allocation0], 66
    %60 = vst.msk [vmem:[%s59] ss:$8 sm:$0xf] %vm58, %v57
    %s61 = scalar_lea.vmem [#allocation0], 66
    %62 = vst.msk [vmem:[%s61] ss:$8 sm:$0xf0] %vm58, %v57
    %s63 = scalar_lea.vmem %s0, 16
    %v64 = vld [vmem:[%s63] sm:$0xff]
    %65 = vrot.lane.b32.xlu0 %v64, 112
    %v66 = vpop.permute.xlu0 %65
    %vm67 = vcmask 64512
    %s68 = scalar_lea.vmem [#allocation0], 130
    %69 = vst.msk [vmem:[%s68] ss:$8 sm:$0xf] %vm67, %v66
    %s70 = scalar_lea.vmem [#allocation0], 130
    %71 = vst.msk [vmem:[%s70] ss:$8 sm:$0xf0] %vm67, %v66
    %v72 = vld [vmem:[%s0] sm:$0xff]
    %73 = vrot.lane.b32.xlu0 %v72, 104
    %v74 = vpop.permute.xlu0 %73
    %vm75 = vcmask 64512
    %s76 = scalar_lea.vmem [#allocation0], 3
    %77 = vst.msk [vmem:[%s76] ss:$8 sm:$0xf] %vm75, %v74
    %s78 = scalar_lea.vmem [#allocation0], 3
    %79 = vst.msk [vmem:[%s78] ss:$8 sm:$0xf0] %vm75, %v74
    %s80 = scalar_lea.vmem %s0, 8
    %v81 = vld [vmem:[%s80] sm:$0xff]
    %82 = vrot.lane.b32.xlu0 %v81, 104
    %v83 = vpop.permute.xlu0 %82
    %vm84 = vcmask 64512
    %s85 = scalar_lea.vmem [#allocation0], 67
    %86 = vst.msk [vmem:[%s85] ss:$8 sm:$0xf] %vm84, %v83
    %s87 = scalar_lea.vmem [#allocation0], 67
    %88 = vst.msk [vmem:[%s87] ss:$8 sm:$0xf0] %vm84, %v83
    %s89 = scalar_lea.vmem %s0, 16
    %v90 = vld [vmem:[%s89] sm:$0xff]
    %91 = vrot.lane.b32.xlu0 %v90, 104
    %v92 = vpop.permute.xlu0 %91
    %vm93 = vcmask 64512
    %s94 = scalar_lea.vmem [#allocation0], 131
    %95 = vst.msk [vmem:[%s94] ss:$8 sm:$0xf] %vm93, %v92
    %s96 = scalar_lea.vmem [#allocation0], 131
    %97 = vst.msk [vmem:[%s96] ss:$8 sm:$0xf0] %vm93, %v92
    %s99 = sshllo.u32 0, 4
    %v101 = vld [vmem:[#allocation0] sm:%s99]
    %s102 = sshllo.u32 0, 4
    %103 = vst [vmem:[%s1] sm:%s102] %v101
    %s104 = scalar_lea.vmem [#allocation0], 8
    %v105 = vld [vmem:[%s104] sm:%s99]
    %s106 = sshllo.u32 0, 4
    %s107 = scalar_lea.vmem %s1, 4
    %108 = vst [vmem:[%s107] sm:%s106] %v105
    %s109 = scalar_lea.vmem [#allocation0], 16
    %v110 = vld [vmem:[%s109] sm:%s99]
    %s111 = sshllo.u32 0, 4
    %s112 = smul.addr 4, 2
    %s113 = scalar_lea.vmem %s1, %s112
    %114 = vst [vmem:[%s113] sm:%s111] %v110
    %s115 = scalar_lea.vmem [#allocation0], 24
    %v116 = vld [vmem:[%s115] sm:%s99]
    %s117 = sshllo.u32 0, 4
    %s118 = smul.addr 4, 3
    %s119 = scalar_lea.vmem %s1, %s118
    %120 = vst [vmem:[%s119] sm:%s117] %v116
    %s121 = scalar_lea.vmem [#allocation0], 32
    %v122 = vld [vmem:[%s121] sm:%s99]
    %s123 = sshllo.u32 0, 4
    %s124 = smul.addr 4, 4
    %s125 = scalar_lea.vmem %s1, %s124
    %126 = vst [vmem:[%s125] sm:%s123] %v122
    %s127 = scalar_lea.vmem [#allocation0], 40
    %v128 = vld [vmem:[%s127] sm:%s99]
    %s129 = sshllo.u32 0, 4
    %s130 = smul.addr 4, 5
    %s131 = scalar_lea.vmem %s1, %s130
    %132 = vst [vmem:[%s131] sm:%s129] %v128
    %s133 = scalar_lea.vmem [#allocation0], 48
    %v134 = vld [vmem:[%s133] sm:%s99]
    %s135 = sshllo.u32 0, 4
    %s136 = smul.addr 4, 6
    %s137 = scalar_lea.vmem %s1, %s136
    %138 = vst [vmem:[%s137] sm:%s135] %v134
    %s139 = scalar_lea.vmem [#allocation0], 56
    %v140 = vld [vmem:[%s139] sm:%s99]
    %s141 = sshllo.u32 0, 4
    %s142 = smul.addr 4, 7
    %s143 = scalar_lea.vmem %s1, %s142
    %144 = vst [vmem:[%s143] sm:%s141] %v140
    %s145 = scalar_lea.vmem [#allocation0], 64
    %v146 = vld [vmem:[%s145] sm:%s99]
    %s147 = sshllo.u32 0, 4
    %s148 = smul.addr 4, 8
    %s149 = scalar_lea.vmem %s1, %s148
    %150 = vst [vmem:[%s149] sm:%s147] %v146
    %s151 = scalar_lea.vmem [#allocation0], 72
    %v152 = vld [vmem:[%s151] sm:%s99]
    %s153 = sshllo.u32 0, 4
    %s154 = smul.addr 4, 9
    %s155 = scalar_lea.vmem %s1, %s154
    %156 = vst [vmem:[%s155] sm:%s153] %v152
    %s157 = scalar_lea.vmem [#allocation0], 80
    %v158 = vld [vmem:[%s157] sm:%s99]
    %s159 = sshllo.u32 0, 4
    %s160 = smul.addr 4, 10
    %s161 = scalar_lea.vmem %s1, %s160
    %162 = vst [vmem:[%s161] sm:%s159] %v158
    %s163 = scalar_lea.vmem [#allocation0], 88
    %v164 = vld [vmem:[%s163] sm:%s99]
    %s165 = sshllo.u32 0, 4
    %s166 = smul.addr 4, 11
    %s167 = scalar_lea.vmem %s1, %s166
    %168 = vst [vmem:[%s167] sm:%s165] %v164
    %s169 = scalar_lea.vmem [#allocation0], 96
    %v170 = vld [vmem:[%s169] sm:%s99]
    %s171 = sshllo.u32 0, 4
    %s172 = smul.addr 4, 12
    %s173 = scalar_lea.vmem %s1, %s172
    %174 = vst [vmem:[%s173] sm:%s171] %v170
    %s175 = scalar_lea.vmem [#allocation0], 104
    %v176 = vld [vmem:[%s175] sm:%s99]
    %s177 = sshllo.u32 0, 4
    %s178 = smul.addr 4, 13
    %s179 = scalar_lea.vmem %s1, %s178
    %180 = vst [vmem:[%s179] sm:%s177] %v176
    %s181 = scalar_lea.vmem [#allocation0], 112
    %v182 = vld [vmem:[%s181] sm:%s99]
    %s183 = sshllo.u32 0, 4
    %s184 = smul.addr 4, 14
    %s185 = scalar_lea.vmem %s1, %s184
    %186 = vst [vmem:[%s185] sm:%s183] %v182
    %s187 = scalar_lea.vmem [#allocation0], 120
    %v188 = vld [vmem:[%s187] sm:%s99]
    %s189 = sshllo.u32 0, 4
    %s190 = smul.addr 4, 15
    %s191 = scalar_lea.vmem %s1, %s190
    %192 = vst [vmem:[%s191] sm:%s189] %v188
    %s193 = scalar_lea.vmem [#allocation0], 128
    %v194 = vld [vmem:[%s193] sm:%s99]
    %s195 = sshllo.u32 0, 4
    %s196 = smul.addr 4, 16
    %s197 = scalar_lea.vmem %s1, %s196
    %198 = vst [vmem:[%s197] sm:%s195] %v194
    %s199 = scalar_lea.vmem [#allocation0], 136
    %v200 = vld [vmem:[%s199] sm:%s99]
    %s201 = sshllo.u32 0, 4
    %s202 = smul.addr 4, 17
    %s203 = scalar_lea.vmem %s1, %s202
    %204 = vst [vmem:[%s203] sm:%s201] %v200
    %s205 = scalar_lea.vmem [#allocation0], 144
    %v206 = vld [vmem:[%s205] sm:%s99]
    %s207 = sshllo.u32 0, 4
    %s208 = smul.addr 4, 18
    %s209 = scalar_lea.vmem %s1, %s208
    %210 = vst [vmem:[%s209] sm:%s207] %v206
    %s211 = scalar_lea.vmem [#allocation0], 152
    %v212 = vld [vmem:[%s211] sm:%s99]
    %s213 = sshllo.u32 0, 4
    %s214 = smul.addr 4, 19
    %s215 = scalar_lea.vmem %s1, %s214
    %216 = vst [vmem:[%s215] sm:%s213] %v212
    %s217 = scalar_lea.vmem [#allocation0], 160
    %v218 = vld [vmem:[%s217] sm:%s99]
    %s219 = sshllo.u32 0, 4
    %s220 = smul.addr 4, 20
    %s221 = scalar_lea.vmem %s1, %s220
    %222 = vst [vmem:[%s221] sm:%s219] %v218
    %s223 = scalar_lea.vmem [#allocation0], 168
    %v224 = vld [vmem:[%s223] sm:%s99]
    %s225 = sshllo.u32 0, 4
    %s226 = smul.addr 4, 21
    %s227 = scalar_lea.vmem %s1, %s226
    %228 = vst [vmem:[%s227] sm:%s225] %v224
    %s229 = scalar_lea.vmem [#allocation0], 176
    %v230 = vld [vmem:[%s229] sm:%s99]
    %s231 = sshllo.u32 0, 4
    %s232 = smul.addr 4, 22
    %s233 = scalar_lea.vmem %s1, %s232
    %234 = vst [vmem:[%s233] sm:%s231] %v230
    %s235 = scalar_lea.vmem [#allocation0], 184
    %v236 = vld [vmem:[%s235] sm:%s99]
    %s237 = sshllo.u32 0, 4
    %s238 = smul.addr 4, 23
    %s239 = scalar_lea.vmem %s1, %s238
    %240 = vst [vmem:[%s239] sm:%s237] %v236

// kernel: resnext_bottleneck_forward.4
$region0: #{resnext_bottleneck_forward.4}
  #allocation0 [shape = 'u32[]', space=smem, size = 0x4, offset = 0x4, fixed_abs, tag = 'smem constant byte address 0x4 - core index']
  #allocation1 [shape = 'u32[144,128]{1,0:T(1,128)}', space=vmem, size = 0x12000, scoped, tag = 'internal scratch']
  %s0 = inlined_call_operand.vmem [shape: f32[2,16,128], index: 0, kind: input, shape index: {}]
  %s1 = inlined_call_operand.vmem [shape: f32[128,128], index: 1, kind: input, shape index: {}]
  %s2 = inlined_call_operand.vmem [shape: f32[2,16,128], index: 2, kind: output, shape index: {0}]
  %s3 = inlined_call_operand.vmem [shape: f32[2,1,2,128], index: 3, kind: output, shape index: {1}]
  %4 = xla_tuple %s2, %s3
  %s5 = sld [smem:[#allocation0]]
  $region49: #{resnext_bottleneck_forward.4} parent=0
    _
  %s7 = ssub.s32 1, %s5
  %s8 = scalar_select 0, %s7, %s5
  loop: start=0, step=1, limit=4
  $region2: #{resnext_bottleneck_forward.4} parent=0 // loop_pre_header
    _
  $region3: #{resnext_bottleneck_forward.4} parent=0 // loop_header
    %s10 = sphi 0, %s14
    %p11 = scmp.ge.s32.totalorder %s10, 4
    %s17 = sphi 0, %s29
    %s18 = sphi 0, %s25
    %s19 = sphi 0, %s17
    %s20 = sphi 0, %s18
    %s21 = sphi 0, %s19
    %s22 = sphi 0, %s20
    %s34 = sphi 0, %s36
    %s37 = sphi 0, %s34
    %s38 = sphi 0, %s37
    %s54 = sphi 0, %s38
    %s58 = sphi 0, %s58
    %s60 = sphi 0, %s58
    %s61 = sphi 0, %s60
    %s75 = sphi 0, %s61
    %s83 = sphi 0, %s85
    %s86 = sphi 0, %s83
    %s87 = sphi 0, %s86
    %s103 = sphi 0, %s87
    %s111 = sphi 0, %s113
    %s114 = sphi 0, %s111
    %s115 = sphi 0, %s114
    %s131 = sphi 0, %s115
  $region4: #{resnext_bottleneck_forward.4} parent=0 // loop_header_branch
    %13 = sbr.rel (%p11) target = $region8
  $region5: #{resnext_bottleneck_forward.4} parent=0 // loop_body
    %s15 = ssub.s32 %s10, 1
    %s16 = ssub.s32 %s10, 2
    %s23 = sadd.s32 1, %s18
    %p24 = scmp.ge.s32.totalorder %s23, 1
    %s25 = scalar_select %p24, 0, %s23
    %s26 = sadd.s32 1, %s17
    %s27 = scalar_select %p24, %s26, %s17
    %p28 = scmp.ge.s32.totalorder %s27, 2
    %s29 = scalar_select %p28, 0, %s27
    %s30 = ssub.s32 %s17, %s29
    %s31 = ssub.s32 %s18, %s25
    %s32 = sor.u32 %s30, %s31
    %p33 = scmp.eq.s32.totalorder %s32, 0
    %s35 = sadd.s32 %s34, 1
    %s36 = scalar_select %p33, %s34, %s35
    %p39 = pneg %p33
    %p40 = scmp.eq.s32.totalorder %s10, 1
    %p41 = por %p39, %p40
    %p42 = scmp.ne.s32.totalorder %s34, %s37
    %p43 = scmp.eq.s32.totalorder %s10, 0
    %p44 = por %p42, %p43
    %p45 = scmp.ne.s32.totalorder %s34, %s37
    %p46 = scmp.eq.s32.totalorder %s15, 1
    %p47 = por %p45, %p46
    %p48 = scmp.ne.s32.totalorder %s37, %s38
    %p49 = scmp.eq.s32.totalorder %s15, 0
    %p50 = por %p48, %p49
    %p51 = scmp.ne.s32.totalorder %s37, %s38
    %p52 = scmp.eq.s32.totalorder %s16, 1
    %p53 = por %p51, %p52
    %p55 = scmp.ne.s32.totalorder %s38, %s54
    %p56 = scmp.eq.s32.totalorder %s16, 0
    %p57 = por %p55, %p56
    %s59 = sadd.s32 %s58, 1
    %p62 = scmp.eq.s32.totalorder %s10, 1
    %p63 = scmp.ne.s32.totalorder %s58, %s60
    %p64 = scmp.eq.s32.totalorder %s10, 0
    %p65 = por %p63, %p64
    %p66 = scmp.ne.s32.totalorder %s58, %s60
    %p67 = scmp.eq.s32.totalorder %s15, 1
    %p68 = por %p66, %p67
    %p69 = scmp.ne.s32.totalorder %s60, %s61
    %p70 = scmp.eq.s32.totalorder %s15, 0
    %p71 = por %p69, %p70
    %p72 = scmp.ne.s32.totalorder %s60, %s61
    %p73 = scmp.eq.s32.totalorder %s16, 1
    %p74 = por %p72, %p73
    %p76 = scmp.ne.s32.totalorder %s61, %s75
    %p77 = scmp.eq.s32.totalorder %s16, 0
    %p78 = por %p76, %p77
    %s79 = ssub.s32 %s17, %s29
    %s80 = ssub.s32 %s18, %s25
    %s81 = sor.u32 %s79, %s80
    %p82 = scmp.eq.s32.totalorder %s81, 0
    %s84 = sadd.s32 %s83, 1
    %s85 = scalar_select %p82, %s83, %s84
    %p88 = pneg %p82
    %p89 = scmp.eq.s32.totalorder %s10, 1
    %p90 = por %p88, %p89
    %p91 = scmp.ne.s32.totalorder %s83, %s86
    %p92 = scmp.eq.s32.totalorder %s10, 0
    %p93 = por %p91, %p92
    %p94 = scmp.ne.s32.totalorder %s83, %s86
    %p95 = scmp.eq.s32.totalorder %s15, 1
    %p96 = por %p94, %p95
    %p97 = scmp.ne.s32.totalorder %s86, %s87
    %p98 = scmp.eq.s32.totalorder %s15, 0
    %p99 = por %p97, %p98
    %p100 = scmp.ne.s32.totalorder %s86, %s87
    %p101 = scmp.eq.s32.totalorder %s16, 1
    %p102 = por %p100, %p101
    %p104 = scmp.ne.s32.totalorder %s87, %s103
    %p105 = scmp.eq.s32.totalorder %s16, 0
    %p106 = por %p104, %p105
    %s107 = ssub.s32 %s17, %s29
    %s108 = ssub.s32 %s18, %s25
    %s109 = sor.u32 %s107, %s108
    %p110 = scmp.eq.s32.totalorder %s109, 0
    %s112 = sadd.s32 %s111, 1
    %s113 = scalar_select %p110, %s111, %s112
    %p116 = pneg %p110
    %p117 = scmp.eq.s32.totalorder %s10, 1
    %p118 = por %p116, %p117
    %p119 = scmp.ne.s32.totalorder %s111, %s114
    %p120 = scmp.eq.s32.totalorder %s10, 0
    %p121 = por %p119, %p120
    %p122 = scmp.ne.s32.totalorder %s111, %s114
    %p123 = scmp.eq.s32.totalorder %s15, 1
    %p124 = por %p122, %p123
    %p125 = scmp.ne.s32.totalorder %s114, %s115
    %p126 = scmp.eq.s32.totalorder %s15, 0
    %p127 = por %p125, %p126
    %p128 = scmp.ne.s32.totalorder %s114, %s115
    %p129 = scmp.eq.s32.totalorder %s16, 1
    %p130 = por %p128, %p129
    %p132 = scmp.ne.s32.totalorder %s115, %s131
    %p133 = scmp.eq.s32.totalorder %s16, 0
    %p134 = por %p132, %p133
    %p135 = scmp.le.s32.totalorder 1, %s10
    %p136 = scmp.lt.s32.totalorder %s10, 3
    %p137 = pnand %p135, %p136
    %p138 = pneg %p137
    // Predicated region
    $region9: #{resnext_bottleneck_forward.4} parent=5 // pred_check
      _
    $region10: #{resnext_bottleneck_forward.4} parent=5 // pred_check_branch
      %140 = sbr.rel (%p137) target = $region12
    $region11: #{resnext_bottleneck_forward.4} parent=5 // pred_region
      %s141 = ssub.s32 %s10, 1
      // Predicated region
      $region13: #{resnext_bottleneck_forward.4} parent=11 // pred_check
        %p142 = pneg %p71
      $region14: #{resnext_bottleneck_forward.4} parent=11 // pred_check_branch
        %144 = sbr.rel (%p142) target = $region16
      $region15: #{resnext_bottleneck_forward.4} parent=11 // pred_region
        _
      $region16: #{resnext_bottleneck_forward.4} parent=11 // pred_fallthru
        _
    $region12: #{resnext_bottleneck_forward.4} parent=5 // pred_fallthru
      _
    %p145 = scmp.lt.s32.totalorder %s10, 2
    // Predicated region
    $region17: #{resnext_bottleneck_forward.4} parent=5 // pred_check
      %p146 = pneg %p145
    $region18: #{resnext_bottleneck_forward.4} parent=5 // pred_check_branch
      %148 = sbr.rel (%p146) target = $region20
    $region19: #{resnext_bottleneck_forward.4} parent=5 // pred_region
      // Predicated region
      $region21: #{resnext_bottleneck_forward.4} parent=19 // pred_check
        %p149 = pneg %p44
      $region22: #{resnext_bottleneck_forward.4} parent=19 // pred_check_branch
        %151 = sbr.rel (%p149) target = $region24
      $region23: #{resnext_bottleneck_forward.4} parent=19 // pred_region
        %s152 = smul.u32 2, %s18
        %p153 = scmp.lt.s32.totalorder %s17, 1
        %s154 = scalar_select %p153, %s17, 1
        %p155 = scmp.lt.s32.totalorder %s152, 1
        %s156 = scalar_select %p155, %s152, 1
        %s157 = smul.addr %s154, 2
        %s158 = sadd.s32 %s156, %s157
        %s159 = smul.addr %s158, 8
        %s160 = scalar_lea.vmem %s0, %s159
        %s161 = smul.u32 2, %s18
      $region24: #{resnext_bottleneck_forward.4} parent=19 // pred_fallthru
        _
    $region20: #{resnext_bottleneck_forward.4} parent=5 // pred_fallthru
      _
    %p162 = scmp.le.s32.totalorder 1, %s10
    %p163 = scmp.lt.s32.totalorder %s10, 3
    %p164 = pnand %p162, %p163
    %p165 = pneg %p164
    // Predicated region
    $region25: #{resnext_bottleneck_forward.4} parent=5 // pred_check
      _
    $region26: #{resnext_bottleneck_forward.4} parent=5 // pred_check_branch
      %167 = sbr.rel (%p164) target = $region28
    $region27: #{resnext_bottleneck_forward.4} parent=5 // pred_region
      %s168 = ssub.s32 %s10, 1
      %s169 = smul.u32 2, %s20
      %p170 = scmp.lt.s32.totalorder %s19, 1
      %s171 = scalar_select %p170, %s19, 1
      %p172 = scmp.lt.s32.totalorder %s169, 1
      %s173 = scalar_select %p172, %s169, 1
      %s174 = smul.addr %s171, 2
      %s175 = sadd.s32 %s173, %s174
      %s176 = smul.addr %s175, 8
      %s177 = scalar_lea.vmem %s0, %s176
      %p178 = pneg %p50
      %p179 = pneg %p47
      %p180 = pneg %p71
      %p181 = pneg %p68
      %p182 = pneg %p99
      %p183 = pneg %p96
      %s184 = smul.u32 2, %s20
      %p185 = scmp.lt.s32.totalorder %s19, 1
      %s186 = scalar_select %p185, %s19, 1
      %p187 = scmp.lt.s32.totalorder %s184, 1
      %s188 = scalar_select %p187, %s184, 1
      %s189 = smul.addr %s186, 2
      %s190 = sadd.s32 %s188, %s189
      %s191 = smul.addr %s190, 8
      %s192 = scalar_lea.vmem %s2, %s191
      %p193 = pneg %p127
      %p194 = pneg %p124
      %p195 = scmp.lt.s32.totalorder %s19, 1
      %s196 = scalar_select %p195, %s19, 1
      %p197 = scmp.lt.s32.totalorder %s20, 0
      %s198 = scalar_select %p197, %s20, 0
      %s199 = sadd.s32 %s198, %s196
      %s200 = smul.addr %s199, 2
      %s201 = scalar_lea.vmem %s3, %s200
      %s202 = smul.u32 2, %s20
      %p203 = scmp.lt.s32.totalorder %s19, 1
      %s204 = scalar_select %p203, %s19, 1
      %p205 = scmp.lt.s32.totalorder %s202, 1
      %s206 = scalar_select %p205, %s202, 1
      %s207 = smul.addr %s204, 2
      %s208 = sadd.s32 %s206, %s207
      %s209 = smul.addr %s208, 8
      %s210 = scalar_lea.vmem %s0, %s209
      %s211 = smul.u32 2, %s20
      %s212 = smul.u32 2, %s20
      %p213 = scmp.lt.s32.totalorder %s19, 1
      %s214 = scalar_select %p213, %s19, 1
      %p215 = scmp.lt.s32.totalorder %s212, 1
      %s216 = scalar_select %p215, %s212, 1
      %s217 = smul.addr %s214, 2
      %s218 = sadd.s32 %s216, %s217
      %s219 = smul.addr %s218, 8
      %s220 = scalar_lea.vmem %s2, %s219
      %s221 = smul.u32 2, %s20
      %p222 = scmp.lt.s32.totalorder %s19, 1
      %s223 = scalar_select %p222, %s19, 1
      %p224 = scmp.lt.s32.totalorder %s20, 0
      %s225 = scalar_select %p224, %s20, 0
      %s226 = sadd.s32 %s225, %s223
      %s227 = smul.addr %s226, 2
      %s228 = scalar_lea.vmem %s3, %s227
      %v229 = vld [vmem:[%s210] sm:$0xff]
      %v230 = vld [vmem:[%s210 + $0x8] sm:$0xff]
      %v231 = vld [vmem:[%s1] sm:$0xff]
      %v232 = vld [vmem:[%s1 + $0x8] sm:$0xff]
      %v233 = vld [vmem:[%s1 + $0x10] sm:$0xff]
      %v234 = vld [vmem:[%s1 + $0x18] sm:$0xff]
      %v235 = vld [vmem:[%s1 + $0x20] sm:$0xff]
      %v236 = vld [vmem:[%s1 + $0x28] sm:$0xff]
      %v237 = vld [vmem:[%s1 + $0x30] sm:$0xff]
      %v238 = vld [vmem:[%s1 + $0x38] sm:$0xff]
      %v239 = vld [vmem:[%s1 + $0x40] sm:$0xff]
      %v240 = vld [vmem:[%s1 + $0x48] sm:$0xff]
      %v241 = vld [vmem:[%s1 + $0x50] sm:$0xff]
      %v242 = vld [vmem:[%s1 + $0x58] sm:$0xff]
      %v243 = vld [vmem:[%s1 + $0x60] sm:$0xff]
      %v244 = vld [vmem:[%s1 + $0x68] sm:$0xff]
      %v245 = vld [vmem:[%s1 + $0x70] sm:$0xff]
      %v246 = vld [vmem:[%s1 + $0x78] sm:$0xff]
      %247 = vmatprep.subr.mxu0 0.0
      %248 = vmatpush1.msra.mxu0 %v231
      %249 = vmatprep.subr.mxu0 0.0
      %250 = vmatpush1.msra.mxu0 %v232
      %251 = vmatprep.subr.mxu0 0.0
      %252 = vmatpush1.msra.mxu0 %v233
      %253 = vmatprep.subr.mxu0 0.0
      %254 = vmatpush1.msra.mxu0 %v234
      %255 = vmatprep.subr.mxu0 0.0
      %256 = vmatpush1.msra.mxu0 %v235
      %257 = vmatprep.subr.mxu0 0.0
      %258 = vmatpush1.msra.mxu0 %v236
      %259 = vmatprep.subr.mxu0 0.0
      %260 = vmatpush1.msra.mxu0 %v237
      %261 = vmatprep.subr.mxu0 0.0
      %262 = vmatpush1.msra.mxu0 %v238
      %263 = vmatprep.subr.mxu0 0.0
      %264 = vmatpush1.msra.mxu0 %v239
      %265 = vmatprep.subr.mxu0 0.0
      %266 = vmatpush1.msra.mxu0 %v240
      %267 = vmatprep.subr.mxu0 0.0
      %268 = vmatpush1.msra.mxu0 %v241
      %269 = vmatprep.subr.mxu0 0.0
      %270 = vmatpush1.msra.mxu0 %v242
      %271 = vmatprep.subr.mxu0 0.0
      %272 = vmatpush1.msra.mxu0 %v243
      %273 = vmatprep.subr.mxu0 0.0
      %274 = vmatpush1.msra.mxu0 %v244
      %275 = vmatprep.subr.mxu0 0.0
      %276 = vmatpush1.msra.mxu0 %v245
      %277 = vmatprep.subr.mxu0 0.0
      %278 = vmatpush1.msra.mxu0 %v246
      %279 = vmatprep.subr.mxu0 0.0
      %280 = vmatpush1.msra.mxu0 0.0
      %281 = vmatprep.subr.mxu0 0.0
      %282 = vmatpush1.msra.mxu0 0.0
      %283 = vmatprep.subr.mxu0 0.0
      %284 = vmatpush1.msra.mxu0 0.0
      %285 = vmatprep.subr.mxu0 0.0
      %286 = vmatpush1.msra.mxu0 0.0
      %287 = vmatprep.subr.mxu0 0.0
      %288 = vmatpush1.msra.mxu0 0.0
      %289 = vmatprep.subr.mxu0 0.0
      %290 = vmatpush1.msra.mxu0 0.0
      %291 = vmatprep.subr.mxu0 0.0
      %292 = vmatpush1.msra.mxu0 0.0
      %293 = vmatprep.subr.mxu0 0.0
      %294 = vmatpush1.msra.mxu0 0.0
      %295 = vmatprep.subr.mxu0 0.0
      %296 = vmatpush1.msra.mxu0 0.0
      %297 = vmatprep.subr.mxu0 0.0
      %298 = vmatpush1.msra.mxu0 0.0
      %299 = vmatprep.subr.mxu0 0.0
      %300 = vmatpush1.msra.mxu0 0.0
      %301 = vmatprep.subr.mxu0 0.0
      %302 = vmatpush1.msra.mxu0 0.0
      %303 = vmatprep.subr.mxu0 0.0
      %304 = vmatpush1.msra.mxu0 0.0
      %305 = vmatprep.subr.mxu0 0.0
      %306 = vmatpush1.msra.mxu0 0.0
      %307 = vmatprep.subr.mxu0 0.0
      %308 = vmatpush1.msra.mxu0 0.0
      %309 = vmatprep.subr.mxu0 0.0
      %310 = vmatpush1.msra.mxu0 0.0
      %311 = vmatprep.mubr.f32.mxu0 0.0
      %312 = vmatmul.mubr.f32.gmra.mrb[0].mxu0 %v229
      %v313 = vpop.f32.mrb[0].mxu0
      %v314 = vadd.f32 0.0, %v313
      %v315 = vpop.f32.mrb[0].mxu0
      %316 = vmatprep.mubr.f32.mxu0 0.0
      %317 = vmatmul.mubr.f32.gmra.mrb[0].mxu0 %v230
      %v318 = vpop.f32.mrb[0].mxu0
      %v319 = vadd.f32 0.0, %v318
      %v320 = vpop.f32.mrb[0].mxu0
      %321 = vdwg.mxu0
      %322 = vst [vmem:[%s220] sm:$0xff] %v314
      %323 = vst [vmem:[%s220 + $0x8] sm:$0xff] %v319
      %v324 = vadd.f32 %v314, %v319
      %v325 = vrot.slane %v324, 4
      %v326 = vadd.f32 %v324, %v325
      %v327 = vrot.slane %v326, 2
      %v328 = vadd.f32 %v326, %v327
      %v329 = vrot.slane %v328, 1
      %v330 = vadd.f32 %v328, %v329
      %v331 = vmul.f32 %v314, %v314
      %v332 = vmul.f32 %v319, %v319
      %v333 = vadd.f32 %v331, %v332
      %v334 = vrot.slane %v333, 4
      %v335 = vadd.f32 %v333, %v334
      %v336 = vrot.slane %v335, 2
      %v337 = vadd.f32 %v335, %v336
      %v338 = vrot.slane %v337, 1
      %v339 = vadd.f32 %v337, %v338
      %vm340 = vcmask 1040384
      %v341 = vsel %vm340, %v330, %v339
      %342 = vst [vmem:[%s228] sm:$0x3] %v341
      %s343 = smul.u32 2, %s20
      %p344 = scmp.lt.s32.totalorder %s19, 1
      %s345 = scalar_select %p344, %s19, 1
      %p346 = scmp.lt.s32.totalorder %s343, 1
      %s347 = scalar_select %p346, %s343, 1
      %s348 = smul.addr %s345, 2
      %s349 = sadd.s32 %s347, %s348
      %s350 = smul.addr %s349, 8
      %s351 = scalar_lea.vmem %s2, %s350
      %p352 = scmp.lt.s32.totalorder %s19, 1
      %s353 = scalar_select %p352, %s19, 1
      %p354 = scmp.lt.s32.totalorder %s20, 0
      %s355 = scalar_select %p354, %s20, 0
      %s356 = sadd.s32 %s355, %s353
      %s357 = smul.addr %s356, 2
      %s358 = scalar_lea.vmem %s3, %s357
      // Predicated region
      $region29: #{resnext_bottleneck_forward.4} parent=27 // pred_check
        %p359 = pneg %p96
      $region30: #{resnext_bottleneck_forward.4} parent=27 // pred_check_branch
        %361 = sbr.rel (%p359) target = $region32
      $region31: #{resnext_bottleneck_forward.4} parent=27 // pred_region
        %s362 = smul.u32 2, %s20
      $region32: #{resnext_bottleneck_forward.4} parent=27 // pred_fallthru
        _
      // Predicated region
      $region33: #{resnext_bottleneck_forward.4} parent=27 // pred_check
        %p363 = pneg %p124
      $region34: #{resnext_bottleneck_forward.4} parent=27 // pred_check_branch
        %365 = sbr.rel (%p363) target = $region36
      $region35: #{resnext_bottleneck_forward.4} parent=27 // pred_region
        _
      $region36: #{resnext_bottleneck_forward.4} parent=27 // pred_fallthru
        _
    $region28: #{resnext_bottleneck_forward.4} parent=5 // pred_fallthru
      _
    %p366 = scmp.le.s32.totalorder 2, %s10
    // Predicated region
    $region37: #{resnext_bottleneck_forward.4} parent=5 // pred_check
      %p367 = pneg %p366
    $region38: #{resnext_bottleneck_forward.4} parent=5 // pred_check_branch
      %369 = sbr.rel (%p367) target = $region40
    $region39: #{resnext_bottleneck_forward.4} parent=5 // pred_region
      %s370 = ssub.s32 %s10, 2
      // Predicated region
      $region41: #{resnext_bottleneck_forward.4} parent=39 // pred_check
        %p371 = pneg %p102
      $region42: #{resnext_bottleneck_forward.4} parent=39 // pred_check_branch
        %373 = sbr.rel (%p371) target = $region44
      $region43: #{resnext_bottleneck_forward.4} parent=39 // pred_region
        %s374 = smul.u32 2, %s22
        %p375 = scmp.lt.s32.totalorder %s21, 1
        %s376 = scalar_select %p375, %s21, 1
        %p377 = scmp.lt.s32.totalorder %s374, 1
        %s378 = scalar_select %p377, %s374, 1
        %s379 = smul.addr %s376, 2
        %s380 = sadd.s32 %s378, %s379
        %s381 = smul.addr %s380, 8
        %s382 = scalar_lea.vmem %s2, %s381
      $region44: #{resnext_bottleneck_forward.4} parent=39 // pred_fallthru
        _
      // Predicated region
      $region45: #{resnext_bottleneck_forward.4} parent=39 // pred_check
        %p383 = pneg %p130
      $region46: #{resnext_bottleneck_forward.4} parent=39 // pred_check_branch
        %385 = sbr.rel (%p383) target = $region48
      $region47: #{resnext_bottleneck_forward.4} parent=39 // pred_region
        %p386 = scmp.lt.s32.totalorder %s21, 1
        %s387 = scalar_select %p386, %s21, 1
        %p388 = scmp.lt.s32.totalorder %s22, 0
        %s389 = scalar_select %p388, %s22, 0
        %s390 = sadd.s32 %s389, %s387
        %s391 = smul.addr %s390, 2
        %s392 = scalar_lea.vmem %s3, %s391
      $region48: #{resnext_bottleneck_forward.4} parent=39 // pred_fallthru
        _
    $region40: #{resnext_bottleneck_forward.4} parent=5 // pred_fallthru
      _
  $region6: #{resnext_bottleneck_forward.4} parent=0 // loop_footer
    %s14 = sadd.s32 1, %s10
  $region7: #{resnext_bottleneck_forward.4} parent=0 // loop_footer_branch
    %9 = sbr.rel target = $region3
  $region8: #{resnext_bottleneck_forward.4} parent=0 // loop_exit
    _

// kernel: resnext_bottleneck_forward.5
$region0: #{resnext_bottleneck_forward.5}
  #allocation0 [shape = 'u32[]', space=smem, size = 0x4, offset = 0x4, fixed_abs, tag = 'smem constant byte address 0x4 - core index']
  #allocation1 [shape = 'u32[144,128]{1,0:T(1,128)}', space=vmem, size = 0x12000, scoped, tag = 'internal scratch']
  #allocation2 [shape = 'f32[24,128]{1,0:T(8,128)}', space=vmem, size = 0x3000, scoped, tag = 'scratch operand']
  %s0 = inlined_call_operand.vmem [shape: f32[2,16,128], index: 0, kind: input, shape index: {}]
  %s1 = inlined_call_operand.vmem [shape: f32[1,128], index: 1, kind: input, shape index: {}]
  %s2 = inlined_call_operand.vmem [shape: f32[1,128], index: 2, kind: input, shape index: {}]
  %s3 = inlined_call_operand.vmem [shape: f32[3,128,128], index: 3, kind: input, shape index: {}]
  %s4 = inlined_call_operand.vmem [shape: f32[2,8,128], index: 4, kind: output, shape index: {0}]
  %s5 = inlined_call_operand.vmem [shape: f32[2,2,128], index: 5, kind: output, shape index: {1}]
  %6 = xla_tuple %s4, %s5
  %s7 = sld [smem:[#allocation0]]
  $region57: #{resnext_bottleneck_forward.5} parent=0
    _
  %s9 = ssub.s32 1, %s7
  %s10 = scalar_select 0, %s9, %s7
  loop: start=0, step=1, limit=4
  $region2: #{resnext_bottleneck_forward.5} parent=0 // loop_pre_header
    _
  $region3: #{resnext_bottleneck_forward.5} parent=0 // loop_header
    %s12 = sphi 0, %s16
    %p13 = scmp.ge.s32.totalorder %s12, 4
    %s22 = sphi 0, %s24
    %s25 = sphi 0, %s22
    %s26 = sphi 0, %s25
    %s42 = sphi 0, %s26
    %s46 = sphi 0, %s46
    %s48 = sphi 0, %s46
    %s49 = sphi 0, %s48
    %s63 = sphi 0, %s49
    %s67 = sphi 0, %s67
    %s69 = sphi 0, %s67
    %s70 = sphi 0, %s69
    %s84 = sphi 0, %s70
    %s88 = sphi 0, %s88
    %s90 = sphi 0, %s88
    %s91 = sphi 0, %s90
    %s105 = sphi 0, %s91
    %s111 = sphi 0, %s113
    %s114 = sphi 0, %s111
    %s115 = sphi 0, %s114
    %s131 = sphi 0, %s115
    %s137 = sphi 0, %s139
    %s140 = sphi 0, %s137
    %s141 = sphi 0, %s140
    %s157 = sphi 0, %s141
  $region4: #{resnext_bottleneck_forward.5} parent=0 // loop_header_branch
    %15 = sbr.rel (%p13) target = $region8
  $region5: #{resnext_bottleneck_forward.5} parent=0 // loop_body
    %s17 = ssub.s32 %s12, 1
    %s18 = ssub.s32 %s12, 2
    %s19 = sadd.s32 %s12, 1
    %s20 = ssub.s32 %s12, %s19
    %p21 = scmp.eq.s32.totalorder %s20, 0
    %s23 = sadd.s32 %s22, 1
    %s24 = scalar_select %p21, %s22, %s23
    %p27 = pneg %p21
    %p28 = scmp.eq.s32.totalorder %s12, 1
    %p29 = por %p27, %p28
    %p30 = scmp.ne.s32.totalorder %s22, %s25
    %p31 = scmp.eq.s32.totalorder %s12, 0
    %p32 = por %p30, %p31
    %p33 = scmp.ne.s32.totalorder %s22, %s25
    %p34 = scmp.eq.s32.totalorder %s17, 1
    %p35 = por %p33, %p34
    %p36 = scmp.ne.s32.totalorder %s25, %s26
    %p37 = scmp.eq.s32.totalorder %s17, 0
    %p38 = por %p36, %p37
    %p39 = scmp.ne.s32.totalorder %s25, %s26
    %p40 = scmp.eq.s32.totalorder %s18, 1
    %p41 = por %p39, %p40
    %p43 = scmp.ne.s32.totalorder %s26, %s42
    %p44 = scmp.eq.s32.totalorder %s18, 0
    %p45 = por %p43, %p44
    %s47 = sadd.s32 %s46, 1
    %p50 = scmp.eq.s32.totalorder %s12, 1
    %p51 = scmp.ne.s32.totalorder %s46, %s48
    %p52 = scmp.eq.s32.totalorder %s12, 0
    %p53 = por %p51, %p52
    %p54 = scmp.ne.s32.totalorder %s46, %s48
    %p55 = scmp.eq.s32.totalorder %s17, 1
    %p56 = por %p54, %p55
    %p57 = scmp.ne.s32.totalorder %s48, %s49
    %p58 = scmp.eq.s32.totalorder %s17, 0
    %p59 = por %p57, %p58
    %p60 = scmp.ne.s32.totalorder %s48, %s49
    %p61 = scmp.eq.s32.totalorder %s18, 1
    %p62 = por %p60, %p61
    %p64 = scmp.ne.s32.totalorder %s49, %s63
    %p65 = scmp.eq.s32.totalorder %s18, 0
    %p66 = por %p64, %p65
    %s68 = sadd.s32 %s67, 1
    %p71 = scmp.eq.s32.totalorder %s12, 1
    %p72 = scmp.ne.s32.totalorder %s67, %s69
    %p73 = scmp.eq.s32.totalorder %s12, 0
    %p74 = por %p72, %p73
    %p75 = scmp.ne.s32.totalorder %s67, %s69
    %p76 = scmp.eq.s32.totalorder %s17, 1
    %p77 = por %p75, %p76
    %p78 = scmp.ne.s32.totalorder %s69, %s70
    %p79 = scmp.eq.s32.totalorder %s17, 0
    %p80 = por %p78, %p79
    %p81 = scmp.ne.s32.totalorder %s69, %s70
    %p82 = scmp.eq.s32.totalorder %s18, 1
    %p83 = por %p81, %p82
    %p85 = scmp.ne.s32.totalorder %s70, %s84
    %p86 = scmp.eq.s32.totalorder %s18, 0
    %p87 = por %p85, %p86
    %s89 = sadd.s32 %s88, 1
    %p92 = scmp.eq.s32.totalorder %s12, 1
    %p93 = scmp.ne.s32.totalorder %s88, %s90
    %p94 = scmp.eq.s32.totalorder %s12, 0
    %p95 = por %p93, %p94
    %p96 = scmp.ne.s32.totalorder %s88, %s90
    %p97 = scmp.eq.s32.totalorder %s17, 1
    %p98 = por %p96, %p97
    %p99 = scmp.ne.s32.totalorder %s90, %s91
    %p100 = scmp.eq.s32.totalorder %s17, 0
    %p101 = por %p99, %p100
    %p102 = scmp.ne.s32.totalorder %s90, %s91
    %p103 = scmp.eq.s32.totalorder %s18, 1
    %p104 = por %p102, %p103
    %p106 = scmp.ne.s32.totalorder %s91, %s105
    %p107 = scmp.eq.s32.totalorder %s18, 0
    %p108 = por %p106, %p107
    %s109 = ssub.s32 %s12, %s19
    %p110 = scmp.eq.s32.totalorder %s109, 0
    %s112 = sadd.s32 %s111, 1
    %s113 = scalar_select %p110, %s111, %s112
    %p116 = pneg %p110
    %p117 = scmp.eq.s32.totalorder %s12, 1
    %p118 = por %p116, %p117
    %p119 = scmp.ne.s32.totalorder %s111, %s114
    %p120 = scmp.eq.s32.totalorder %s12, 0
    %p121 = por %p119, %p120
    %p122 = scmp.ne.s32.totalorder %s111, %s114
    %p123 = scmp.eq.s32.totalorder %s17, 1
    %p124 = por %p122, %p123
    %p125 = scmp.ne.s32.totalorder %s114, %s115
    %p126 = scmp.eq.s32.totalorder %s17, 0
    %p127 = por %p125, %p126
    %p128 = scmp.ne.s32.totalorder %s114, %s115
    %p129 = scmp.eq.s32.totalorder %s18, 1
    %p130 = por %p128, %p129
    %p132 = scmp.ne.s32.totalorder %s115, %s131
    %p133 = scmp.eq.s32.totalorder %s18, 0
    %p134 = por %p132, %p133
    %s135 = ssub.s32 %s12, %s19
    %p136 = scmp.eq.s32.totalorder %s135, 0
    %s138 = sadd.s32 %s137, 1
    %s139 = scalar_select %p136, %s137, %s138
    %p142 = pneg %p136
    %p143 = scmp.eq.s32.totalorder %s12, 1
    %p144 = por %p142, %p143
    %p145 = scmp.ne.s32.totalorder %s137, %s140
    %p146 = scmp.eq.s32.totalorder %s12, 0
    %p147 = por %p145, %p146
    %p148 = scmp.ne.s32.totalorder %s137, %s140
    %p149 = scmp.eq.s32.totalorder %s17, 1
    %p150 = por %p148, %p149
    %p151 = scmp.ne.s32.totalorder %s140, %s141
    %p152 = scmp.eq.s32.totalorder %s17, 0
    %p153 = por %p151, %p152
    %p154 = scmp.ne.s32.totalorder %s140, %s141
    %p155 = scmp.eq.s32.totalorder %s18, 1
    %p156 = por %p154, %p155
    %p158 = scmp.ne.s32.totalorder %s141, %s157
    %p159 = scmp.eq.s32.totalorder %s18, 0
    %p160 = por %p158, %p159
    %p161 = scmp.le.s32.totalorder 1, %s12
    %p162 = scmp.lt.s32.totalorder %s12, 3
    %p163 = pnand %p161, %p162
    %p164 = pneg %p163
    // Predicated region
    $region9: #{resnext_bottleneck_forward.5} parent=5 // pred_check
      _
    $region10: #{resnext_bottleneck_forward.5} parent=5 // pred_check_branch
      %166 = sbr.rel (%p163) target = $region12
    $region11: #{resnext_bottleneck_forward.5} parent=5 // pred_region
      %s167 = ssub.s32 %s12, 1
      // Predicated region
      $region13: #{resnext_bottleneck_forward.5} parent=11 // pred_check
        %p168 = pneg %p59
      $region14: #{resnext_bottleneck_forward.5} parent=11 // pred_check_branch
        %170 = sbr.rel (%p168) target = $region16
      $region15: #{resnext_bottleneck_forward.5} parent=11 // pred_region
        _
      $region16: #{resnext_bottleneck_forward.5} parent=11 // pred_fallthru
        _
      // Predicated region
      $region17: #{resnext_bottleneck_forward.5} parent=11 // pred_check
        %p171 = pneg %p80
      $region18: #{resnext_bottleneck_forward.5} parent=11 // pred_check_branch
        %173 = sbr.rel (%p171) target = $region20
      $region19: #{resnext_bottleneck_forward.5} parent=11 // pred_region
        _
      $region20: #{resnext_bottleneck_forward.5} parent=11 // pred_fallthru
        _
      // Predicated region
      $region21: #{resnext_bottleneck_forward.5} parent=11 // pred_check
        %p174 = pneg %p101
      $region22: #{resnext_bottleneck_forward.5} parent=11 // pred_check_branch
        %176 = sbr.rel (%p174) target = $region24
      $region23: #{resnext_bottleneck_forward.5} parent=11 // pred_region
        _
      $region24: #{resnext_bottleneck_forward.5} parent=11 // pred_fallthru
        _
    $region12: #{resnext_bottleneck_forward.5} parent=5 // pred_fallthru
      _
    %p177 = scmp.lt.s32.totalorder %s12, 2
    // Predicated region
    $region25: #{resnext_bottleneck_forward.5} parent=5 // pred_check
      %p178 = pneg %p177
    $region26: #{resnext_bottleneck_forward.5} parent=5 // pred_check_branch
      %180 = sbr.rel (%p178) target = $region28
    $region27: #{resnext_bottleneck_forward.5} parent=5 // pred_region
      // Predicated region
      $region29: #{resnext_bottleneck_forward.5} parent=27 // pred_check
        %p181 = pneg %p32
      $region30: #{resnext_bottleneck_forward.5} parent=27 // pred_check_branch
        %183 = sbr.rel (%p181) target = $region32
      $region31: #{resnext_bottleneck_forward.5} parent=27 // pred_region
        %p184 = scmp.lt.s32.totalorder %s12, 1
        %s185 = scalar_select %p184, %s12, 1
        %s186 = smul.addr %s185, 2
        %s187 = smul.addr %s186, 8
        %s188 = scalar_lea.vmem %s0, %s187
      $region32: #{resnext_bottleneck_forward.5} parent=27 // pred_fallthru
        _
    $region28: #{resnext_bottleneck_forward.5} parent=5 // pred_fallthru
      _
    %p189 = scmp.le.s32.totalorder 1, %s12
    %p190 = scmp.lt.s32.totalorder %s12, 3
    %p191 = pnand %p189, %p190
    %p192 = pneg %p191
    // Predicated region
    $region33: #{resnext_bottleneck_forward.5} parent=5 // pred_check
      _
    $region34: #{resnext_bottleneck_forward.5} parent=5 // pred_check_branch
      %194 = sbr.rel (%p191) target = $region36
    $region35: #{resnext_bottleneck_forward.5} parent=5 // pred_region
      %s195 = ssub.s32 %s12, 1
      %p196 = scmp.lt.s32.totalorder %s17, 1
      %s197 = scalar_select %p196, %s17, 1
      %s198 = smul.addr %s197, 2
      %s199 = smul.addr %s198, 8
      %s200 = scalar_lea.vmem %s0, %s199
      %p201 = pneg %p38
      %p202 = pneg %p35
      %p203 = pneg %p59
      %p204 = pneg %p56
      %p205 = pneg %p80
      %p206 = pneg %p77
      %p207 = pneg %p101
      %p208 = pneg %p98
      %p209 = pneg %p127
      %p210 = pneg %p124
      %p211 = scmp.lt.s32.totalorder %s17, 1
      %s212 = scalar_select %p211, %s17, 1
      %s213 = smul.addr %s212, 8
      %s214 = scalar_lea.vmem %s4, %s213
      %p215 = pneg %p153
      %p216 = pneg %p150
      %p217 = scmp.lt.s32.totalorder %s17, 1
      %s218 = scalar_select %p217, %s17, 1
      %s219 = smul.addr %s218, 2
      %s220 = scalar_lea.vmem %s5, %s219
      %p221 = scmp.lt.s32.totalorder %s17, 1
      %s222 = scalar_select %p221, %s17, 1
      %s223 = smul.addr %s222, 2
      %s224 = smul.addr %s223, 8
      %s225 = scalar_lea.vmem %s0, %s224
      %p226 = scmp.lt.s32.totalorder %s17, 1
      %s227 = scalar_select %p226, %s17, 1
      %s228 = smul.addr %s227, 8
      %s229 = scalar_lea.vmem %s4, %s228
      %p230 = scmp.lt.s32.totalorder %s17, 1
      %s231 = scalar_select %p230, %s17, 1
      %s232 = smul.addr %s231, 2
      %s233 = scalar_lea.vmem %s5, %s232
      %v234 = vld [vmem:[%s225] sm:$0xff]
      %v235 = vld [vmem:[%s225 + $0x8] sm:$0xff]
      %v236 = vld [vmem:[%s1] sm:$0x1]
      %v238 = vlaneseq
      %v239 = vshrl.u32 %v238, 7
      %v240 = vsub.s32 0, %v239
      %v241 = vrot.slane %v236, %v240
      %v243 = vmul.f32 %v234, %v241
      %v244 = vmul.f32 %v235, %v241
      %v245 = vld [vmem:[%s2] sm:$0x1]
      %v247 = vlaneseq
      %v248 = vshrl.u32 %v247, 7
      %v249 = vsub.s32 0, %v248
      %v250 = vrot.slane %v245, %v249
      %v252 = vadd.f32 %v243, %v250
      %v253 = vadd.f32 %v244, %v250
      %v254 = vmax.f32 %v252, 0.0
      %v255 = vmax.f32 %v253, 0.0
      %256 = vst [vmem:[#allocation2] sm:$0xff] 0.0
      %257 = vst [vmem:[#allocation2 + $0x8] sm:$0xff] 0.0
      %258 = vst [vmem:[#allocation2 + $0x10] sm:$0xff] 0.0
      %259 = vst [vmem:[#allocation2 + $0x1] sm:$0xff] %v254
      %260 = vst [vmem:[#allocation2 + $0x9] sm:$0xff] %v255
      %v261 = vld [vmem:[#allocation2] ss:$2 sm:$0xff]
      %v262 = vld [vmem:[%s3] sm:$0xff]
      %v263 = vld [vmem:[%s3 + $0x8] sm:$0xff]
      %v264 = vld [vmem:[%s3 + $0x10] sm:$0xff]
      %v265 = vld [vmem:[%s3 + $0x18] sm:$0xff]
      %v266 = vld [vmem:[%s3 + $0x20] sm:$0xff]
      %v267 = vld [vmem:[%s3 + $0x28] sm:$0xff]
      %v268 = vld [vmem:[%s3 + $0x30] sm:$0xff]
      %v269 = vld [vmem:[%s3 + $0x38] sm:$0xff]
      %v270 = vld [vmem:[%s3 + $0x40] sm:$0xff]
      %v271 = vld [vmem:[%s3 + $0x48] sm:$0xff]
      %v272 = vld [vmem:[%s3 + $0x50] sm:$0xff]
      %v273 = vld [vmem:[%s3 + $0x58] sm:$0xff]
      %v274 = vld [vmem:[%s3 + $0x60] sm:$0xff]
      %v275 = vld [vmem:[%s3 + $0x68] sm:$0xff]
      %v276 = vld [vmem:[%s3 + $0x70] sm:$0xff]
      %v277 = vld [vmem:[%s3 + $0x78] sm:$0xff]
      %s278 = scalar_lea.vmem [#allocation2], 1
      %v279 = vld [vmem:[%s278] ss:$2 sm:$0xff]
      %s280 = scalar_lea.vmem %s3, 128
      %v281 = vld [vmem:[%s280] sm:$0xff]
      %v282 = vld [vmem:[%s280 + $0x8] sm:$0xff]
      %v283 = vld [vmem:[%s280 + $0x10] sm:$0xff]
      %v284 = vld [vmem:[%s280 + $0x18] sm:$0xff]
      %v285 = vld [vmem:[%s280 + $0x20] sm:$0xff]
      %v286 = vld [vmem:[%s280 + $0x28] sm:$0xff]
      %v287 = vld [vmem:[%s280 + $0x30] sm:$0xff]
      %v288 = vld [vmem:[%s280 + $0x38] sm:$0xff]
      %v289 = vld [vmem:[%s280 + $0x40] sm:$0xff]
      %v290 = vld [vmem:[%s280 + $0x48] sm:$0xff]
      %v291 = vld [vmem:[%s280 + $0x50] sm:$0xff]
      %v292 = vld [vmem:[%s280 + $0x58] sm:$0xff]
      %v293 = vld [vmem:[%s280 + $0x60] sm:$0xff]
      %v294 = vld [vmem:[%s280 + $0x68] sm:$0xff]
      %v295 = vld [vmem:[%s280 + $0x70] sm:$0xff]
      %v296 = vld [vmem:[%s280 + $0x78] sm:$0xff]
      %297 = vmatprep.subr.mxu0 0.0
      %298 = vmatpush1.msra.mxu0 %v281
      %299 = vmatprep.subr.mxu0 0.0
      %300 = vmatpush1.msra.mxu0 %v282
      %301 = vmatprep.subr.mxu0 0.0
      %302 = vmatpush1.msra.mxu0 %v283
      %303 = vmatprep.subr.mxu0 0.0
      %304 = vmatpush1.msra.mxu0 %v284
      %305 = vmatprep.subr.mxu0 0.0
      %306 = vmatpush1.msra.mxu0 %v285
      %307 = vmatprep.subr.mxu0 0.0
      %308 = vmatpush1.msra.mxu0 %v286
      %309 = vmatprep.subr.mxu0 0.0
      %310 = vmatpush1.msra.mxu0 %v287
      %311 = vmatprep.subr.mxu0 0.0
      %312 = vmatpush1.msra.mxu0 %v288
      %313 = vmatprep.subr.mxu0 0.0
      %314 = vmatpush1.msra.mxu0 %v289
      %315 = vmatprep.subr.mxu0 0.0
      %316 = vmatpush1.msra.mxu0 %v290
      %317 = vmatprep.subr.mxu0 0.0
      %318 = vmatpush1.msra.mxu0 %v291
      %319 = vmatprep.subr.mxu0 0.0
      %320 = vmatpush1.msra.mxu0 %v292
      %321 = vmatprep.subr.mxu0 0.0
      %322 = vmatpush1.msra.mxu0 %v293
      %323 = vmatprep.subr.mxu0 0.0
      %324 = vmatpush1.msra.mxu0 %v294
      %325 = vmatprep.subr.mxu0 0.0
      %326 = vmatpush1.msra.mxu0 %v295
      %327 = vmatprep.subr.mxu0 0.0
      %328 = vmatpush1.msra.mxu0 %v296
      %329 = vmatprep.subr.mxu0 0.0
      %330 = vmatpush1.msra.mxu0 0.0
      %331 = vmatprep.subr.mxu0 0.0
      %332 = vmatpush1.msra.mxu0 0.0
      %333 = vmatprep.subr.mxu0 0.0
      %334 = vmatpush1.msra.mxu0 0.0
      %335 = vmatprep.subr.mxu0 0.0
      %336 = vmatpush1.msra.mxu0 0.0
      %337 = vmatprep.subr.mxu0 0.0
      %338 = vmatpush1.msra.mxu0 0.0
      %339 = vmatprep.subr.mxu0 0.0
      %340 = vmatpush1.msra.mxu0 0.0
      %341 = vmatprep.subr.mxu0 0.0
      %342 = vmatpush1.msra.mxu0 0.0
      %343 = vmatprep.subr.mxu0 0.0
      %344 = vmatpush1.msra.mxu0 0.0
      %345 = vmatprep.subr.mxu0 0.0
      %346 = vmatpush1.msra.mxu0 0.0
      %347 = vmatprep.subr.mxu0 0.0
      %348 = vmatpush1.msra.mxu0 0.0
      %349 = vmatprep.subr.mxu0 0.0
      %350 = vmatpush1.msra.mxu0 0.0
      %351 = vmatprep.subr.mxu0 0.0
      %352 = vmatpush1.msra.mxu0 0.0
      %353 = vmatprep.subr.mxu0 0.0
      %354 = vmatpush1.msra.mxu0 0.0
      %355 = vmatprep.subr.mxu0 0.0
      %356 = vmatpush1.msra.mxu0 0.0
      %357 = vmatprep.subr.mxu0 0.0
      %358 = vmatpush1.msra.mxu0 0.0
      %359 = vmatprep.subr.mxu0 0.0
      %360 = vmatpush1.msra.mxu0 0.0
      %361 = vmatprep.mubr.f32.mxu0 0.0
      %362 = vmatmul.mubr.f32.gmra.mrb[0].mxu0 %v279
      %v363 = vpop.f32.mrb[0].mxu0
      %v364 = vadd.f32 0.0, %v363
      %v365 = vpop.f32.mrb[0].mxu0
      %366 = vdwg.mxu0
      %367 = vmatprep.subr.mxu0 0.0
      %368 = vmatpush1.msra.mxu0 %v262
      %369 = vmatprep.subr.mxu0 0.0
      %370 = vmatpush1.msra.mxu0 %v263
      %371 = vmatprep.subr.mxu0 0.0
      %372 = vmatpush1.msra.mxu0 %v264
      %373 = vmatprep.subr.mxu0 0.0
      %374 = vmatpush1.msra.mxu0 %v265
      %375 = vmatprep.subr.mxu0 0.0
      %376 = vmatpush1.msra.mxu0 %v266
      %377 = vmatprep.subr.mxu0 0.0
      %378 = vmatpush1.msra.mxu0 %v267
      %379 = vmatprep.subr.mxu0 0.0
      %380 = vmatpush1.msra.mxu0 %v268
      %381 = vmatprep.subr.mxu0 0.0
      %382 = vmatpush1.msra.mxu0 %v269
      %383 = vmatprep.subr.mxu0 0.0
      %384 = vmatpush1.msra.mxu0 %v270
      %385 = vmatprep.subr.mxu0 0.0
      %386 = vmatpush1.msra.mxu0 %v271
      %387 = vmatprep.subr.mxu0 0.0
      %388 = vmatpush1.msra.mxu0 %v272
      %389 = vmatprep.subr.mxu0 0.0
      %390 = vmatpush1.msra.mxu0 %v273
      %391 = vmatprep.subr.mxu0 0.0
      %392 = vmatpush1.msra.mxu0 %v274
      %393 = vmatprep.subr.mxu0 0.0
      %394 = vmatpush1.msra.mxu0 %v275
      %395 = vmatprep.subr.mxu0 0.0
      %396 = vmatpush1.msra.mxu0 %v276
      %397 = vmatprep.subr.mxu0 0.0
      %398 = vmatpush1.msra.mxu0 %v277
      %399 = vmatprep.subr.mxu0 0.0
      %400 = vmatpush1.msra.mxu0 0.0
      %401 = vmatprep.subr.mxu0 0.0
      %402 = vmatpush1.msra.mxu0 0.0
      %403 = vmatprep.subr.mxu0 0.0
      %404 = vmatpush1.msra.mxu0 0.0
      %405 = vmatprep.subr.mxu0 0.0
      %406 = vmatpush1.msra.mxu0 0.0
      %407 = vmatprep.subr.mxu0 0.0
      %408 = vmatpush1.msra.mxu0 0.0
      %409 = vmatprep.subr.mxu0 0.0
      %410 = vmatpush1.msra.mxu0 0.0
      %411 = vmatprep.subr.mxu0 0.0
      %412 = vmatpush1.msra.mxu0 0.0
      %413 = vmatprep.subr.mxu0 0.0
      %414 = vmatpush1.msra.mxu0 0.0
      %415 = vmatprep.subr.mxu0 0.0
      %416 = vmatpush1.msra.mxu0 0.0
      %417 = vmatprep.subr.mxu0 0.0
      %418 = vmatpush1.msra.mxu0 0.0
      %419 = vmatprep.subr.mxu0 0.0
      %420 = vmatpush1.msra.mxu0 0.0
      %421 = vmatprep.subr.mxu0 0.0
      %422 = vmatpush1.msra.mxu0 0.0
      %423 = vmatprep.subr.mxu0 0.0
      %424 = vmatpush1.msra.mxu0 0.0
      %425 = vmatprep.subr.mxu0 0.0
      %426 = vmatpush1.msra.mxu0 0.0
      %427 = vmatprep.subr.mxu0 0.0
      %428 = vmatpush1.msra.mxu0 0.0
      %429 = vmatprep.subr.mxu0 0.0
      %430 = vmatpush1.msra.mxu0 0.0
      %431 = vmatprep.mubr.f32.mxu0 0.0
      %432 = vmatmul.mubr.f32.gmra.mrb[0].mxu0 %v261
      %v433 = vpop.f32.mrb[0].mxu0
      %v434 = vadd.f32 %v364, %v433
      %v435 = vpop.f32.mrb[0].mxu0
      %436 = vdwg.mxu0
      %s437 = scalar_lea.vmem [#allocation2], 2
      %v438 = vld [vmem:[%s437] ss:$2 sm:$0xff]
      %s439 = scalar_lea.vmem %s3, 256
      %v440 = vld [vmem:[%s439] sm:$0xff]
      %v441 = vld [vmem:[%s439 + $0x8] sm:$0xff]
      %v442 = vld [vmem:[%s439 + $0x10] sm:$0xff]
      %v443 = vld [vmem:[%s439 + $0x18] sm:$0xff]
      %v444 = vld [vmem:[%s439 + $0x20] sm:$0xff]
      %v445 = vld [vmem:[%s439 + $0x28] sm:$0xff]
      %v446 = vld [vmem:[%s439 + $0x30] sm:$0xff]
      %v447 = vld [vmem:[%s439 + $0x38] sm:$0xff]
      %v448 = vld [vmem:[%s439 + $0x40] sm:$0xff]
      %v449 = vld [vmem:[%s439 + $0x48] sm:$0xff]
      %v450 = vld [vmem:[%s439 + $0x50] sm:$0xff]
      %v451 = vld [vmem:[%s439 + $0x58] sm:$0xff]
      %v452 = vld [vmem:[%s439 + $0x60] sm:$0xff]
      %v453 = vld [vmem:[%s439 + $0x68] sm:$0xff]
      %v454 = vld [vmem:[%s439 + $0x70] sm:$0xff]
      %v455 = vld [vmem:[%s439 + $0x78] sm:$0xff]
      %456 = vmatprep.subr.mxu0 0.0
      %457 = vmatpush1.msra.mxu0 %v440
      %458 = vmatprep.subr.mxu0 0.0
      %459 = vmatpush1.msra.mxu0 %v441
      %460 = vmatprep.subr.mxu0 0.0
      %461 = vmatpush1.msra.mxu0 %v442
      %462 = vmatprep.subr.mxu0 0.0
      %463 = vmatpush1.msra.mxu0 %v443
      %464 = vmatprep.subr.mxu0 0.0
      %465 = vmatpush1.msra.mxu0 %v444
      %466 = vmatprep.subr.mxu0 0.0
      %467 = vmatpush1.msra.mxu0 %v445
      %468 = vmatprep.subr.mxu0 0.0
      %469 = vmatpush1.msra.mxu0 %v446
      %470 = vmatprep.subr.mxu0 0.0
      %471 = vmatpush1.msra.mxu0 %v447
      %472 = vmatprep.subr.mxu0 0.0
      %473 = vmatpush1.msra.mxu0 %v448
      %474 = vmatprep.subr.mxu0 0.0
      %475 = vmatpush1.msra.mxu0 %v449
      %476 = vmatprep.subr.mxu0 0.0
      %477 = vmatpush1.msra.mxu0 %v450
      %478 = vmatprep.subr.mxu0 0.0
      %479 = vmatpush1.msra.mxu0 %v451
      %480 = vmatprep.subr.mxu0 0.0
      %481 = vmatpush1.msra.mxu0 %v452
      %482 = vmatprep.subr.mxu0 0.0
      %483 = vmatpush1.msra.mxu0 %v453
      %484 = vmatprep.subr.mxu0 0.0
      %485 = vmatpush1.msra.mxu0 %v454
      %486 = vmatprep.subr.mxu0 0.0
      %487 = vmatpush1.msra.mxu0 %v455
      %488 = vmatprep.subr.mxu0 0.0
      %489 = vmatpush1.msra.mxu0 0.0
      %490 = vmatprep.subr.mxu0 0.0
      %491 = vmatpush1.msra.mxu0 0.0
      %492 = vmatprep.subr.mxu0 0.0
      %493 = vmatpush1.msra.mxu0 0.0
      %494 = vmatprep.subr.mxu0 0.0
      %495 = vmatpush1.msra.mxu0 0.0
      %496 = vmatprep.subr.mxu0 0.0
      %497 = vmatpush1.msra.mxu0 0.0
      %498 = vmatprep.subr.mxu0 0.0
      %499 = vmatpush1.msra.mxu0 0.0
      %500 = vmatprep.subr.mxu0 0.0
      %501 = vmatpush1.msra.mxu0 0.0
      %502 = vmatprep.subr.mxu0 0.0
      %503 = vmatpush1.msra.mxu0 0.0
      %504 = vmatprep.subr.mxu0 0.0
      %505 = vmatpush1.msra.mxu0 0.0
      %506 = vmatprep.subr.mxu0 0.0
      %507 = vmatpush1.msra.mxu0 0.0
      %508 = vmatprep.subr.mxu0 0.0
      %509 = vmatpush1.msra.mxu0 0.0
      %510 = vmatprep.subr.mxu0 0.0
      %511 = vmatpush1.msra.mxu0 0.0
      %512 = vmatprep.subr.mxu0 0.0
      %513 = vmatpush1.msra.mxu0 0.0
      %514 = vmatprep.subr.mxu0 0.0
      %515 = vmatpush1.msra.mxu0 0.0
      %516 = vmatprep.subr.mxu0 0.0
      %517 = vmatpush1.msra.mxu0 0.0
      %518 = vmatprep.subr.mxu0 0.0
      %519 = vmatpush1.msra.mxu0 0.0
      %520 = vmatprep.mubr.f32.mxu0 0.0
      %521 = vmatmul.mubr.f32.gmra.mrb[0].mxu0 %v438
      %v522 = vpop.f32.mrb[0].mxu0
      %v523 = vadd.f32 0.0, %v522
      %v524 = vpop.f32.mrb[0].mxu0
      %525 = vdwg.mxu0
      %v526 = vadd.f32 %v434, %v523
      %v527 = vrot.slane %v526, 4
      %v528 = vadd.f32 %v526, %v527
      %v529 = vrot.slane %v528, 2
      %v530 = vadd.f32 %v528, %v529
      %v531 = vrot.slane %v530, 1
      %v532 = vadd.f32 %v530, %v531
      %v533 = vmul.f32 %v526, %v526
      %v534 = vrot.slane %v533, 4
      %v535 = vadd.f32 %v533, %v534
      %v536 = vrot.slane %v535, 2
      %v537 = vadd.f32 %v535, %v536
      %v538 = vrot.slane %v537, 1
      %v539 = vadd.f32 %v537, %v538
      %vm540 = vcmask 1040384
      %v541 = vsel %vm540, %v532, %v539
      %542 = vst [vmem:[%s233] sm:$0x3] %v541
      %543 = vst [vmem:[%s229] sm:$0xff] %v526
      %p544 = scmp.lt.s32.totalorder %s17, 1
      %s545 = scalar_select %p544, %s17, 1
      %s546 = smul.addr %s545, 8
      %s547 = scalar_lea.vmem %s4, %s546
      %p548 = scmp.lt.s32.totalorder %s17, 1
      %s549 = scalar_select %p548, %s17, 1
      %s550 = smul.addr %s549, 2
      %s551 = scalar_lea.vmem %s5, %s550
      // Predicated region
      $region37: #{resnext_bottleneck_forward.5} parent=35 // pred_check
        %p552 = pneg %p124
      $region38: #{resnext_bottleneck_forward.5} parent=35 // pred_check_branch
        %554 = sbr.rel (%p552) target = $region40
      $region39: #{resnext_bottleneck_forward.5} parent=35 // pred_region
        _
      $region40: #{resnext_bottleneck_forward.5} parent=35 // pred_fallthru
        _
      // Predicated region
      $region41: #{resnext_bottleneck_forward.5} parent=35 // pred_check
        %p555 = pneg %p150
      $region42: #{resnext_bottleneck_forward.5} parent=35 // pred_check_branch
        %557 = sbr.rel (%p555) target = $region44
      $region43: #{resnext_bottleneck_forward.5} parent=35 // pred_region
        _
      $region44: #{resnext_bottleneck_forward.5} parent=35 // pred_fallthru
        _
    $region36: #{resnext_bottleneck_forward.5} parent=5 // pred_fallthru
      _
    %p558 = scmp.le.s32.totalorder 2, %s12
    // Predicated region
    $region45: #{resnext_bottleneck_forward.5} parent=5 // pred_check
      %p559 = pneg %p558
    $region46: #{resnext_bottleneck_forward.5} parent=5 // pred_check_branch
      %561 = sbr.rel (%p559) target = $region48
    $region47: #{resnext_bottleneck_forward.5} parent=5 // pred_region
      %s562 = ssub.s32 %s12, 2
      // Predicated region
      $region49: #{resnext_bottleneck_forward.5} parent=47 // pred_check
        %p563 = pneg %p130
      $region50: #{resnext_bottleneck_forward.5} parent=47 // pred_check_branch
        %565 = sbr.rel (%p563) target = $region52
      $region51: #{resnext_bottleneck_forward.5} parent=47 // pred_region
        %p566 = scmp.lt.s32.totalorder %s18, 1
        %s567 = scalar_select %p566, %s18, 1
        %s568 = smul.addr %s567, 8
        %s569 = scalar_lea.vmem %s4, %s568
      $region52: #{resnext_bottleneck_forward.5} parent=47 // pred_fallthru
        _
      // Predicated region
      $region53: #{resnext_bottleneck_forward.5} parent=47 // pred_check
        %p570 = pneg %p156
      $region54: #{resnext_bottleneck_forward.5} parent=47 // pred_check_branch
        %572 = sbr.rel (%p570) target = $region56
      $region55: #{resnext_bottleneck_forward.5} parent=47 // pred_region
        %p573 = scmp.lt.s32.totalorder %s18, 1
        %s574 = scalar_select %p573, %s18, 1
        %s575 = smul.addr %s574, 2
        %s576 = scalar_lea.vmem %s5, %s575
      $region56: #{resnext_bottleneck_forward.5} parent=47 // pred_fallthru
        _
    $region48: #{resnext_bottleneck_forward.5} parent=5 // pred_fallthru
      _
  $region6: #{resnext_bottleneck_forward.5} parent=0 // loop_footer
    %s16 = sadd.s32 1, %s12
  $region7: #{resnext_bottleneck_forward.5} parent=0 // loop_footer_branch
    %11 = sbr.rel target = $region3
  $region8: #{resnext_bottleneck_forward.5} parent=0 // loop_exit
    _

// kernel: resnext_bottleneck_forward.7
$region0: #{resnext_bottleneck_forward.7}
  #allocation0 [shape = 'u32[]', space=smem, size = 0x4, offset = 0x4, fixed_abs, tag = 'smem constant byte address 0x4 - core index']
  #allocation1 [shape = 'u32[144,128]{1,0:T(1,128)}', space=vmem, size = 0x12000, scoped, tag = 'internal scratch']
  %s0 = inlined_call_operand.vmem [shape: f32[2,8,128], index: 0, kind: input, shape index: {}]
  %s1 = inlined_call_operand.vmem [shape: f32[2,8,128], index: 1, kind: input, shape index: {}]
  %s2 = inlined_call_operand.vmem [shape: f32[1,128], index: 2, kind: input, shape index: {}]
  %s3 = inlined_call_operand.vmem [shape: f32[1,128], index: 3, kind: input, shape index: {}]
  %s4 = inlined_call_operand.vmem [shape: f32[1,128], index: 4, kind: input, shape index: {}]
  %s5 = inlined_call_operand.vmem [shape: f32[1,128], index: 5, kind: input, shape index: {}]
  %s6 = inlined_call_operand.vmem [shape: f32[2,8,128], index: 6, kind: output, shape index: {}]
  %s7 = sld [smem:[#allocation0]]
  $region57: #{resnext_bottleneck_forward.7} parent=0
    _
  %s9 = ssub.s32 1, %s7
  %s10 = scalar_select 0, %s9, %s7
  loop: start=0, step=1, limit=4
  $region2: #{resnext_bottleneck_forward.7} parent=0 // loop_pre_header
    _
  $region3: #{resnext_bottleneck_forward.7} parent=0 // loop_header
    %s12 = sphi 0, %s16
    %p13 = scmp.ge.s32.totalorder %s12, 4
    %s19 = sphi 0, %s31
    %s20 = sphi 0, %s27
    %s21 = sphi 0, %s19
    %s22 = sphi 0, %s20
    %s23 = sphi 0, %s21
    %s24 = sphi 0, %s22
    %s36 = sphi 0, %s38
    %s39 = sphi 0, %s36
    %s40 = sphi 0, %s39
    %s56 = sphi 0, %s40
    %s64 = sphi 0, %s66
    %s67 = sphi 0, %s64
    %s68 = sphi 0, %s67
    %s84 = sphi 0, %s68
    %s88 = sphi 0, %s88
    %s90 = sphi 0, %s88
    %s91 = sphi 0, %s90
    %s105 = sphi 0, %s91
    %s109 = sphi 0, %s109
    %s111 = sphi 0, %s109
    %s112 = sphi 0, %s111
    %s126 = sphi 0, %s112
    %s130 = sphi 0, %s130
    %s132 = sphi 0, %s130
    %s133 = sphi 0, %s132
    %s147 = sphi 0, %s133
    %s151 = sphi 0, %s151
    %s153 = sphi 0, %s151
    %s154 = sphi 0, %s153
    %s168 = sphi 0, %s154
    %s176 = sphi 0, %s178
    %s179 = sphi 0, %s176
    %s180 = sphi 0, %s179
    %s196 = sphi 0, %s180
  $region4: #{resnext_bottleneck_forward.7} parent=0 // loop_header_branch
    %15 = sbr.rel (%p13) target = $region8
  $region5: #{resnext_bottleneck_forward.7} parent=0 // loop_body
    %s17 = ssub.s32 %s12, 1
    %s18 = ssub.s32 %s12, 2
    %s25 = sadd.s32 1, %s20
    %p26 = scmp.ge.s32.totalorder %s25, 1
    %s27 = scalar_select %p26, 0, %s25
    %s28 = sadd.s32 1, %s19
    %s29 = scalar_select %p26, %s28, %s19
    %p30 = scmp.ge.s32.totalorder %s29, 2
    %s31 = scalar_select %p30, 0, %s29
    %s32 = ssub.s32 %s19, %s31
    %s33 = ssub.s32 %s20, %s27
    %s34 = sor.u32 %s32, %s33
    %p35 = scmp.eq.s32.totalorder %s34, 0
    %s37 = sadd.s32 %s36, 1
    %s38 = scalar_select %p35, %s36, %s37
    %p41 = pneg %p35
    %p42 = scmp.eq.s32.totalorder %s12, 1
    %p43 = por %p41, %p42
    %p44 = scmp.ne.s32.totalorder %s36, %s39
    %p45 = scmp.eq.s32.totalorder %s12, 0
    %p46 = por %p44, %p45
    %p47 = scmp.ne.s32.totalorder %s36, %s39
    %p48 = scmp.eq.s32.totalorder %s17, 1
    %p49 = por %p47, %p48
    %p50 = scmp.ne.s32.totalorder %s39, %s40
    %p51 = scmp.eq.s32.totalorder %s17, 0
    %p52 = por %p50, %p51
    %p53 = scmp.ne.s32.totalorder %s39, %s40
    %p54 = scmp.eq.s32.totalorder %s18, 1
    %p55 = por %p53, %p54
    %p57 = scmp.ne.s32.totalorder %s40, %s56
    %p58 = scmp.eq.s32.totalorder %s18, 0
    %p59 = por %p57, %p58
    %s60 = ssub.s32 %s19, %s31
    %s61 = ssub.s32 %s20, %s27
    %s62 = sor.u32 %s60, %s61
    %p63 = scmp.eq.s32.totalorder %s62, 0
    %s65 = sadd.s32 %s64, 1
    %s66 = scalar_select %p63, %s64, %s65
    %p69 = pneg %p63
    %p70 = scmp.eq.s32.totalorder %s12, 1
    %p71 = por %p69, %p70
    %p72 = scmp.ne.s32.totalorder %s64, %s67
    %p73 = scmp.eq.s32.totalorder %s12, 0
    %p74 = por %p72, %p73
    %p75 = scmp.ne.s32.totalorder %s64, %s67
    %p76 = scmp.eq.s32.totalorder %s17, 1
    %p77 = por %p75, %p76
    %p78 = scmp.ne.s32.totalorder %s67, %s68
    %p79 = scmp.eq.s32.totalorder %s17, 0
    %p80 = por %p78, %p79
    %p81 = scmp.ne.s32.totalorder %s67, %s68
    %p82 = scmp.eq.s32.totalorder %s18, 1
    %p83 = por %p81, %p82
    %p85 = scmp.ne.s32.totalorder %s68, %s84
    %p86 = scmp.eq.s32.totalorder %s18, 0
    %p87 = por %p85, %p86
    %s89 = sadd.s32 %s88, 1
    %p92 = scmp.eq.s32.totalorder %s12, 1
    %p93 = scmp.ne.s32.totalorder %s88, %s90
    %p94 = scmp.eq.s32.totalorder %s12, 0
    %p95 = por %p93, %p94
    %p96 = scmp.ne.s32.totalorder %s88, %s90
    %p97 = scmp.eq.s32.totalorder %s17, 1
    %p98 = por %p96, %p97
    %p99 = scmp.ne.s32.totalorder %s90, %s91
    %p100 = scmp.eq.s32.totalorder %s17, 0
    %p101 = por %p99, %p100
    %p102 = scmp.ne.s32.totalorder %s90, %s91
    %p103 = scmp.eq.s32.totalorder %s18, 1
    %p104 = por %p102, %p103
    %p106 = scmp.ne.s32.totalorder %s91, %s105
    %p107 = scmp.eq.s32.totalorder %s18, 0
    %p108 = por %p106, %p107
    %s110 = sadd.s32 %s109, 1
    %p113 = scmp.eq.s32.totalorder %s12, 1
    %p114 = scmp.ne.s32.totalorder %s109, %s111
    %p115 = scmp.eq.s32.totalorder %s12, 0
    %p116 = por %p114, %p115
    %p117 = scmp.ne.s32.totalorder %s109, %s111
    %p118 = scmp.eq.s32.totalorder %s17, 1
    %p119 = por %p117, %p118
    %p120 = scmp.ne.s32.totalorder %s111, %s112
    %p121 = scmp.eq.s32.totalorder %s17, 0
    %p122 = por %p120, %p121
    %p123 = scmp.ne.s32.totalorder %s111, %s112
    %p124 = scmp.eq.s32.totalorder %s18, 1
    %p125 = por %p123, %p124
    %p127 = scmp.ne.s32.totalorder %s112, %s126
    %p128 = scmp.eq.s32.totalorder %s18, 0
    %p129 = por %p127, %p128
    %s131 = sadd.s32 %s130, 1
    %p134 = scmp.eq.s32.totalorder %s12, 1
    %p135 = scmp.ne.s32.totalorder %s130, %s132
    %p136 = scmp.eq.s32.totalorder %s12, 0
    %p137 = por %p135, %p136
    %p138 = scmp.ne.s32.totalorder %s130, %s132
    %p139 = scmp.eq.s32.totalorder %s17, 1
    %p140 = por %p138, %p139
    %p141 = scmp.ne.s32.totalorder %s132, %s133
    %p142 = scmp.eq.s32.totalorder %s17, 0
    %p143 = por %p141, %p142
    %p144 = scmp.ne.s32.totalorder %s132, %s133
    %p145 = scmp.eq.s32.totalorder %s18, 1
    %p146 = por %p144, %p145
    %p148 = scmp.ne.s32.totalorder %s133, %s147
    %p149 = scmp.eq.s32.totalorder %s18, 0
    %p150 = por %p148, %p149
    %s152 = sadd.s32 %s151, 1
    %p155 = scmp.eq.s32.totalorder %s12, 1
    %p156 = scmp.ne.s32.totalorder %s151, %s153
    %p157 = scmp.eq.s32.totalorder %s12, 0
    %p158 = por %p156, %p157
    %p159 = scmp.ne.s32.totalorder %s151, %s153
    %p160 = scmp.eq.s32.totalorder %s17, 1
    %p161 = por %p159, %p160
    %p162 = scmp.ne.s32.totalorder %s153, %s154
    %p163 = scmp.eq.s32.totalorder %s17, 0
    %p164 = por %p162, %p163
    %p165 = scmp.ne.s32.totalorder %s153, %s154
    %p166 = scmp.eq.s32.totalorder %s18, 1
    %p167 = por %p165, %p166
    %p169 = scmp.ne.s32.totalorder %s154, %s168
    %p170 = scmp.eq.s32.totalorder %s18, 0
    %p171 = por %p169, %p170
    %s172 = ssub.s32 %s19, %s31
    %s173 = ssub.s32 %s20, %s27
    %s174 = sor.u32 %s172, %s173
    %p175 = scmp.eq.s32.totalorder %s174, 0
    %s177 = sadd.s32 %s176, 1
    %s178 = scalar_select %p175, %s176, %s177
    %p181 = pneg %p175
    %p182 = scmp.eq.s32.totalorder %s12, 1
    %p183 = por %p181, %p182
    %p184 = scmp.ne.s32.totalorder %s176, %s179
    %p185 = scmp.eq.s32.totalorder %s12, 0
    %p186 = por %p184, %p185
    %p187 = scmp.ne.s32.totalorder %s176, %s179
    %p188 = scmp.eq.s32.totalorder %s17, 1
    %p189 = por %p187, %p188
    %p190 = scmp.ne.s32.totalorder %s179, %s180
    %p191 = scmp.eq.s32.totalorder %s17, 0
    %p192 = por %p190, %p191
    %p193 = scmp.ne.s32.totalorder %s179, %s180
    %p194 = scmp.eq.s32.totalorder %s18, 1
    %p195 = por %p193, %p194
    %p197 = scmp.ne.s32.totalorder %s180, %s196
    %p198 = scmp.eq.s32.totalorder %s18, 0
    %p199 = por %p197, %p198
    %p200 = scmp.le.s32.totalorder 1, %s12
    %p201 = scmp.lt.s32.totalorder %s12, 3
    %p202 = pnand %p200, %p201
    %p203 = pneg %p202
    // Predicated region
    $region9: #{resnext_bottleneck_forward.7} parent=5 // pred_check
      _
    $region10: #{resnext_bottleneck_forward.7} parent=5 // pred_check_branch
      %205 = sbr.rel (%p202) target = $region12
    $region11: #{resnext_bottleneck_forward.7} parent=5 // pred_region
      %s206 = ssub.s32 %s12, 1
      // Predicated region
      $region13: #{resnext_bottleneck_forward.7} parent=11 // pred_check
        %p207 = pneg %p101
      $region14: #{resnext_bottleneck_forward.7} parent=11 // pred_check_branch
        %209 = sbr.rel (%p207) target = $region16
      $region15: #{resnext_bottleneck_forward.7} parent=11 // pred_region
        _
      $region16: #{resnext_bottleneck_forward.7} parent=11 // pred_fallthru
        _
      // Predicated region
      $region17: #{resnext_bottleneck_forward.7} parent=11 // pred_check
        %p210 = pneg %p122
      $region18: #{resnext_bottleneck_forward.7} parent=11 // pred_check_branch
        %212 = sbr.rel (%p210) target = $region20
      $region19: #{resnext_bottleneck_forward.7} parent=11 // pred_region
        _
      $region20: #{resnext_bottleneck_forward.7} parent=11 // pred_fallthru
        _
      // Predicated region
      $region21: #{resnext_bottleneck_forward.7} parent=11 // pred_check
        %p213 = pneg %p143
      $region22: #{resnext_bottleneck_forward.7} parent=11 // pred_check_branch
        %215 = sbr.rel (%p213) target = $region24
      $region23: #{resnext_bottleneck_forward.7} parent=11 // pred_region
        _
      $region24: #{resnext_bottleneck_forward.7} parent=11 // pred_fallthru
        _
      // Predicated region
      $region25: #{resnext_bottleneck_forward.7} parent=11 // pred_check
        %p216 = pneg %p164
      $region26: #{resnext_bottleneck_forward.7} parent=11 // pred_check_branch
        %218 = sbr.rel (%p216) target = $region28
      $region27: #{resnext_bottleneck_forward.7} parent=11 // pred_region
        _
      $region28: #{resnext_bottleneck_forward.7} parent=11 // pred_fallthru
        _
    $region12: #{resnext_bottleneck_forward.7} parent=5 // pred_fallthru
      _
    %p219 = scmp.lt.s32.totalorder %s12, 2
    // Predicated region
    $region29: #{resnext_bottleneck_forward.7} parent=5 // pred_check
      %p220 = pneg %p219
    $region30: #{resnext_bottleneck_forward.7} parent=5 // pred_check_branch
      %222 = sbr.rel (%p220) target = $region32
    $region31: #{resnext_bottleneck_forward.7} parent=5 // pred_region
      // Predicated region
      $region33: #{resnext_bottleneck_forward.7} parent=31 // pred_check
        %p223 = pneg %p46
      $region34: #{resnext_bottleneck_forward.7} parent=31 // pred_check_branch
        %225 = sbr.rel (%p223) target = $region36
      $region35: #{resnext_bottleneck_forward.7} parent=31 // pred_region
        %p226 = scmp.lt.s32.totalorder %s19, 1
        %s227 = scalar_select %p226, %s19, 1
        %p228 = scmp.lt.s32.totalorder %s20, 0
        %s229 = scalar_select %p228, %s20, 0
        %s230 = sadd.s32 %s229, %s227
        %s231 = smul.addr %s230, 8
        %s232 = scalar_lea.vmem %s0, %s231
      $region36: #{resnext_bottleneck_forward.7} parent=31 // pred_fallthru
        _
      // Predicated region
      $region37: #{resnext_bottleneck_forward.7} parent=31 // pred_check
        %p233 = pneg %p74
      $region38: #{resnext_bottleneck_forward.7} parent=31 // pred_check_branch
        %235 = sbr.rel (%p233) target = $region40
      $region39: #{resnext_bottleneck_forward.7} parent=31 // pred_region
        %p236 = scmp.lt.s32.totalorder %s19, 1
        %s237 = scalar_select %p236, %s19, 1
        %p238 = scmp.lt.s32.totalorder %s20, 0
        %s239 = scalar_select %p238, %s20, 0
        %s240 = sadd.s32 %s239, %s237
        %s241 = smul.addr %s240, 8
        %s242 = scalar_lea.vmem %s1, %s241
      $region40: #{resnext_bottleneck_forward.7} parent=31 // pred_fallthru
        _
    $region32: #{resnext_bottleneck_forward.7} parent=5 // pred_fallthru
      _
    %p243 = scmp.le.s32.totalorder 1, %s12
    %p244 = scmp.lt.s32.totalorder %s12, 3
    %p245 = pnand %p243, %p244
    %p246 = pneg %p245
    // Predicated region
    $region41: #{resnext_bottleneck_forward.7} parent=5 // pred_check
      _
    $region42: #{resnext_bottleneck_forward.7} parent=5 // pred_check_branch
      %248 = sbr.rel (%p245) target = $region44
    $region43: #{resnext_bottleneck_forward.7} parent=5 // pred_region
      %s249 = ssub.s32 %s12, 1
      %p250 = scmp.lt.s32.totalorder %s21, 1
      %s251 = scalar_select %p250, %s21, 1
      %p252 = scmp.lt.s32.totalorder %s22, 0
      %s253 = scalar_select %p252, %s22, 0
      %s254 = sadd.s32 %s253, %s251
      %s255 = smul.addr %s254, 8
      %s256 = scalar_lea.vmem %s0, %s255
      %p257 = pneg %p52
      %p258 = pneg %p49
      %p259 = scmp.lt.s32.totalorder %s21, 1
      %s260 = scalar_select %p259, %s21, 1
      %p261 = scmp.lt.s32.totalorder %s22, 0
      %s262 = scalar_select %p261, %s22, 0
      %s263 = sadd.s32 %s262, %s260
      %s264 = smul.addr %s263, 8
      %s265 = scalar_lea.vmem %s1, %s264
      %p266 = pneg %p80
      %p267 = pneg %p77
      %p268 = pneg %p101
      %p269 = pneg %p98
      %p270 = pneg %p122
      %p271 = pneg %p119
      %p272 = pneg %p143
      %p273 = pneg %p140
      %p274 = pneg %p164
      %p275 = pneg %p161
      %p276 = pneg %p192
      %p277 = pneg %p189
      %p278 = scmp.lt.s32.totalorder %s21, 1
      %s279 = scalar_select %p278, %s21, 1
      %p280 = scmp.lt.s32.totalorder %s22, 0
      %s281 = scalar_select %p280, %s22, 0
      %s282 = sadd.s32 %s281, %s279
      %s283 = smul.addr %s282, 8
      %s284 = scalar_lea.vmem %s6, %s283
      %p285 = scmp.lt.s32.totalorder %s21, 1
      %s286 = scalar_select %p285, %s21, 1
      %p287 = scmp.lt.s32.totalorder %s22, 0
      %s288 = scalar_select %p287, %s22, 0
      %s289 = sadd.s32 %s288, %s286
      %s290 = smul.addr %s289, 8
      %s291 = scalar_lea.vmem %s0, %s290
      %p292 = scmp.lt.s32.totalorder %s21, 1
      %s293 = scalar_select %p292, %s21, 1
      %p294 = scmp.lt.s32.totalorder %s22, 0
      %s295 = scalar_select %p294, %s22, 0
      %s296 = sadd.s32 %s295, %s293
      %s297 = smul.addr %s296, 8
      %s298 = scalar_lea.vmem %s1, %s297
      %p299 = scmp.lt.s32.totalorder %s21, 1
      %s300 = scalar_select %p299, %s21, 1
      %p301 = scmp.lt.s32.totalorder %s22, 0
      %s302 = scalar_select %p301, %s22, 0
      %s303 = sadd.s32 %s302, %s300
      %s304 = smul.addr %s303, 8
      %s305 = scalar_lea.vmem %s6, %s304
      %v306 = vld [vmem:[%s291] sm:$0xff]
      %v307 = vld [vmem:[%s2] sm:$0x1]
      %v309 = vlaneseq
      %v310 = vshrl.u32 %v309, 7
      %v311 = vsub.s32 0, %v310
      %v312 = vrot.slane %v307, %v311
      %v314 = vmul.f32 %v306, %v312
      %v315 = vld [vmem:[%s3] sm:$0x1]
      %v317 = vlaneseq
      %v318 = vshrl.u32 %v317, 7
      %v319 = vsub.s32 0, %v318
      %v320 = vrot.slane %v315, %v319
      %v322 = vadd.f32 %v314, %v320
      %v323 = vld [vmem:[%s298] sm:$0xff]
      %v324 = vld [vmem:[%s4] sm:$0x1]
      %v326 = vlaneseq
      %v327 = vshrl.u32 %v326, 7
      %v328 = vsub.s32 0, %v327
      %v329 = vrot.slane %v324, %v328
      %v331 = vmul.f32 %v323, %v329
      %v332 = vld [vmem:[%s5] sm:$0x1]
      %v334 = vlaneseq
      %v335 = vshrl.u32 %v334, 7
      %v336 = vsub.s32 0, %v335
      %v337 = vrot.slane %v332, %v336
      %v339 = vadd.f32 %v331, %v337
      %v340 = vadd.f32 %v322, %v339
      %v341 = vmax.f32 %v340, 0.0
      %342 = vst [vmem:[%s305] sm:$0xff] %v341
      %p343 = scmp.lt.s32.totalorder %s21, 1
      %s344 = scalar_select %p343, %s21, 1
      %p345 = scmp.lt.s32.totalorder %s22, 0
      %s346 = scalar_select %p345, %s22, 0
      %s347 = sadd.s32 %s346, %s344
      %s348 = smul.addr %s347, 8
      %s349 = scalar_lea.vmem %s6, %s348
      // Predicated region
      $region45: #{resnext_bottleneck_forward.7} parent=43 // pred_check
        %p350 = pneg %p189
      $region46: #{resnext_bottleneck_forward.7} parent=43 // pred_check_branch
        %352 = sbr.rel (%p350) target = $region48
      $region47: #{resnext_bottleneck_forward.7} parent=43 // pred_region
        _
      $region48: #{resnext_bottleneck_forward.7} parent=43 // pred_fallthru
        _
    $region44: #{resnext_bottleneck_forward.7} parent=5 // pred_fallthru
      _
    %p353 = scmp.le.s32.totalorder 2, %s12
    // Predicated region
    $region49: #{resnext_bottleneck_forward.7} parent=5 // pred_check
      %p354 = pneg %p353
    $region50: #{resnext_bottleneck_forward.7} parent=5 // pred_check_branch
      %356 = sbr.rel (%p354) target = $region52
    $region51: #{resnext_bottleneck_forward.7} parent=5 // pred_region
      %s357 = ssub.s32 %s12, 2
      // Predicated region
      $region53: #{resnext_bottleneck_forward.7} parent=51 // pred_check
        %p358 = pneg %p195
      $region54: #{resnext_bottleneck_forward.7} parent=51 // pred_check_branch
        %360 = sbr.rel (%p358) target = $region56
      $region55: #{resnext_bottleneck_forward.7} parent=51 // pred_region
        %p361 = scmp.lt.s32.totalorder %s23, 1
        %s362 = scalar_select %p361, %s23, 1
        %p363 = scmp.lt.s32.totalorder %s24, 0
        %s364 = scalar_select %p363, %s24, 0
        %s365 = sadd.s32 %s364, %s362
        %s366 = smul.addr %s365, 8
        %s367 = scalar_lea.vmem %s6, %s366
      $region56: #{resnext_bottleneck_forward.7} parent=51 // pred_fallthru
        _
    $region52: #{resnext_bottleneck_forward.7} parent=5 // pred_fallthru
      _
  $region6: #{resnext_bottleneck_forward.7} parent=0 // loop_footer
    %s16 = sadd.s32 1, %s12
  $region7: #{resnext_bottleneck_forward.7} parent=0 // loop_footer_branch
    %11 = sbr.rel target = $region3
  $region8: #{resnext_bottleneck_forward.7} parent=0 // loop_exit
    _

// kernel: resnext_bottleneck_forward.6
$region0: #{resnext_bottleneck_forward.6}
  #allocation0 [shape = 'u32[]', space=smem, size = 0x4, offset = 0x4, fixed_abs, tag = 'smem constant byte address 0x4 - core index']
  #allocation1 [shape = 'u32[144,128]{1,0:T(1,128)}', space=vmem, size = 0x12000, scoped, tag = 'internal scratch']
  %s0 = inlined_call_operand.vmem [shape: f32[2,8,128], index: 0, kind: input, shape index: {}]
  %s1 = inlined_call_operand.vmem [shape: f32[2,8,128], index: 1, kind: input, shape index: {}]
  %s2 = inlined_call_operand.vmem [shape: f32[1,128], index: 2, kind: input, shape index: {}]
  %s3 = inlined_call_operand.vmem [shape: f32[1,128], index: 3, kind: input, shape index: {}]
  %s4 = inlined_call_operand.vmem [shape: f32[128,128], index: 4, kind: input, shape index: {}]
  %s5 = inlined_call_operand.vmem [shape: f32[128,128], index: 5, kind: input, shape index: {}]
  %s6 = inlined_call_operand.vmem [shape: f32[2,8,128], index: 6, kind: output, shape index: {0}]
  %s7 = inlined_call_operand.vmem [shape: f32[2,8,128], index: 7, kind: output, shape index: {1}]
  %s8 = inlined_call_operand.vmem [shape: f32[2,1,2,128], index: 8, kind: output, shape index: {2}]
  %s9 = inlined_call_operand.vmem [shape: f32[2,1,2,128], index: 9, kind: output, shape index: {3}]
  %10 = xla_tuple %s6, %s7, %s8, %s9
  %s11 = sld [smem:[#allocation0]]
  $region81: #{resnext_bottleneck_forward.6} parent=0
    _
  %s13 = ssub.s32 1, %s11
  %s14 = scalar_select 0, %s13, %s11
  loop: start=0, step=1, limit=4
  $region2: #{resnext_bottleneck_forward.6} parent=0 // loop_pre_header
    _
  $region3: #{resnext_bottleneck_forward.6} parent=0 // loop_header
    %s16 = sphi 0, %s20
    %p17 = scmp.ge.s32.totalorder %s16, 4
    %s23 = sphi 0, %s35
    %s24 = sphi 0, %s31
    %s25 = sphi 0, %s23
    %s26 = sphi 0, %s24
    %s27 = sphi 0, %s25
    %s28 = sphi 0, %s26
    %s40 = sphi 0, %s42
    %s43 = sphi 0, %s40
    %s44 = sphi 0, %s43
    %s60 = sphi 0, %s44
    %s68 = sphi 0, %s70
    %s71 = sphi 0, %s68
    %s72 = sphi 0, %s71
    %s88 = sphi 0, %s72
    %s92 = sphi 0, %s92
    %s94 = sphi 0, %s92
    %s95 = sphi 0, %s94
    %s109 = sphi 0, %s95
    %s113 = sphi 0, %s113
    %s115 = sphi 0, %s113
    %s116 = sphi 0, %s115
    %s130 = sphi 0, %s116
    %s134 = sphi 0, %s134
    %s136 = sphi 0, %s134
    %s137 = sphi 0, %s136
    %s151 = sphi 0, %s137
    %s155 = sphi 0, %s155
    %s157 = sphi 0, %s155
    %s158 = sphi 0, %s157
    %s172 = sphi 0, %s158
    %s180 = sphi 0, %s182
    %s183 = sphi 0, %s180
    %s184 = sphi 0, %s183
    %s200 = sphi 0, %s184
    %s208 = sphi 0, %s210
    %s211 = sphi 0, %s208
    %s212 = sphi 0, %s211
    %s228 = sphi 0, %s212
    %s236 = sphi 0, %s238
    %s239 = sphi 0, %s236
    %s240 = sphi 0, %s239
    %s256 = sphi 0, %s240
    %s264 = sphi 0, %s266
    %s267 = sphi 0, %s264
    %s268 = sphi 0, %s267
    %s284 = sphi 0, %s268
  $region4: #{resnext_bottleneck_forward.6} parent=0 // loop_header_branch
    %19 = sbr.rel (%p17) target = $region8
  $region5: #{resnext_bottleneck_forward.6} parent=0 // loop_body
    %s21 = ssub.s32 %s16, 1
    %s22 = ssub.s32 %s16, 2
    %s29 = sadd.s32 1, %s24
    %p30 = scmp.ge.s32.totalorder %s29, 1
    %s31 = scalar_select %p30, 0, %s29
    %s32 = sadd.s32 1, %s23
    %s33 = scalar_select %p30, %s32, %s23
    %p34 = scmp.ge.s32.totalorder %s33, 2
    %s35 = scalar_select %p34, 0, %s33
    %s36 = ssub.s32 %s23, %s35
    %s37 = ssub.s32 %s24, %s31
    %s38 = sor.u32 %s36, %s37
    %p39 = scmp.eq.s32.totalorder %s38, 0
    %s41 = sadd.s32 %s40, 1
    %s42 = scalar_select %p39, %s40, %s41
    %p45 = pneg %p39
    %p46 = scmp.eq.s32.totalorder %s16, 1
    %p47 = por %p45, %p46
    %p48 = scmp.ne.s32.totalorder %s40, %s43
    %p49 = scmp.eq.s32.totalorder %s16, 0
    %p50 = por %p48, %p49
    %p51 = scmp.ne.s32.totalorder %s40, %s43
    %p52 = scmp.eq.s32.totalorder %s21, 1
    %p53 = por %p51, %p52
    %p54 = scmp.ne.s32.totalorder %s43, %s44
    %p55 = scmp.eq.s32.totalorder %s21, 0
    %p56 = por %p54, %p55
    %p57 = scmp.ne.s32.totalorder %s43, %s44
    %p58 = scmp.eq.s32.totalorder %s22, 1
    %p59 = por %p57, %p58
    %p61 = scmp.ne.s32.totalorder %s44, %s60
    %p62 = scmp.eq.s32.totalorder %s22, 0
    %p63 = por %p61, %p62
    %s64 = ssub.s32 %s23, %s35
    %s65 = ssub.s32 %s24, %s31
    %s66 = sor.u32 %s64, %s65
    %p67 = scmp.eq.s32.totalorder %s66, 0
    %s69 = sadd.s32 %s68, 1
    %s70 = scalar_select %p67, %s68, %s69
    %p73 = pneg %p67
    %p74 = scmp.eq.s32.totalorder %s16, 1
    %p75 = por %p73, %p74
    %p76 = scmp.ne.s32.totalorder %s68, %s71
    %p77 = scmp.eq.s32.totalorder %s16, 0
    %p78 = por %p76, %p77
    %p79 = scmp.ne.s32.totalorder %s68, %s71
    %p80 = scmp.eq.s32.totalorder %s21, 1
    %p81 = por %p79, %p80
    %p82 = scmp.ne.s32.totalorder %s71, %s72
    %p83 = scmp.eq.s32.totalorder %s21, 0
    %p84 = por %p82, %p83
    %p85 = scmp.ne.s32.totalorder %s71, %s72
    %p86 = scmp.eq.s32.totalorder %s22, 1
    %p87 = por %p85, %p86
    %p89 = scmp.ne.s32.totalorder %s72, %s88
    %p90 = scmp.eq.s32.totalorder %s22, 0
    %p91 = por %p89, %p90
    %s93 = sadd.s32 %s92, 1
    %p96 = scmp.eq.s32.totalorder %s16, 1
    %p97 = scmp.ne.s32.totalorder %s92, %s94
    %p98 = scmp.eq.s32.totalorder %s16, 0
    %p99 = por %p97, %p98
    %p100 = scmp.ne.s32.totalorder %s92, %s94
    %p101 = scmp.eq.s32.totalorder %s21, 1
    %p102 = por %p100, %p101
    %p103 = scmp.ne.s32.totalorder %s94, %s95
    %p104 = scmp.eq.s32.totalorder %s21, 0
    %p105 = por %p103, %p104
    %p106 = scmp.ne.s32.totalorder %s94, %s95
    %p107 = scmp.eq.s32.totalorder %s22, 1
    %p108 = por %p106, %p107
    %p110 = scmp.ne.s32.totalorder %s95, %s109
    %p111 = scmp.eq.s32.totalorder %s22, 0
    %p112 = por %p110, %p111
    %s114 = sadd.s32 %s113, 1
    %p117 = scmp.eq.s32.totalorder %s16, 1
    %p118 = scmp.ne.s32.totalorder %s113, %s115
    %p119 = scmp.eq.s32.totalorder %s16, 0
    %p120 = por %p118, %p119
    %p121 = scmp.ne.s32.totalorder %s113, %s115
    %p122 = scmp.eq.s32.totalorder %s21, 1
    %p123 = por %p121, %p122
    %p124 = scmp.ne.s32.totalorder %s115, %s116
    %p125 = scmp.eq.s32.totalorder %s21, 0
    %p126 = por %p124, %p125
    %p127 = scmp.ne.s32.totalorder %s115, %s116
    %p128 = scmp.eq.s32.totalorder %s22, 1
    %p129 = por %p127, %p128
    %p131 = scmp.ne.s32.totalorder %s116, %s130
    %p132 = scmp.eq.s32.totalorder %s22, 0
    %p133 = por %p131, %p132
    %s135 = sadd.s32 %s134, 1
    %p138 = scmp.eq.s32.totalorder %s16, 1
    %p139 = scmp.ne.s32.totalorder %s134, %s136
    %p140 = scmp.eq.s32.totalorder %s16, 0
    %p141 = por %p139, %p140
    %p142 = scmp.ne.s32.totalorder %s134, %s136
    %p143 = scmp.eq.s32.totalorder %s21, 1
    %p144 = por %p142, %p143
    %p145 = scmp.ne.s32.totalorder %s136, %s137
    %p146 = scmp.eq.s32.totalorder %s21, 0
    %p147 = por %p145, %p146
    %p148 = scmp.ne.s32.totalorder %s136, %s137
    %p149 = scmp.eq.s32.totalorder %s22, 1
    %p150 = por %p148, %p149
    %p152 = scmp.ne.s32.totalorder %s137, %s151
    %p153 = scmp.eq.s32.totalorder %s22, 0
    %p154 = por %p152, %p153
    %s156 = sadd.s32 %s155, 1
    %p159 = scmp.eq.s32.totalorder %s16, 1
    %p160 = scmp.ne.s32.totalorder %s155, %s157
    %p161 = scmp.eq.s32.totalorder %s16, 0
    %p162 = por %p160, %p161
    %p163 = scmp.ne.s32.totalorder %s155, %s157
    %p164 = scmp.eq.s32.totalorder %s21, 1
    %p165 = por %p163, %p164
    %p166 = scmp.ne.s32.totalorder %s157, %s158
    %p167 = scmp.eq.s32.totalorder %s21, 0
    %p168 = por %p166, %p167
    %p169 = scmp.ne.s32.totalorder %s157, %s158
    %p170 = scmp.eq.s32.totalorder %s22, 1
    %p171 = por %p169, %p170
    %p173 = scmp.ne.s32.totalorder %s158, %s172
    %p174 = scmp.eq.s32.totalorder %s22, 0
    %p175 = por %p173, %p174
    %s176 = ssub.s32 %s23, %s35
    %s177 = ssub.s32 %s24, %s31
    %s178 = sor.u32 %s176, %s177
    %p179 = scmp.eq.s32.totalorder %s178, 0
    %s181 = sadd.s32 %s180, 1
    %s182 = scalar_select %p179, %s180, %s181
    %p185 = pneg %p179
    %p186 = scmp.eq.s32.totalorder %s16, 1
    %p187 = por %p185, %p186
    %p188 = scmp.ne.s32.totalorder %s180, %s183
    %p189 = scmp.eq.s32.totalorder %s16, 0
    %p190 = por %p188, %p189
    %p191 = scmp.ne.s32.totalorder %s180, %s183
    %p192 = scmp.eq.s32.totalorder %s21, 1
    %p193 = por %p191, %p192
    %p194 = scmp.ne.s32.totalorder %s183, %s184
    %p195 = scmp.eq.s32.totalorder %s21, 0
    %p196 = por %p194, %p195
    %p197 = scmp.ne.s32.totalorder %s183, %s184
    %p198 = scmp.eq.s32.totalorder %s22, 1
    %p199 = por %p197, %p198
    %p201 = scmp.ne.s32.totalorder %s184, %s200
    %p202 = scmp.eq.s32.totalorder %s22, 0
    %p203 = por %p201, %p202
    %s204 = ssub.s32 %s23, %s35
    %s205 = ssub.s32 %s24, %s31
    %s206 = sor.u32 %s204, %s205
    %p207 = scmp.eq.s32.totalorder %s206, 0
    %s209 = sadd.s32 %s208, 1
    %s210 = scalar_select %p207, %s208, %s209
    %p213 = pneg %p207
    %p214 = scmp.eq.s32.totalorder %s16, 1
    %p215 = por %p213, %p214
    %p216 = scmp.ne.s32.totalorder %s208, %s211
    %p217 = scmp.eq.s32.totalorder %s16, 0
    %p218 = por %p216, %p217
    %p219 = scmp.ne.s32.totalorder %s208, %s211
    %p220 = scmp.eq.s32.totalorder %s21, 1
    %p221 = por %p219, %p220
    %p222 = scmp.ne.s32.totalorder %s211, %s212
    %p223 = scmp.eq.s32.totalorder %s21, 0
    %p224 = por %p222, %p223
    %p225 = scmp.ne.s32.totalorder %s211, %s212
    %p226 = scmp.eq.s32.totalorder %s22, 1
    %p227 = por %p225, %p226
    %p229 = scmp.ne.s32.totalorder %s212, %s228
    %p230 = scmp.eq.s32.totalorder %s22, 0
    %p231 = por %p229, %p230
    %s232 = ssub.s32 %s23, %s35
    %s233 = ssub.s32 %s24, %s31
    %s234 = sor.u32 %s232, %s233
    %p235 = scmp.eq.s32.totalorder %s234, 0
    %s237 = sadd.s32 %s236, 1
    %s238 = scalar_select %p235, %s236, %s237
    %p241 = pneg %p235
    %p242 = scmp.eq.s32.totalorder %s16, 1
    %p243 = por %p241, %p242
    %p244 = scmp.ne.s32.totalorder %s236, %s239
    %p245 = scmp.eq.s32.totalorder %s16, 0
    %p246 = por %p244, %p245
    %p247 = scmp.ne.s32.totalorder %s236, %s239
    %p248 = scmp.eq.s32.totalorder %s21, 1
    %p249 = por %p247, %p248
    %p250 = scmp.ne.s32.totalorder %s239, %s240
    %p251 = scmp.eq.s32.totalorder %s21, 0
    %p252 = por %p250, %p251
    %p253 = scmp.ne.s32.totalorder %s239, %s240
    %p254 = scmp.eq.s32.totalorder %s22, 1
    %p255 = por %p253, %p254
    %p257 = scmp.ne.s32.totalorder %s240, %s256
    %p258 = scmp.eq.s32.totalorder %s22, 0
    %p259 = por %p257, %p258
    %s260 = ssub.s32 %s23, %s35
    %s261 = ssub.s32 %s24, %s31
    %s262 = sor.u32 %s260, %s261
    %p263 = scmp.eq.s32.totalorder %s262, 0
    %s265 = sadd.s32 %s264, 1
    %s266 = scalar_select %p263, %s264, %s265
    %p269 = pneg %p263
    %p270 = scmp.eq.s32.totalorder %s16, 1
    %p271 = por %p269, %p270
    %p272 = scmp.ne.s32.totalorder %s264, %s267
    %p273 = scmp.eq.s32.totalorder %s16, 0
    %p274 = por %p272, %p273
    %p275 = scmp.ne.s32.totalorder %s264, %s267
    %p276 = scmp.eq.s32.totalorder %s21, 1
    %p277 = por %p275, %p276
    %p278 = scmp.ne.s32.totalorder %s267, %s268
    %p279 = scmp.eq.s32.totalorder %s21, 0
    %p280 = por %p278, %p279
    %p281 = scmp.ne.s32.totalorder %s267, %s268
    %p282 = scmp.eq.s32.totalorder %s22, 1
    %p283 = por %p281, %p282
    %p285 = scmp.ne.s32.totalorder %s268, %s284
    %p286 = scmp.eq.s32.totalorder %s22, 0
    %p287 = por %p285, %p286
    %p288 = scmp.le.s32.totalorder 1, %s16
    %p289 = scmp.lt.s32.totalorder %s16, 3
    %p290 = pnand %p288, %p289
    %p291 = pneg %p290
    // Predicated region
    $region9: #{resnext_bottleneck_forward.6} parent=5 // pred_check
      _
    $region10: #{resnext_bottleneck_forward.6} parent=5 // pred_check_branch
      %293 = sbr.rel (%p290) target = $region12
    $region11: #{resnext_bottleneck_forward.6} parent=5 // pred_region
      %s294 = ssub.s32 %s16, 1
      // Predicated region
      $region13: #{resnext_bottleneck_forward.6} parent=11 // pred_check
        %p295 = pneg %p105
      $region14: #{resnext_bottleneck_forward.6} parent=11 // pred_check_branch
        %297 = sbr.rel (%p295) target = $region16
      $region15: #{resnext_bottleneck_forward.6} parent=11 // pred_region
        _
      $region16: #{resnext_bottleneck_forward.6} parent=11 // pred_fallthru
        _
      // Predicated region
      $region17: #{resnext_bottleneck_forward.6} parent=11 // pred_check
        %p298 = pneg %p126
      $region18: #{resnext_bottleneck_forward.6} parent=11 // pred_check_branch
        %300 = sbr.rel (%p298) target = $region20
      $region19: #{resnext_bottleneck_forward.6} parent=11 // pred_region
        _
      $region20: #{resnext_bottleneck_forward.6} parent=11 // pred_fallthru
        _
      // Predicated region
      $region21: #{resnext_bottleneck_forward.6} parent=11 // pred_check
        %p301 = pneg %p147
      $region22: #{resnext_bottleneck_forward.6} parent=11 // pred_check_branch
        %303 = sbr.rel (%p301) target = $region24
      $region23: #{resnext_bottleneck_forward.6} parent=11 // pred_region
        _
      $region24: #{resnext_bottleneck_forward.6} parent=11 // pred_fallthru
        _
      // Predicated region
      $region25: #{resnext_bottleneck_forward.6} parent=11 // pred_check
        %p304 = pneg %p168
      $region26: #{resnext_bottleneck_forward.6} parent=11 // pred_check_branch
        %306 = sbr.rel (%p304) target = $region28
      $region27: #{resnext_bottleneck_forward.6} parent=11 // pred_region
        _
      $region28: #{resnext_bottleneck_forward.6} parent=11 // pred_fallthru
        _
    $region12: #{resnext_bottleneck_forward.6} parent=5 // pred_fallthru
      _
    %p307 = scmp.lt.s32.totalorder %s16, 2
    // Predicated region
    $region29: #{resnext_bottleneck_forward.6} parent=5 // pred_check
      %p308 = pneg %p307
    $region30: #{resnext_bottleneck_forward.6} parent=5 // pred_check_branch
      %310 = sbr.rel (%p308) target = $region32
    $region31: #{resnext_bottleneck_forward.6} parent=5 // pred_region
      // Predicated region
      $region33: #{resnext_bottleneck_forward.6} parent=31 // pred_check
        %p311 = pneg %p50
      $region34: #{resnext_bottleneck_forward.6} parent=31 // pred_check_branch
        %313 = sbr.rel (%p311) target = $region36
      $region35: #{resnext_bottleneck_forward.6} parent=31 // pred_region
        %p314 = scmp.lt.s32.totalorder %s23, 1
        %s315 = scalar_select %p314, %s23, 1
        %p316 = scmp.lt.s32.totalorder %s24, 0
        %s317 = scalar_select %p316, %s24, 0
        %s318 = sadd.s32 %s317, %s315
        %s319 = smul.addr %s318, 8
        %s320 = scalar_lea.vmem %s0, %s319
      $region36: #{resnext_bottleneck_forward.6} parent=31 // pred_fallthru
        _
      // Predicated region
      $region37: #{resnext_bottleneck_forward.6} parent=31 // pred_check
        %p321 = pneg %p78
      $region38: #{resnext_bottleneck_forward.6} parent=31 // pred_check_branch
        %323 = sbr.rel (%p321) target = $region40
      $region39: #{resnext_bottleneck_forward.6} parent=31 // pred_region
        %p324 = scmp.lt.s32.totalorder %s23, 1
        %s325 = scalar_select %p324, %s23, 1
        %p326 = scmp.lt.s32.totalorder %s24, 0
        %s327 = scalar_select %p326, %s24, 0
        %s328 = sadd.s32 %s327, %s325
        %s329 = smul.addr %s328, 8
        %s330 = scalar_lea.vmem %s1, %s329
      $region40: #{resnext_bottleneck_forward.6} parent=31 // pred_fallthru
        _
    $region32: #{resnext_bottleneck_forward.6} parent=5 // pred_fallthru
      _
    %p331 = scmp.le.s32.totalorder 1, %s16
    %p332 = scmp.lt.s32.totalorder %s16, 3
    %p333 = pnand %p331, %p332
    %p334 = pneg %p333
    // Predicated region
    $region41: #{resnext_bottleneck_forward.6} parent=5 // pred_check
      _
    $region42: #{resnext_bottleneck_forward.6} parent=5 // pred_check_branch
      %336 = sbr.rel (%p333) target = $region44
    $region43: #{resnext_bottleneck_forward.6} parent=5 // pred_region
      %s337 = ssub.s32 %s16, 1
      %p338 = scmp.lt.s32.totalorder %s25, 1
      %s339 = scalar_select %p338, %s25, 1
      %p340 = scmp.lt.s32.totalorder %s26, 0
      %s341 = scalar_select %p340, %s26, 0
      %s342 = sadd.s32 %s341, %s339
      %s343 = smul.addr %s342, 8
      %s344 = scalar_lea.vmem %s0, %s343
      %p345 = pneg %p56
      %p346 = pneg %p53
      %p347 = scmp.lt.s32.totalorder %s25, 1
      %s348 = scalar_select %p347, %s25, 1
      %p349 = scmp.lt.s32.totalorder %s26, 0
      %s350 = scalar_select %p349, %s26, 0
      %s351 = sadd.s32 %s350, %s348
      %s352 = smul.addr %s351, 8
      %s353 = scalar_lea.vmem %s1, %s352
      %p354 = pneg %p84
      %p355 = pneg %p81
      %p356 = pneg %p105
      %p357 = pneg %p102
      %p358 = pneg %p126
      %p359 = pneg %p123
      %p360 = pneg %p147
      %p361 = pneg %p144
      %p362 = pneg %p168
      %p363 = pneg %p165
      %p364 = pneg %p196
      %p365 = pneg %p193
      %p366 = scmp.lt.s32.totalorder %s25, 1
      %s367 = scalar_select %p366, %s25, 1
      %p368 = scmp.lt.s32.totalorder %s26, 0
      %s369 = scalar_select %p368, %s26, 0
      %s370 = sadd.s32 %s369, %s367
      %s371 = smul.addr %s370, 8
      %s372 = scalar_lea.vmem %s6, %s371
      %p373 = pneg %p224
      %p374 = pneg %p221
      %p375 = scmp.lt.s32.totalorder %s25, 1
      %s376 = scalar_select %p375, %s25, 1
      %p377 = scmp.lt.s32.totalorder %s26, 0
      %s378 = scalar_select %p377, %s26, 0
      %s379 = sadd.s32 %s378, %s376
      %s380 = smul.addr %s379, 8
      %s381 = scalar_lea.vmem %s7, %s380
      %p382 = pneg %p252
      %p383 = pneg %p249
      %p384 = scmp.lt.s32.totalorder %s25, 1
      %s385 = scalar_select %p384, %s25, 1
      %p386 = scmp.lt.s32.totalorder %s26, 0
      %s387 = scalar_select %p386, %s26, 0
      %s388 = sadd.s32 %s387, %s385
      %s389 = smul.addr %s388, 2
      %s390 = scalar_lea.vmem %s8, %s389
      %p391 = pneg %p280
      %p392 = pneg %p277
      %p393 = scmp.lt.s32.totalorder %s25, 1
      %s394 = scalar_select %p393, %s25, 1
      %p395 = scmp.lt.s32.totalorder %s26, 0
      %s396 = scalar_select %p395, %s26, 0
      %s397 = sadd.s32 %s396, %s394
      %s398 = smul.addr %s397, 2
      %s399 = scalar_lea.vmem %s9, %s398
      %p400 = scmp.lt.s32.totalorder %s25, 1
      %s401 = scalar_select %p400, %s25, 1
      %p402 = scmp.lt.s32.totalorder %s26, 0
      %s403 = scalar_select %p402, %s26, 0
      %s404 = sadd.s32 %s403, %s401
      %s405 = smul.addr %s404, 8
      %s406 = scalar_lea.vmem %s0, %s405
      %p407 = scmp.lt.s32.totalorder %s25, 1
      %s408 = scalar_select %p407, %s25, 1
      %p409 = scmp.lt.s32.totalorder %s26, 0
      %s410 = scalar_select %p409, %s26, 0
      %s411 = sadd.s32 %s410, %s408
      %s412 = smul.addr %s411, 8
      %s413 = scalar_lea.vmem %s1, %s412
      %p414 = scmp.lt.s32.totalorder %s25, 1
      %s415 = scalar_select %p414, %s25, 1
      %p416 = scmp.lt.s32.totalorder %s26, 0
      %s417 = scalar_select %p416, %s26, 0
      %s418 = sadd.s32 %s417, %s415
      %s419 = smul.addr %s418, 8
      %s420 = scalar_lea.vmem %s6, %s419
      %p421 = scmp.lt.s32.totalorder %s25, 1
      %s422 = scalar_select %p421, %s25, 1
      %p423 = scmp.lt.s32.totalorder %s26, 0
      %s424 = scalar_select %p423, %s26, 0
      %s425 = sadd.s32 %s424, %s422
      %s426 = smul.addr %s425, 8
      %s427 = scalar_lea.vmem %s7, %s426
      %p428 = scmp.lt.s32.totalorder %s25, 1
      %s429 = scalar_select %p428, %s25, 1
      %p430 = scmp.lt.s32.totalorder %s26, 0
      %s431 = scalar_select %p430, %s26, 0
      %s432 = sadd.s32 %s431, %s429
      %s433 = smul.addr %s432, 2
      %s434 = scalar_lea.vmem %s8, %s433
      %p435 = scmp.lt.s32.totalorder %s25, 1
      %s436 = scalar_select %p435, %s25, 1
      %p437 = scmp.lt.s32.totalorder %s26, 0
      %s438 = scalar_select %p437, %s26, 0
      %s439 = sadd.s32 %s438, %s436
      %s440 = smul.addr %s439, 2
      %s441 = scalar_lea.vmem %s9, %s440
      %v442 = vld [vmem:[%s406] sm:$0xff]
      %v443 = vld [vmem:[%s2] sm:$0x1]
      %v445 = vlaneseq
      %v446 = vshrl.u32 %v445, 7
      %v447 = vsub.s32 0, %v446
      %v448 = vrot.slane %v443, %v447
      %v450 = vmul.f32 %v442, %v448
      %v451 = vld [vmem:[%s3] sm:$0x1]
      %v453 = vlaneseq
      %v454 = vshrl.u32 %v453, 7
      %v455 = vsub.s32 0, %v454
      %v456 = vrot.slane %v451, %v455
      %v458 = vadd.f32 %v450, %v456
      %v459 = vmax.f32 %v458, 0.0
      %v460 = vld [vmem:[%s4] sm:$0xff]
      %v461 = vld [vmem:[%s4 + $0x8] sm:$0xff]
      %v462 = vld [vmem:[%s4 + $0x10] sm:$0xff]
      %v463 = vld [vmem:[%s4 + $0x18] sm:$0xff]
      %v464 = vld [vmem:[%s4 + $0x20] sm:$0xff]
      %v465 = vld [vmem:[%s4 + $0x28] sm:$0xff]
      %v466 = vld [vmem:[%s4 + $0x30] sm:$0xff]
      %v467 = vld [vmem:[%s4 + $0x38] sm:$0xff]
      %v468 = vld [vmem:[%s4 + $0x40] sm:$0xff]
      %v469 = vld [vmem:[%s4 + $0x48] sm:$0xff]
      %v470 = vld [vmem:[%s4 + $0x50] sm:$0xff]
      %v471 = vld [vmem:[%s4 + $0x58] sm:$0xff]
      %v472 = vld [vmem:[%s4 + $0x60] sm:$0xff]
      %v473 = vld [vmem:[%s4 + $0x68] sm:$0xff]
      %v474 = vld [vmem:[%s4 + $0x70] sm:$0xff]
      %v475 = vld [vmem:[%s4 + $0x78] sm:$0xff]
      %476 = vmatprep.subr.mxu0 0.0
      %477 = vmatpush1.msra.mxu0 %v460
      %478 = vmatprep.subr.mxu0 0.0
      %479 = vmatpush1.msra.mxu0 %v461
      %480 = vmatprep.subr.mxu0 0.0
      %481 = vmatpush1.msra.mxu0 %v462
      %482 = vmatprep.subr.mxu0 0.0
      %483 = vmatpush1.msra.mxu0 %v463
      %484 = vmatprep.subr.mxu0 0.0
      %485 = vmatpush1.msra.mxu0 %v464
      %486 = vmatprep.subr.mxu0 0.0
      %487 = vmatpush1.msra.mxu0 %v465
      %488 = vmatprep.subr.mxu0 0.0
      %489 = vmatpush1.msra.mxu0 %v466
      %490 = vmatprep.subr.mxu0 0.0
      %491 = vmatpush1.msra.mxu0 %v467
      %492 = vmatprep.subr.mxu0 0.0
      %493 = vmatpush1.msra.mxu0 %v468
      %494 = vmatprep.subr.mxu0 0.0
      %495 = vmatpush1.msra.mxu0 %v469
      %496 = vmatprep.subr.mxu0 0.0
      %497 = vmatpush1.msra.mxu0 %v470
      %498 = vmatprep.subr.mxu0 0.0
      %499 = vmatpush1.msra.mxu0 %v471
      %500 = vmatprep.subr.mxu0 0.0
      %501 = vmatpush1.msra.mxu0 %v472
      %502 = vmatprep.subr.mxu0 0.0
      %503 = vmatpush1.msra.mxu0 %v473
      %504 = vmatprep.subr.mxu0 0.0
      %505 = vmatpush1.msra.mxu0 %v474
      %506 = vmatprep.subr.mxu0 0.0
      %507 = vmatpush1.msra.mxu0 %v475
      %508 = vmatprep.subr.mxu0 0.0
      %509 = vmatpush1.msra.mxu0 0.0
      %510 = vmatprep.subr.mxu0 0.0
      %511 = vmatpush1.msra.mxu0 0.0
      %512 = vmatprep.subr.mxu0 0.0
      %513 = vmatpush1.msra.mxu0 0.0
      %514 = vmatprep.subr.mxu0 0.0
      %515 = vmatpush1.msra.mxu0 0.0
      %516 = vmatprep.subr.mxu0 0.0
      %517 = vmatpush1.msra.mxu0 0.0
      %518 = vmatprep.subr.mxu0 0.0
      %519 = vmatpush1.msra.mxu0 0.0
      %520 = vmatprep.subr.mxu0 0.0
      %521 = vmatpush1.msra.mxu0 0.0
      %522 = vmatprep.subr.mxu0 0.0
      %523 = vmatpush1.msra.mxu0 0.0
      %524 = vmatprep.subr.mxu0 0.0
      %525 = vmatpush1.msra.mxu0 0.0
      %526 = vmatprep.subr.mxu0 0.0
      %527 = vmatpush1.msra.mxu0 0.0
      %528 = vmatprep.subr.mxu0 0.0
      %529 = vmatpush1.msra.mxu0 0.0
      %530 = vmatprep.subr.mxu0 0.0
      %531 = vmatpush1.msra.mxu0 0.0
      %532 = vmatprep.subr.mxu0 0.0
      %533 = vmatpush1.msra.mxu0 0.0
      %534 = vmatprep.subr.mxu0 0.0
      %535 = vmatpush1.msra.mxu0 0.0
      %536 = vmatprep.subr.mxu0 0.0
      %537 = vmatpush1.msra.mxu0 0.0
      %538 = vmatprep.subr.mxu0 0.0
      %539 = vmatpush1.msra.mxu0 0.0
      %540 = vmatprep.mubr.f32.mxu0 0.0
      %541 = vmatmul.mubr.f32.gmra.mrb[0].mxu0 %v459
      %v542 = vpop.f32.mrb[0].mxu0
      %v543 = vadd.f32 0.0, %v542
      %v544 = vpop.f32.mrb[0].mxu0
      %545 = vdwg.mxu0
      %v546 = vld [vmem:[%s413] sm:$0xff]
      %v547 = vld [vmem:[%s5] sm:$0xff]
      %v548 = vld [vmem:[%s5 + $0x8] sm:$0xff]
      %v549 = vld [vmem:[%s5 + $0x10] sm:$0xff]
      %v550 = vld [vmem:[%s5 + $0x18] sm:$0xff]
      %v551 = vld [vmem:[%s5 + $0x20] sm:$0xff]
      %v552 = vld [vmem:[%s5 + $0x28] sm:$0xff]
      %v553 = vld [vmem:[%s5 + $0x30] sm:$0xff]
      %v554 = vld [vmem:[%s5 + $0x38] sm:$0xff]
      %v555 = vld [vmem:[%s5 + $0x40] sm:$0xff]
      %v556 = vld [vmem:[%s5 + $0x48] sm:$0xff]
      %v557 = vld [vmem:[%s5 + $0x50] sm:$0xff]
      %v558 = vld [vmem:[%s5 + $0x58] sm:$0xff]
      %v559 = vld [vmem:[%s5 + $0x60] sm:$0xff]
      %v560 = vld [vmem:[%s5 + $0x68] sm:$0xff]
      %v561 = vld [vmem:[%s5 + $0x70] sm:$0xff]
      %v562 = vld [vmem:[%s5 + $0x78] sm:$0xff]
      %563 = vmatprep.subr.mxu0 0.0
      %564 = vmatpush1.msra.mxu0 %v547
      %565 = vmatprep.subr.mxu0 0.0
      %566 = vmatpush1.msra.mxu0 %v548
      %567 = vmatprep.subr.mxu0 0.0
      %568 = vmatpush1.msra.mxu0 %v549
      %569 = vmatprep.subr.mxu0 0.0
      %570 = vmatpush1.msra.mxu0 %v550
      %571 = vmatprep.subr.mxu0 0.0
      %572 = vmatpush1.msra.mxu0 %v551
      %573 = vmatprep.subr.mxu0 0.0
      %574 = vmatpush1.msra.mxu0 %v552
      %575 = vmatprep.subr.mxu0 0.0
      %576 = vmatpush1.msra.mxu0 %v553
      %577 = vmatprep.subr.mxu0 0.0
      %578 = vmatpush1.msra.mxu0 %v554
      %579 = vmatprep.subr.mxu0 0.0
      %580 = vmatpush1.msra.mxu0 %v555
      %581 = vmatprep.subr.mxu0 0.0
      %582 = vmatpush1.msra.mxu0 %v556
      %583 = vmatprep.subr.mxu0 0.0
      %584 = vmatpush1.msra.mxu0 %v557
      %585 = vmatprep.subr.mxu0 0.0
      %586 = vmatpush1.msra.mxu0 %v558
      %587 = vmatprep.subr.mxu0 0.0
      %588 = vmatpush1.msra.mxu0 %v559
      %589 = vmatprep.subr.mxu0 0.0
      %590 = vmatpush1.msra.mxu0 %v560
      %591 = vmatprep.subr.mxu0 0.0
      %592 = vmatpush1.msra.mxu0 %v561
      %593 = vmatprep.subr.mxu0 0.0
      %594 = vmatpush1.msra.mxu0 %v562
      %595 = vmatprep.subr.mxu0 0.0
      %596 = vmatpush1.msra.mxu0 0.0
      %597 = vmatprep.subr.mxu0 0.0
      %598 = vmatpush1.msra.mxu0 0.0
      %599 = vmatprep.subr.mxu0 0.0
      %600 = vmatpush1.msra.mxu0 0.0
      %601 = vmatprep.subr.mxu0 0.0
      %602 = vmatpush1.msra.mxu0 0.0
      %603 = vmatprep.subr.mxu0 0.0
      %604 = vmatpush1.msra.mxu0 0.0
      %605 = vmatprep.subr.mxu0 0.0
      %606 = vmatpush1.msra.mxu0 0.0
      %607 = vmatprep.subr.mxu0 0.0
      %608 = vmatpush1.msra.mxu0 0.0
      %609 = vmatprep.subr.mxu0 0.0
      %610 = vmatpush1.msra.mxu0 0.0
      %611 = vmatprep.subr.mxu0 0.0
      %612 = vmatpush1.msra.mxu0 0.0
      %613 = vmatprep.subr.mxu0 0.0
      %614 = vmatpush1.msra.mxu0 0.0
      %615 = vmatprep.subr.mxu0 0.0
      %616 = vmatpush1.msra.mxu0 0.0
      %617 = vmatprep.subr.mxu0 0.0
      %618 = vmatpush1.msra.mxu0 0.0
      %619 = vmatprep.subr.mxu0 0.0
      %620 = vmatpush1.msra.mxu0 0.0
      %621 = vmatprep.subr.mxu0 0.0
      %622 = vmatpush1.msra.mxu0 0.0
      %623 = vmatprep.subr.mxu0 0.0
      %624 = vmatpush1.msra.mxu0 0.0
      %625 = vmatprep.subr.mxu0 0.0
      %626 = vmatpush1.msra.mxu0 0.0
      %627 = vmatprep.mubr.f32.mxu0 0.0
      %628 = vmatmul.mubr.f32.gmra.mrb[0].mxu0 %v546
      %v629 = vpop.f32.mrb[0].mxu0
      %v630 = vadd.f32 0.0, %v629
      %v631 = vpop.f32.mrb[0].mxu0
      %632 = vdwg.mxu0
      %633 = vst [vmem:[%s420] sm:$0xff] %v543
      %634 = vst [vmem:[%s427] sm:$0xff] %v630
      %v635 = vrot.slane %v543, 4
      %v636 = vadd.f32 %v543, %v635
      %v637 = vrot.slane %v636, 2
      %v638 = vadd.f32 %v636, %v637
      %v639 = vrot.slane %v638, 1
      %v640 = vadd.f32 %v638, %v639
      %v641 = vmul.f32 %v543, %v543
      %v642 = vrot.slane %v641, 4
      %v643 = vadd.f32 %v641, %v642
      %v644 = vrot.slane %v643, 2
      %v645 = vadd.f32 %v643, %v644
      %v646 = vrot.slane %v645, 1
      %v647 = vadd.f32 %v645, %v646
      %vm648 = vcmask 1040384
      %v649 = vsel %vm648, %v640, %v647
      %650 = vst [vmem:[%s434] sm:$0x3] %v649
      %v651 = vrot.slane %v630, 4
      %v652 = vadd.f32 %v630, %v651
      %v653 = vrot.slane %v652, 2
      %v654 = vadd.f32 %v652, %v653
      %v655 = vrot.slane %v654, 1
      %v656 = vadd.f32 %v654, %v655
      %v657 = vmul.f32 %v630, %v630
      %v658 = vrot.slane %v657, 4
      %v659 = vadd.f32 %v657, %v658
      %v660 = vrot.slane %v659, 2
      %v661 = vadd.f32 %v659, %v660
      %v662 = vrot.slane %v661, 1
      %v663 = vadd.f32 %v661, %v662
      %v664 = vsel %vm648, %v656, %v663
      %665 = vst [vmem:[%s441] sm:$0x3] %v664
      %p666 = scmp.lt.s32.totalorder %s25, 1
      %s667 = scalar_select %p666, %s25, 1
      %p668 = scmp.lt.s32.totalorder %s26, 0
      %s669 = scalar_select %p668, %s26, 0
      %s670 = sadd.s32 %s669, %s667
      %s671 = smul.addr %s670, 8
      %s672 = scalar_lea.vmem %s6, %s671
      %p673 = scmp.lt.s32.totalorder %s25, 1
      %s674 = scalar_select %p673, %s25, 1
      %p675 = scmp.lt.s32.totalorder %s26, 0
      %s676 = scalar_select %p675, %s26, 0
      %s677 = sadd.s32 %s676, %s674
      %s678 = smul.addr %s677, 8
      %s679 = scalar_lea.vmem %s7, %s678
      %p680 = scmp.lt.s32.totalorder %s25, 1
      %s681 = scalar_select %p680, %s25, 1
      %p682 = scmp.lt.s32.totalorder %s26, 0
      %s683 = scalar_select %p682, %s26, 0
      %s684 = sadd.s32 %s683, %s681
      %s685 = smul.addr %s684, 2
      %s686 = scalar_lea.vmem %s8, %s685
      %p687 = scmp.lt.s32.totalorder %s25, 1
      %s688 = scalar_select %p687, %s25, 1
      %p689 = scmp.lt.s32.totalorder %s26, 0
      %s690 = scalar_select %p689, %s26, 0
      %s691 = sadd.s32 %s690, %s688
      %s692 = smul.addr %s691, 2
      %s693 = scalar_lea.vmem %s9, %s692
      // Predicated region
      $region45: #{resnext_bottleneck_forward.6} parent=43 // pred_check
        %p694 = pneg %p193
      $region46: #{resnext_bottleneck_forward.6} parent=43 // pred_check_branch
        %696 = sbr.rel (%p694) target = $region48
      $region47: #{resnext_bottleneck_forward.6} parent=43 // pred_region
        _
      $region48: #{resnext_bottleneck_forward.6} parent=43 // pred_fallthru
        _
      // Predicated region
      $region49: #{resnext_bottleneck_forward.6} parent=43 // pred_check
        %p697 = pneg %p221
      $region50: #{resnext_bottleneck_forward.6} parent=43 // pred_check_branch
        %699 = sbr.rel (%p697) target = $region52
      $region51: #{resnext_bottleneck_forward.6} parent=43 // pred_region
        _
      $region52: #{resnext_bottleneck_forward.6} parent=43 // pred_fallthru
        _
      // Predicated region
      $region53: #{resnext_bottleneck_forward.6} parent=43 // pred_check
        %p700 = pneg %p249
      $region54: #{resnext_bottleneck_forward.6} parent=43 // pred_check_branch
        %702 = sbr.rel (%p700) target = $region56
      $region55: #{resnext_bottleneck_forward.6} parent=43 // pred_region
        _
      $region56: #{resnext_bottleneck_forward.6} parent=43 // pred_fallthru
        _
      // Predicated region
      $region57: #{resnext_bottleneck_forward.6} parent=43 // pred_check
        %p703 = pneg %p277
      $region58: #{resnext_bottleneck_forward.6} parent=43 // pred_check_branch
        %705 = sbr.rel (%p703) target = $region60
      $region59: #{resnext_bottleneck_forward.6} parent=43 // pred_region
        _
      $region60: #{resnext_bottleneck_forward.6} parent=43 // pred_fallthru
        _
    $region44: #{resnext_bottleneck_forward.6} parent=5 // pred_fallthru
      _
    %p706 = scmp.le.s32.totalorder 2, %s16
    // Predicated region
    $region61: #{resnext_bottleneck_forward.6} parent=5 // pred_check
      %p707 = pneg %p706
    $region62: #{resnext_bottleneck_forward.6} parent=5 // pred_check_branch
      %709 = sbr.rel (%p707) target = $region64
    $region63: #{resnext_bottleneck_forward.6} parent=5 // pred_region
      %s710 = ssub.s32 %s16, 2
      // Predicated region
      $region65: #{resnext_bottleneck_forward.6} parent=63 // pred_check
        %p711 = pneg %p199
      $region66: #{resnext_bottleneck_forward.6} parent=63 // pred_check_branch
        %713 = sbr.rel (%p711) target = $region68
      $region67: #{resnext_bottleneck_forward.6} parent=63 // pred_region
        %p714 = scmp.lt.s32.totalorder %s27, 1
        %s715 = scalar_select %p714, %s27, 1
        %p716 = scmp.lt.s32.totalorder %s28, 0
        %s717 = scalar_select %p716, %s28, 0
        %s718 = sadd.s32 %s717, %s715
        %s719 = smul.addr %s718, 8
        %s720 = scalar_lea.vmem %s6, %s719
      $region68: #{resnext_bottleneck_forward.6} parent=63 // pred_fallthru
        _
      // Predicated region
      $region69: #{resnext_bottleneck_forward.6} parent=63 // pred_check
        %p721 = pneg %p227
      $region70: #{resnext_bottleneck_forward.6} parent=63 // pred_check_branch
        %723 = sbr.rel (%p721) target = $region72
      $region71: #{resnext_bottleneck_forward.6} parent=63 // pred_region
        %p724 = scmp.lt.s32.totalorder %s27, 1
        %s725 = scalar_select %p724, %s27, 1
        %p726 = scmp.lt.s32.totalorder %s28, 0
        %s727 = scalar_select %p726, %s28, 0
        %s728 = sadd.s32 %s727, %s725
        %s729 = smul.addr %s728, 8
        %s730 = scalar_lea.vmem %s7, %s729
      $region72: #{resnext_bottleneck_forward.6} parent=63 // pred_fallthru
        _
      // Predicated region
      $region73: #{resnext_bottleneck_forward.6} parent=63 // pred_check
        %p731 = pneg %p255
      $region74: #{resnext_bottleneck_forward.6} parent=63 // pred_check_branch
        %733 = sbr.rel (%p731) target = $region76
      $region75: #{resnext_bottleneck_forward.6} parent=63 // pred_region
        %p734 = scmp.lt.s32.totalorder %s27, 1
        %s735 = scalar_select %p734, %s27, 1
        %p736 = scmp.lt.s32.totalorder %s28, 0
        %s737 = scalar_select %p736, %s28, 0
        %s738 = sadd.s32 %s737, %s735
        %s739 = smul.addr %s738, 2
        %s740 = scalar_lea.vmem %s8, %s739
      $region76: #{resnext_bottleneck_forward.6} parent=63 // pred_fallthru
        _
      // Predicated region
      $region77: #{resnext_bottleneck_forward.6} parent=63 // pred_check
        %p741 = pneg %p283
      $region78: #{resnext_bottleneck_forward.6} parent=63 // pred_check_branch
        %743 = sbr.rel (%p741) target = $region80
      $region79: #{resnext_bottleneck_forward.6} parent=63 // pred_region
        %p744 = scmp.lt.s32.totalorder %s27, 1
        %s745 = scalar_select %p744, %s27, 1
        %p746 = scmp.lt.s32.totalorder %s28, 0
        %s747 = scalar_select %p746, %s28, 0
        %s748 = sadd.s32 %s747, %s745
        %s749 = smul.addr %s748, 2
        %s750 = scalar_lea.vmem %s9, %s749
      $region80: #{resnext_bottleneck_forward.6} parent=63 // pred_fallthru
        _
    $region64: #{resnext_bottleneck_forward.6} parent=5 // pred_fallthru
      _
  $region6: #{resnext_bottleneck_forward.6} parent=0 // loop_footer
    %s20 = sadd.s32 1, %s16
  $region7: #{resnext_bottleneck_forward.6} parent=0 // loop_footer_branch
    %15 = sbr.rel target = $region3
  $region8: #{resnext_bottleneck_forward.6} parent=0 // loop_exit
    _

</llo_original>
